<compile_context>
chip_gen: v7x
topology: tpu7x:2x2x1
jax: 0.10.0
libtpu: 0.0.40
codegen_flags: <defaults>
</compile_context>

<pallas_src>
import functools

import jax
import jax.numpy as jnp
from jax.experimental import pallas as pl
from jax.experimental.pallas import tpu as pltpu

EPS = 1e-5
NEG_BIG = -1e30          # finite stand-in for -inf (maxpool padding, softmax pad)
CPAD = 128               # every channel dim padded to one lane-dense vreg width

_CPARAMS = pltpu.CompilerParams(
    dimension_semantics=("arbitrary",),
    vmem_limit_bytes=32 * 1024 * 1024,   # explicit (ample for these shapes, safe on v7x)
)


# ----------------------------------------------------------------------------
# pallas_call plumbing (whole array = single block; shapes are tiny)
# ----------------------------------------------------------------------------
def _vspec(shape):
    nd = len(shape)
    return pl.BlockSpec(shape, lambda i, _nd=nd: (0,) * _nd)


def _pcall(kernel, out_shape, *inputs):
    return pl.pallas_call(
        kernel,
        out_shape=out_shape,
        grid=(1,),
        in_specs=[_vspec(a.shape) for a in inputs],
        out_specs=_vspec(out_shape.shape),
        compiler_params=_CPARAMS,
    )(*inputs)


# ----------------------------------------------------------------------------
# In-kernel helpers
# ----------------------------------------------------------------------------
def _row_ids(shape):
    return jax.lax.broadcasted_iota(jnp.int32, shape, 0)


def _shift_down(a, period, fill):
    """out[i] = a[i-1] within each length-`period` row segment; first row -> fill."""
    rolled = pltpu.roll(a, shift=1, axis=0)
    first = (_row_ids(a.shape) % period) == 0
    return jnp.where(first, jnp.full_like(a, fill), rolled)


def _shift_up(a, period, fill):
    """out[i] = a[i+1] within each length-`period` row segment; last row -> fill."""
    m = a.shape[0]
    rolled = pltpu.roll(a, shift=m - 1, axis=0)
    last = (_row_ids(a.shape) % period) == (period - 1)
    return jnp.where(last, jnp.full_like(a, fill), rolled)


def _bn_scale_shift(parts, gamma, beta, eps):
    """Training-mode BatchNorm stats over all rows of all `parts` (f32, clamped var)."""
    cnt = float(sum(p.shape[0] for p in parts))
    s = sum(jnp.sum(p, axis=0, keepdims=True) for p in parts)
    ss = sum(jnp.sum(p * p, axis=0, keepdims=True) for p in parts)
    mean = s * (1.0 / cnt)
    var = jnp.maximum(ss * (1.0 / cnt) - mean * mean, 0.0)
    scale = jax.lax.rsqrt(var + eps) * gamma
    shift = beta - mean * scale
    return scale, shift


def _silu(x):
    return x * jax.nn.sigmoid(x)


# ----------------------------------------------------------------------------
# Pallas kernels
# ----------------------------------------------------------------------------
def stem_kernel(ae_ref, ao_ref, w_ref, b_ref, g_ref, bt_ref, o_ref, *, l_pool, eps):
    """conv7(s=2,p=3) (im2col matmuls for even/odd conv rows) + BN + SiLU + maxpool(3,2,1)."""
    w = w_ref[...]
    b = b_ref[...]
    ye = jnp.dot(ae_ref[...], w, preferred_element_type=jnp.float32) + b   # conv rows 2p
    yo = jnp.dot(ao_ref[...], w, preferred_element_type=jnp.float32) + b   # conv rows 2p+1
    scale, shift = _bn_scale_shift([ye, yo], g_ref[...], bt_ref[...], eps)
    ye = _silu(ye * scale + shift)
    yo = _silu(yo * scale + shift)
    prev = _shift_down(yo, l_pool, NEG_BIG)                                # conv rows 2p-1
    o_ref[...] = jnp.maximum(jnp.maximum(ye, yo), prev).astype(o_ref.dtype)


def block_s1_kernel(x_ref,
                    w1_ref, b1_ref, g1_ref, bt1_ref,
                    w3_ref, b3_ref, g3_ref, bt3_ref,
                    w2_ref, b2_ref, g2_ref, bt2_ref,
                    o_ref, *, length, eps):
    """Whole stride-1 ResNeXt block on a flat (N*L, 128) bf16 activation."""
    x = x_ref[...]                                                   # (M, C) bf16
    # conv1x1_1 + BN + SiLU
    a1 = jnp.dot(x, w1_ref[...], preferred_element_type=jnp.float32) + b1_ref[...]
    s1, t1 = _bn_scale_shift([a1], g1_ref[...], bt1_ref[...], eps)
    h1 = _silu(a1 * s1 + t1)
    # grouped conv3(s=1,p=1): 3 shifted windows concatenated along lanes -> one K=3C dot
    cat = jnp.concatenate(
        [_shift_down(h1, length, 0.0), h1, _shift_up(h1, length, 0.0)],
        axis=-1).astype(jnp.bfloat16)
    a3 = jnp.dot(cat, w3_ref[...], preferred_element_type=jnp.float32) + b3_ref[...]
    s3, t3 = _bn_scale_shift([a3], g3_ref[...], bt3_ref[...], eps)
    h3 = _silu(a3 * s3 + t3).astype(jnp.bfloat16)
    # conv1x1_2 + BN + residual + SiLU
    a2 = jnp.dot(h3, w2_ref[...], preferred_element_type=jnp.float32) + b2_ref[...]
    s2, t2 = _bn_scale_shift([a2], g2_ref[...], bt2_ref[...], eps)
    y = a2 * s2 + t2 + x.astype(jnp.float32)
    o_ref[...] = _silu(y).astype(o_ref.dtype)


def block_s2_kernel(xe_ref, xo_ref,
                    dsw_ref, dsb_ref, dsg_ref, dsbt_ref,
                    w1_ref, b1_ref, g1_ref, bt1_ref,
                    w3_ref, b3_ref, g3_ref, bt3_ref,
                    w2_ref, b2_ref, g2_ref, bt2_ref,
                    o_ref, *, l_out, eps):
    """Whole stride-2 (downsampling) ResNeXt block on even/odd flat phases."""
    xe = xe_ref[...]                            # input rows 2p   (N*l_out, C) bf16
    xo = xo_ref[...]                            # input rows 2p+1
    # conv1x1_1 + BN + SiLU (BN stats over the full input length = both phases)
    w1 = w1_ref[...]
    b1 = b1_ref[...]
    a1e = jnp.dot(xe, w1, preferred_element_type=jnp.float32) + b1
    a1o = jnp.dot(xo, w1, preferred_element_type=jnp.float32) + b1
    s1, t1 = _bn_scale_shift([a1e, a1o], g1_ref[...], bt1_ref[...], eps)
    h1e = _silu(a1e * s1 + t1)
    h1o = _silu(a1o * s1 + t1)
    # grouped conv3(s=2,p=1): output p reads h1 rows (2p-1, 2p, 2p+1) -> one K=3C dot
    cat = jnp.concatenate(
        [_shift_down(h1o, l_out, 0.0), h1e, h1o], axis=-1).astype(jnp.bfloat16)
    a3 = jnp.dot(cat, w3_ref[...], preferred_element_type=jnp.float32) + b3_ref[...]
    s3, t3 = _bn_scale_shift([a3], g3_ref[...], bt3_ref[...], eps)
    h3 = _silu(a3 * s3 + t3).astype(jnp.bfloat16)
    # conv1x1_2 + BN
    a2 = jnp.dot(h3, w2_ref[...], preferred_element_type=jnp.float32) + b2_ref[...]
    s2, t2 = _bn_scale_shift([a2], g2_ref[...], bt2_ref[...], eps)
    y2 = a2 * s2 + t2
    # downsample branch: conv1x1(s=2) + BN on the even phase
    ad = jnp.dot(xe, dsw_ref[...], preferred_element_type=jnp.float32) + dsb_ref[...]
    sd, td = _bn_scale_shift([ad], dsg_ref[...], dsbt_ref[...], eps)
    res = ad * sd + td
    o_ref[...] = _silu(y2 + res).astype(o_ref.dtype)


def head_kernel(x_ref, w_ref, b_ref, o_ref, *, n_batch, length, softmax):
    """Adaptive-avg-pool + FC (+ softmax); output is a lane-dense 128-wide slab."""
    rows = []
    for nb in range(n_batch):
        seg = x_ref[nb].astype(jnp.float32)                    # (L, C)
        rows.append(jnp.mean(seg, axis=0, keepdims=True))
    pooled = jnp.concatenate(rows, axis=0).astype(jnp.bfloat16)  # (N, C)
    logits = jnp.dot(pooled, w_ref[...],
                     preferred_element_type=jnp.float32) + b_ref[...]
    if softmax:
        # padded classes carry a huge negative bias -> exp underflows to exactly 0
        m = jnp.max(logits, axis=-1, keepdims=True)
        e = jnp.exp(logits - m)
        logits = e * pl.reciprocal(jnp.sum(e, axis=-1, keepdims=True), approx=True)
    o_ref[...] = logits


# ----------------------------------------------------------------------------
# Wrappers
# ----------------------------------------------------------------------------
def fused_stem(x_nlc, w, b, g, bt):
    """conv(k=7,s=2,p=3) + BN + SiLU + maxpool(k=3,s=2,p=1) in one pallas_call.

    The 7-tap im2col (per conv-row parity) is built in XLA on the tiny raw
    input; with 7*in_ch <= 128 it is no larger than the lane-padded input."""
    n, length, cin = x_nlc.shape
    kpad = w.shape[0]
    l_conv = (length + 6 - 7) // 2 + 1
    # TODO(synk): odd conv-output lengths would need an unfused maxpool fallback.
    assert l_conv % 2 == 0, "fused stem expects an even conv output length"
    l_pool = l_conv // 2
    xp = jnp.pad(x_nlc, ((0, 0), (3, 3), (0, 0)))

    def im2col(row_off):
        taps = [xp[:, row_off + t:row_off + t + 4 * (l_pool - 1) + 1:4, :]
                for t in range(7)]
        for t in taps:
            assert t.shape[1] == l_pool
        a = jnp.concatenate(taps, axis=-1)                       # (N, l_pool, 7*cin)
        a = jnp.pad(a, ((0, 0), (0, 0), (0, kpad - 7 * cin)))
        return a.reshape(n * l_pool, kpad).astype(jnp.bfloat16)

    a_even = im2col(0)    # conv rows 2p   read xp[4p + t]
    a_odd = im2col(2)     # conv rows 2p+1 read xp[4p + 2 + t]
    kern = functools.partial(stem_kernel, l_pool=l_pool, eps=EPS)
    out = _pcall(kern, jax.ShapeDtypeStruct((n * l_pool, CPAD), jnp.bfloat16),
                 a_even, a_odd, w, b, g, bt)
    return out, l_pool


def fused_block_s1(x_flat, length, p):
    m = x_flat.shape[0]
    kern = functools.partial(block_s1_kernel, length=length, eps=EPS)
    return _pcall(kern, jax.ShapeDtypeStruct((m, CPAD), jnp.bfloat16),
                  x_flat,
                  p["w1"], p["b1"], p["g1"], p["bt1"],
                  p["w3"], p["b3"], p["g3"], p["bt3"],
                  p["w2"], p["b2"], p["g2"], p["bt2"])


def fused_block_s2(x_flat, n, length, p):
    # TODO(synk): odd input lengths would need an extra zero row for the odd phase.
    assert length % 2 == 0, "stride-2 block expects an even input length"
    half = length // 2
    x3 = x_flat.reshape(n, length, CPAD)
    xe = x3[:, 0::2, :].reshape(n * half, CPAD)
    xo = x3[:, 1::2, :].reshape(n * half, CPAD)
    kern = functools.partial(block_s2_kernel, l_out=half, eps=EPS)
    out = _pcall(kern, jax.ShapeDtypeStruct((n * half, CPAD), jnp.bfloat16),
                 xe, xo,
                 p["ds_w"], p["ds_b"], p["ds_g"], p["ds_bt"],
                 p["w1"], p["b1"], p["g1"], p["bt1"],
                 p["w3"], p["b3"], p["g3"], p["bt3"],
                 p["w2"], p["b2"], p["g2"], p["bt2"])
    return out, half


def fused_head(x_flat, n, length, w_pad, b_pad, *, num_classes, raw):
    x3 = x_flat.reshape(n, length, CPAD)
    kern = functools.partial(head_kernel, n_batch=n, length=length, softmax=not raw)
    out = _pcall(kern, jax.ShapeDtypeStruct((n, CPAD), jnp.float32),
                 x3, w_pad, b_pad)
    return out[:, :num_classes]


# ----------------------------------------------------------------------------
# Parameter init (PyTorch-like uniform fan-in bound).  Kernel-ready layouts are
# built once: pre-transposed, group-block-diagonalized, 128-lane padded, bf16.
# Raw torch-layout copies are kept only for the pure-JAX reference check.
# ----------------------------------------------------------------------------
def _uniform(key, shape, bound):
    return jax.random.uniform(key, shape, jnp.float32, -bound, bound)


def _init_conv_torch(key, cout, cin_g, k):
    wkey, bkey = jax.random.split(key)
    bound = 1.0 / float(cin_g * k) ** 0.5
    return _uniform(wkey, (cout, cin_g, k), bound), _uniform(bkey, (cout,), bound)


def _pad_bias(b):
    return jnp.zeros((1, CPAD), jnp.float32).at[0, :b.shape[0]].set(b)


def _bn_params(c):
    g = jnp.zeros((1, CPAD), jnp.float32).at[0, :c].set(1.0)
    bt = jnp.zeros((1, CPAD), jnp.float32)
    return g, bt


def _dense1x1(key, cin, cout):
    w, b = _init_conv_torch(key, cout, cin, 1)                 # (cout, cin, 1)
    wk = jnp.zeros((CPAD, CPAD), jnp.float32)
    wk = wk.at[:cin, :cout].set(jnp.transpose(w[:, :, 0]))     # (cin, cout)
    return wk.astype(jnp.bfloat16), _pad_bias(b), w, b


def _grouped3(key, cin, cout, groups):
    cin_g, cout_g = cin // groups, cout // groups
    w, b = _init_conv_torch(key, cout, cin_g, 3)               # (cout, cin_g, 3)
    wk = jnp.zeros((3, CPAD, CPAD), jnp.float32)
    for g in range(groups):
        blk = jnp.transpose(w[g * cout_g:(g + 1) * cout_g], (2, 1, 0))   # (3,cin_g,cout_g)
        wk = wk.at[:, g * cin_g:(g + 1) * cin_g,
                   g * cout_g:(g + 1) * cout_g].set(blk)
    return (wk.reshape(3 * CPAD, CPAD).astype(jnp.bfloat16), _pad_bias(b), w, b)


def _stem_conv(key, cin, cout):
    w, b = _init_conv_torch(key, cout, cin, 7)                 # (cout, cin, 7)
    kpad = max(CPAD, -(-(7 * cin) // CPAD) * CPAD)
    wk = jnp.zeros((kpad, CPAD), jnp.float32)
    wt = jnp.transpose(w, (2, 1, 0)).reshape(7 * cin, cout)    # row = t*cin + ci
    wk = wk.at[:7 * cin, :cout].set(wt)
    return wk.astype(jnp.bfloat16), _pad_bias(b), w, b


def _fc_params(key, hidden, out_features):
    wkey, bkey = jax.random.split(key)
    bound = 1.0 / float(hidden) ** 0.5
    w = _uniform(wkey, (out_features, hidden), bound)
    b = _uniform(bkey, (out_features,), bound)
    wk = jnp.zeros((CPAD, CPAD), jnp.float32).at[:hidden, :out_features].set(w.T)
    bk = jnp.full((1, CPAD), NEG_BIG, jnp.float32).at[0, :out_features].set(b)
    return wk.astype(jnp.bfloat16), bk, w, b


def _init_block(key, cin, cout, cardinality):
    assert cout in (cin, 2 * cin)
    assert cin % cardinality == 0 and cout % cardinality == 0
    keys = jax.random.split(key, 4)
    p = {}
    if cin != cout:   # presence of ds_* encodes stride=2 (static pytree structure)
        p["ds_w"], p["ds_b"], p["ds_raw_w"], p["ds_raw_b"] = _dense1x1(keys[0], cin, cout)
        p["ds_g"], p["ds_bt"] = _bn_params(cout)
    p["w1"], p["b1"], p["raw_w1"], p["raw_b1"] = _dense1x1(keys[1], cin, cin)
    p["g1"], p["bt1"] = _bn_params(cin)
    p["w3"], p["b3"], p["raw_w3"], p["raw_b3"] = _grouped3(keys[2], cin, cout, cardinality)
    p["g3"], p["bt3"] = _bn_params(cout)
    p["w2"], p["b2"], p["raw_w2"], p["raw_b2"] = _dense1x1(keys[3], cout, cout)
    p["g2"], p["bt2"] = _bn_params(cout)
    return p


def init_resnext(key, *, in_channels, h0_channels, out_features, cardinality,
                 num_blocks):
    assert h0_channels % cardinality == 0
    keys = iter(jax.random.split(key, 64))
    params = {}
    hidden = h0_channels
    (params["stem_w"], params["stem_b"],
     params["stem_raw_w"], params["stem_raw_b"]) = _stem_conv(next(keys),
                                                              in_channels, hidden)
    params["stem_g"], params["stem_bt"] = _bn_params(hidden)
    blocks = []
    for nb in num_blocks:
        blocks.append(_init_block(next(keys), hidden, 2 * hidden, cardinality))
        hidden *= 2
        for _ in range(nb - 1):
            blocks.append(_init_block(next(keys), hidden, hidden, cardinality))
    # TODO(synk): channel counts > 128 need multi-vreg lanes / per-group tiling.
    assert hidden <= CPAD and out_features <= CPAD
    params["blocks"] = blocks
    (params["fc_w"], params["fc_b"],
     params["fc_raw_w"], params["fc_raw_b"]) = _fc_params(next(keys), hidden,
                                                          out_features)
    return params


# ----------------------------------------------------------------------------
# Forward pass
# ----------------------------------------------------------------------------
@functools.partial(jax.jit, static_argnames=("num_classes", "raw"))
def resnext_forward(params, x_ncl, *, num_classes, raw=False):
    x_nlc = jnp.transpose(x_ncl.astype(jnp.float32), (0, 2, 1))     # NCL -> NLC
    n = x_nlc.shape[0]
    x, length = fused_stem(x_nlc, params["stem_w"], params["stem_b"],
                           params["stem_g"], params["stem_bt"])
    for p in params["blocks"]:
        if "ds_w" in p:
            x, length = fused_block_s2(x, n, length, p)
        else:
            x = fused_block_s1(x, length, p)
    return fused_head(x, n, length, params["fc_w"], params["fc_b"],
                      num_classes=num_classes, raw=raw)


# ----------------------------------------------------------------------------
# Pure-JAX reference (raw torch-layout weights, matching bf16 casts)
# ----------------------------------------------------------------------------
def _ref_forward(params, x_ncl, *, num_classes, raw=False):
    def conv(x_nlc, w_oik, b, stride, padding, groups=1):
        lhs = jnp.transpose(x_nlc, (0, 2, 1)).astype(jnp.bfloat16)   # N, C, L
        y = jax.lax.conv_general_dilated(
            lhs, w_oik.astype(jnp.bfloat16), window_strides=(stride,),
            padding=[(padding, padding)],
            dimension_numbers=("NCH", "OIH", "NCH"),
            feature_group_count=groups,
            preferred_element_type=jnp.float32)
        y = y + b.reshape(1, -1, 1)
        return jnp.transpose(y, (0, 2, 1))                           # N, L, C f32

    def bn(x, g, bt):
        c = x.shape[-1]
        mean = jnp.mean(x, axis=(0, 1), keepdims=True)
        var = jnp.mean(jnp.square(x - mean), axis=(0, 1), keepdims=True)
        return ((x - mean) * jax.lax.rsqrt(var + EPS) * g[0, :c].reshape(1, 1, -1)
                + bt[0, :c].reshape(1, 1, -1))

    def silu(x):
        return x * jax.nn.sigmoid(x)

    x = jnp.transpose(x_ncl.astype(jnp.float32), (0, 2, 1))
    x = silu(bn(conv(x, params["stem_raw_w"], params["stem_raw_b"], 2, 3),
                params["stem_g"], params["stem_bt"]))
    lc = x.shape[1]
    xp = jnp.pad(x, ((0, 0), (1, 1), (0, 0)), constant_values=-jnp.inf)
    lp = (lc - 1) // 2 + 1
    x = jnp.stack([xp[:, i:i + 2 * (lp - 1) + 1:2, :] for i in range(3)], 0).max(0)
    x = x.astype(jnp.bfloat16).astype(jnp.float32)       # HBM activations are bf16
    for p in params["blocks"]:
        if "ds_w" in p:
            stride = 2
            res = bn(conv(x, p["ds_raw_w"], p["ds_raw_b"], 2, 0), p["ds_g"], p["ds_bt"])
        else:
            stride = 1
            res = x
        groups = x.shape[-1] // p["raw_w3"].shape[1]
        h = silu(bn(conv(x, p["raw_w1"], p["raw_b1"], 1, 0), p["g1"], p["bt1"]))
        h = silu(bn(conv(h, p["raw_w3"], p["raw_b3"], stride, 1, groups=groups),
                    p["g3"], p["bt3"]))
        h = bn(conv(h, p["raw_w2"], p["raw_b2"], 1, 0), p["g2"], p["bt2"])
        x = silu(h + res)
        x = x.astype(jnp.bfloat16).astype(jnp.float32)   # HBM activations are bf16
    pooled = jnp.mean(x, axis=1)
    logits = jnp.dot(pooled.astype(jnp.bfloat16),
                     params["fc_raw_w"].T.astype(jnp.bfloat16),
                     preferred_element_type=jnp.float32) + params["fc_raw_b"]
    logits = logits[:, :num_classes]
    return logits if raw else jax.nn.softmax(logits, axis=-1)


# ----------------------------------------------------------------------------
if __name__ == "__main__":
    key = jax.random.PRNGKey(0)
    pkey, xkey = jax.random.split(key)

    # Exercises both the downsampling (stride-2) and identity (stride-1) block kernels.
    params = init_resnext(
        pkey,
        in_channels=4,
        h0_channels=16,
        out_features=5,
        cardinality=4,
        num_blocks=(2, 1),
    )
    # input in NCL layout (batch=2, channels=4, length=64)
    x = jax.random.normal(xkey, (2, 4, 64), jnp.float32)

    out = resnext_forward(params, x, num_classes=5, raw=False)
    out = jax.block_until_ready(out)

    assert out.shape == (2, 5)
    assert bool(jnp.all(jnp.isfinite(out)))
    # softmax rows sum to 1 (approx reciprocal in the kernel -> loose atol)
    assert bool(jnp.allclose(jnp.sum(out, axis=-1), 1.0, atol=5e-3))
    # cross-check against a pure-JAX reference with matching numerics
    ref = _ref_forward(params, x, num_classes=5, raw=False)
    assert bool(jnp.allclose(out, ref, atol=1e-2)), (out, ref)
    print("KERNEL_OK")
</pallas_src>

<mosaic_0001>
module attributes {stable_mosaic.version = 11 : i64} {
  func.func @stem_kernel(%arg0: i32, %arg1: memref<32x128xbf16, #tpu.memory_space<vmem>>, %arg2: memref<32x128xbf16, #tpu.memory_space<vmem>>, %arg3: memref<128x128xbf16, #tpu.memory_space<vmem>>, %arg4: memref<1x128xf32, #tpu.memory_space<vmem>>, %arg5: memref<1x128xf32, #tpu.memory_space<vmem>>, %arg6: memref<1x128xf32, #tpu.memory_space<vmem>>, %arg7: memref<32x128xbf16, #tpu.memory_space<vmem>>) attributes {dimension_semantics = [#tpu.dimension_semantics<arbitrary>], iteration_bounds = array<i64: 1>, scalar_prefetch = 0 : i64, scratch_operands = 0 : i64, tpu.core_type = #tpu.core_type<tc>, window_params = [{pipeline_mode = #tpu.pipeline_mode<synchronous>, transform_indices = @transform_0, window_bounds = array<i64: 32, 128>}, {pipeline_mode = #tpu.pipeline_mode<synchronous>, transform_indices = @transform_1, window_bounds = array<i64: 32, 128>}, {pipeline_mode = #tpu.pipeline_mode<synchronous>, transform_indices = @transform_2, window_bounds = array<i64: 128, 128>}, {pipeline_mode = #tpu.pipeline_mode<synchronous>, transform_indices = @transform_3, window_bounds = array<i64: 1, 128>}, {pipeline_mode = #tpu.pipeline_mode<synchronous>, transform_indices = @transform_4, window_bounds = array<i64: 1, 128>}, {pipeline_mode = #tpu.pipeline_mode<synchronous>, transform_indices = @transform_5, window_bounds = array<i64: 1, 128>}, {pipeline_mode = #tpu.pipeline_mode<synchronous>, transform_indices = @transform_6, window_bounds = array<i64: 32, 128>}]} {
    %c0 = arith.constant 0 : index
    %c0_0 = arith.constant 0 : index
    %0 = vector.load %arg3[%c0, %c0_0] : memref<128x128xbf16, #tpu.memory_space<vmem>>, vector<128x128xbf16>
    %c0_1 = arith.constant 0 : index
    %c0_2 = arith.constant 0 : index
    %1 = vector.load %arg4[%c0_1, %c0_2] : memref<1x128xf32, #tpu.memory_space<vmem>>, vector<1x128xf32>
    %c0_3 = arith.constant 0 : index
    %c0_4 = arith.constant 0 : index
    %2 = vector.load %arg1[%c0_3, %c0_4] : memref<32x128xbf16, #tpu.memory_space<vmem>>, vector<32x128xbf16>
    %cst = arith.constant dense<0.000000e+00> : vector<32x128xf32>
    %3 = tpu.matmul %2, %0, %cst {dimension_numbers = #tpu.dot_dimension_numbers<[1], [0], [0], [1], [0, 0, 1, 1], [], []>} : vector<32x128xbf16>, vector<128x128xbf16>, vector<32x128xf32> -> vector<32x128xf32>
    %4 = vector.broadcast %1 : vector<1x128xf32> to vector<32x128xf32>
    %5 = arith.addf %3, %4 : vector<32x128xf32>
    %c0_5 = arith.constant 0 : index
    %c0_6 = arith.constant 0 : index
    %6 = vector.load %arg2[%c0_5, %c0_6] : memref<32x128xbf16, #tpu.memory_space<vmem>>, vector<32x128xbf16>
    %cst_7 = arith.constant dense<0.000000e+00> : vector<32x128xf32>
    %7 = tpu.matmul %6, %0, %cst_7 {dimension_numbers = #tpu.dot_dimension_numbers<[1], [0], [0], [1], [0, 0, 1, 1], [], []>} : vector<32x128xbf16>, vector<128x128xbf16>, vector<32x128xf32> -> vector<32x128xf32>
    %8 = vector.broadcast %1 : vector<1x128xf32> to vector<32x128xf32>
    %9 = arith.addf %7, %8 : vector<32x128xf32>
    %c0_8 = arith.constant 0 : index
    %c0_9 = arith.constant 0 : index
    %10 = vector.load %arg5[%c0_8, %c0_9] : memref<1x128xf32, #tpu.memory_space<vmem>>, vector<1x128xf32>
    %c0_10 = arith.constant 0 : index
    %c0_11 = arith.constant 0 : index
    %11 = vector.load %arg6[%c0_10, %c0_11] : memref<1x128xf32, #tpu.memory_space<vmem>>, vector<1x128xf32>
    %cst_12 = arith.constant dense<0.000000e+00> : vector<128xf32>
    %12 = vector.multi_reduction <add>, %5, %cst_12 [0] : vector<32x128xf32> to vector<128xf32>
    %13 = vector.shape_cast %12 : vector<128xf32> to vector<1x128xf32>
    %cst_13 = arith.constant 0.000000e+00 : f32
    %14 = vector.broadcast %cst_13 : f32 to vector<1x128xf32>
    %15 = arith.addf %14, %13 : vector<1x128xf32>
    %cst_14 = arith.constant dense<0.000000e+00> : vector<128xf32>
    %16 = vector.multi_reduction <add>, %9, %cst_14 [0] : vector<32x128xf32> to vector<128xf32>
    %17 = vector.shape_cast %16 : vector<128xf32> to vector<1x128xf32>
    %18 = arith.addf %15, %17 : vector<1x128xf32>
    %19 = arith.mulf %5, %5 : vector<32x128xf32>
    %cst_15 = arith.constant dense<0.000000e+00> : vector<128xf32>
    %20 = vector.multi_reduction <add>, %19, %cst_15 [0] : vector<32x128xf32> to vector<128xf32>
    %21 = vector.shape_cast %20 : vector<128xf32> to vector<1x128xf32>
    %cst_16 = arith.constant 0.000000e+00 : f32
    %22 = vector.broadcast %cst_16 : f32 to vector<1x128xf32>
    %23 = arith.addf %22, %21 : vector<1x128xf32>
    %24 = arith.mulf %9, %9 : vector<32x128xf32>
    %cst_17 = arith.constant dense<0.000000e+00> : vector<128xf32>
    %25 = vector.multi_reduction <add>, %24, %cst_17 [0] : vector<32x128xf32> to vector<128xf32>
    %26 = vector.shape_cast %25 : vector<128xf32> to vector<1x128xf32>
    %27 = arith.addf %23, %26 : vector<1x128xf32>
    %cst_18 = arith.constant 1.562500e-02 : f32
    %28 = vector.broadcast %cst_18 : f32 to vector<1x128xf32>
    %29 = arith.mulf %18, %28 : vector<1x128xf32>
    %cst_19 = arith.constant 1.562500e-02 : f32
    %30 = vector.broadcast %cst_19 : f32 to vector<1x128xf32>
    %31 = arith.mulf %27, %30 : vector<1x128xf32>
    %32 = arith.mulf %29, %29 : vector<1x128xf32>
    %33 = arith.subf %31, %32 : vector<1x128xf32>
    %cst_20 = arith.constant 0.000000e+00 : f32
    %34 = vector.broadcast %cst_20 : f32 to vector<1x128xf32>
    %35 = arith.maximumf %33, %34 : vector<1x128xf32>
    %cst_21 = arith.constant 9.99999974E-6 : f32
    %36 = vector.broadcast %cst_21 : f32 to vector<1x128xf32>
    %37 = arith.addf %35, %36 : vector<1x128xf32>
    %38 = math.rsqrt %37 : vector<1x128xf32>
    %39 = arith.mulf %38, %10 : vector<1x128xf32>
    %40 = arith.mulf %29, %39 : vector<1x128xf32>
    %41 = arith.subf %11, %40 : vector<1x128xf32>
    %42 = vector.broadcast %39 : vector<1x128xf32> to vector<32x128xf32>
    %43 = arith.mulf %5, %42 : vector<32x128xf32>
    %44 = vector.broadcast %41 : vector<1x128xf32> to vector<32x128xf32>
    %45 = arith.addf %43, %44 : vector<32x128xf32>
    %46 = arith.negf %45 : vector<32x128xf32>
    %47 = math.exp %46 : vector<32x128xf32>
    %cst_22 = arith.constant 1.000000e+00 : f32
    %48 = vector.broadcast %cst_22 : f32 to vector<32x128xf32>
    %49 = arith.addf %48, %47 : vector<32x128xf32>
    %50 = arith.divf %48, %49 : vector<32x128xf32>
    %51 = arith.mulf %45, %50 : vector<32x128xf32>
    %52 = vector.broadcast %39 : vector<1x128xf32> to vector<32x128xf32>
    %53 = arith.mulf %9, %52 : vector<32x128xf32>
    %54 = vector.broadcast %41 : vector<1x128xf32> to vector<32x128xf32>
    %55 = arith.addf %53, %54 : vector<32x128xf32>
    %56 = arith.negf %55 : vector<32x128xf32>
    %57 = math.exp %56 : vector<32x128xf32>
    %cst_23 = arith.constant 1.000000e+00 : f32
    %58 = vector.broadcast %cst_23 : f32 to vector<32x128xf32>
    %59 = arith.addf %58, %57 : vector<32x128xf32>
    %60 = arith.divf %58, %59 : vector<32x128xf32>
    %61 = arith.mulf %55, %60 : vector<32x128xf32>
    %c1_i32 = arith.constant 1 : i32
    %62 = tpu.dynamic_rotate %61 by %c1_i32 dim 0 : vector<32x128xf32>, i32 -> vector<32x128xf32>
    %63 = tpu.iota {dimensions = array<i32: 0>} : vector<32x128xi32>
    %c16_i32 = arith.constant 16 : i32
    %c0_i32 = arith.constant 0 : i32
    %64 = arith.cmpi eq, %c16_i32, %c0_i32 : i32
    %c1_i32_24 = arith.constant 1 : i32
    %65 = arith.select %64, %c1_i32_24, %c16_i32 : i32
    %66 = vector.broadcast %65 : i32 to vector<32x128xi32>
    %67 = arith.remsi %63, %66 : vector<32x128xi32>
    %c0_i32_25 = arith.constant 0 : i32
    %68 = vector.broadcast %c0_i32_25 : i32 to vector<32x128xi32>
    %69 = arith.cmpi ne, %67, %68 : vector<32x128xi32>
    %c0_i32_26 = arith.constant 0 : i32
    %70 = vector.broadcast %c0_i32_26 : i32 to vector<32x128xi32>
    %71 = arith.cmpi slt, %67, %70 : vector<32x128xi32>
    %c0_i32_27 = arith.constant 0 : i32
    %72 = arith.cmpi slt, %65, %c0_i32_27 : i32
    %73 = vector.broadcast %72 : i1 to vector<32x128xi1>
    %74 = vector.broadcast %73 : vector<32x128xi1> to vector<32x128xi1>
    %75 = arith.xori %71, %74 : vector<32x128xi1>
    %76 = arith.andi %75, %69 : vector<32x128xi1>
    %77 = vector.broadcast %65 : i32 to vector<32x128xi32>
    %78 = arith.addi %67, %77 : vector<32x128xi32>
    %79 = arith.select %76, %78, %67 : vector<32x128xi1>, vector<32x128xi32>
    %c0_i32_28 = arith.constant 0 : i32
    %80 = vector.broadcast %c0_i32_28 : i32 to vector<32x128xi32>
    %81 = arith.cmpi eq, %79, %80 : vector<32x128xi32>
    %cst_29 = arith.constant -1.000000e+30 : f32
    %82 = vector.broadcast %cst_29 : f32 to vector<32x128xf32>
    %83 = arith.select %81, %82, %62 : vector<32x128xi1>, vector<32x128xf32>
    %84 = arith.maximumf %51, %61 : vector<32x128xf32>
    %85 = arith.maximumf %84, %83 : vector<32x128xf32>
    %86 = arith.truncf %85 : vector<32x128xf32> to vector<32x128xbf16>
    %c0_30 = arith.constant 0 : index
    %c0_31 = arith.constant 0 : index
    %87 = vector.load %arg7[%c0_30, %c0_31] : memref<32x128xbf16, #tpu.memory_space<vmem>>, vector<32x128xbf16>
    tpu.vector_store %arg7[%c0_30, %c0_31], %86 {strides = array<i32>} : memref<32x128xbf16, #tpu.memory_space<vmem>>, vector<32x128xbf16>,
    return
  }
  func.func @transform_0(%arg0: i32) -> (i32, i32) {
    %c0_i32 = arith.constant 0 : i32
    %c0_i32_0 = arith.constant 0 : i32
    %c0_i32_1 = arith.constant 0 : i32
    return %c0_i32, %c0_i32_0 : i32, i32
  }
  func.func @transform_1(%arg0: i32) -> (i32, i32) {
    %c0_i32 = arith.constant 0 : i32
    %c0_i32_0 = arith.constant 0 : i32
    %c0_i32_1 = arith.constant 0 : i32
    return %c0_i32, %c0_i32_0 : i32, i32
  }
  func.func @transform_2(%arg0: i32) -> (i32, i32) {
    %c0_i32 = arith.constant 0 : i32
    %c0_i32_0 = arith.constant 0 : i32
    %c0_i32_1 = arith.constant 0 : i32
    return %c0_i32, %c0_i32_0 : i32, i32
  }
  func.func @transform_3(%arg0: i32) -> (i32, i32) {
    %c0_i32 = arith.constant 0 : i32
    %c0_i32_0 = arith.constant 0 : i32
    %c0_i32_1 = arith.constant 0 : i32
    return %c0_i32, %c0_i32_0 : i32, i32
  }
  func.func @transform_4(%arg0: i32) -> (i32, i32) {
    %c0_i32 = arith.constant 0 : i32
    %c0_i32_0 = arith.constant 0 : i32
    %c0_i32_1 = arith.constant 0 : i32
    return %c0_i32, %c0_i32_0 : i32, i32
  }
  func.func @transform_5(%arg0: i32) -> (i32, i32) {
    %c0_i32 = arith.constant 0 : i32
    %c0_i32_0 = arith.constant 0 : i32
    %c0_i32_1 = arith.constant 0 : i32
    return %c0_i32, %c0_i32_0 : i32, i32
  }
  func.func @transform_6(%arg0: i32) -> (i32, i32) {
    %c0_i32 = arith.constant 0 : i32
    %c0_i32_0 = arith.constant 0 : i32
    %c0_i32_1 = arith.constant 0 : i32
    return %c0_i32, %c0_i32_0 : i32, i32
  }
}

module attributes {stable_mosaic.version = 11 : i64} {
  func.func @block_s1_kernel(%arg0: i32, %arg1: memref<16x128xbf16, #tpu.memory_space<vmem>>, %arg2: memref<128x128xbf16, #tpu.memory_space<vmem>>, %arg3: memref<1x128xf32, #tpu.memory_space<vmem>>, %arg4: memref<1x128xf32, #tpu.memory_space<vmem>>, %arg5: memref<1x128xf32, #tpu.memory_space<vmem>>, %arg6: memref<384x128xbf16, #tpu.memory_space<vmem>>, %arg7: memref<1x128xf32, #tpu.memory_space<vmem>>, %arg8: memref<1x128xf32, #tpu.memory_space<vmem>>, %arg9: memref<1x128xf32, #tpu.memory_space<vmem>>, %arg10: memref<128x128xbf16, #tpu.memory_space<vmem>>, %arg11: memref<1x128xf32, #tpu.memory_space<vmem>>, %arg12: memref<1x128xf32, #tpu.memory_space<vmem>>, %arg13: memref<1x128xf32, #tpu.memory_space<vmem>>, %arg14: memref<16x128xbf16, #tpu.memory_space<vmem>>) attributes {dimension_semantics = [#tpu.dimension_semantics<arbitrary>], iteration_bounds = array<i64: 1>, scalar_prefetch = 0 : i64, scratch_operands = 0 : i64, tpu.core_type = #tpu.core_type<tc>, window_params = [{pipeline_mode = #tpu.pipeline_mode<synchronous>, transform_indices = @transform_0, window_bounds = array<i64: 16, 128>}, {pipeline_mode = #tpu.pipeline_mode<synchronous>, transform_indices = @transform_1, window_bounds = array<i64: 128, 128>}, {pipeline_mode = #tpu.pipeline_mode<synchronous>, transform_indices = @transform_2, window_bounds = array<i64: 1, 128>}, {pipeline_mode = #tpu.pipeline_mode<synchronous>, transform_indices = @transform_3, window_bounds = array<i64: 1, 128>}, {pipeline_mode = #tpu.pipeline_mode<synchronous>, transform_indices = @transform_4, window_bounds = array<i64: 1, 128>}, {pipeline_mode = #tpu.pipeline_mode<synchronous>, transform_indices = @transform_5, window_bounds = array<i64: 384, 128>}, {pipeline_mode = #tpu.pipeline_mode<synchronous>, transform_indices = @transform_6, window_bounds = array<i64: 1, 128>}, {pipeline_mode = #tpu.pipeline_mode<synchronous>, transform_indices = @transform_7, window_bounds = array<i64: 1, 128>}, {pipeline_mode = #tpu.pipeline_mode<synchronous>, transform_indices = @transform_8, window_bounds = array<i64: 1, 128>}, {pipeline_mode = #tpu.pipeline_mode<synchronous>, transform_indices = @transform_9, window_bounds = array<i64: 128, 128>}, {pipeline_mode = #tpu.pipeline_mode<synchronous>, transform_indices = @transform_10, window_bounds = array<i64: 1, 128>}, {pipeline_mode = #tpu.pipeline_mode<synchronous>, transform_indices = @transform_11, window_bounds = array<i64: 1, 128>}, {pipeline_mode = #tpu.pipeline_mode<synchronous>, transform_indices = @transform_12, window_bounds = array<i64: 1, 128>}, {pipeline_mode = #tpu.pipeline_mode<synchronous>, transform_indices = @transform_13, window_bounds = array<i64: 16, 128>}]} {
    %c0 = arith.constant 0 : index
    %c0_0 = arith.constant 0 : index
    %0 = vector.load %arg1[%c0, %c0_0] : memref<16x128xbf16, #tpu.memory_space<vmem>>, vector<16x128xbf16>
    %c0_1 = arith.constant 0 : index
    %c0_2 = arith.constant 0 : index
    %1 = vector.load %arg2[%c0_1, %c0_2] : memref<128x128xbf16, #tpu.memory_space<vmem>>, vector<128x128xbf16>
    %cst = arith.constant dense<0.000000e+00> : vector<16x128xf32>
    %2 = tpu.matmul %0, %1, %cst {dimension_numbers = #tpu.dot_dimension_numbers<[1], [0], [0], [1], [0, 0, 1, 1], [], []>} : vector<16x128xbf16>, vector<128x128xbf16>, vector<16x128xf32> -> vector<16x128xf32>
    %c0_3 = arith.constant 0 : index
    %c0_4 = arith.constant 0 : index
    %3 = vector.load %arg3[%c0_3, %c0_4] : memref<1x128xf32, #tpu.memory_space<vmem>>, vector<1x128xf32>
    %4 = vector.broadcast %3 : vector<1x128xf32> to vector<16x128xf32>
    %5 = arith.addf %2, %4 : vector<16x128xf32>
    %c0_5 = arith.constant 0 : index
    %c0_6 = arith.constant 0 : index
    %6 = vector.load %arg4[%c0_5, %c0_6] : memref<1x128xf32, #tpu.memory_space<vmem>>, vector<1x128xf32>
    %c0_7 = arith.constant 0 : index
    %c0_8 = arith.constant 0 : index
    %7 = vector.load %arg5[%c0_7, %c0_8] : memref<1x128xf32, #tpu.memory_space<vmem>>, vector<1x128xf32>
    %cst_9 = arith.constant dense<0.000000e+00> : vector<128xf32>
    %8 = vector.multi_reduction <add>, %5, %cst_9 [0] : vector<16x128xf32> to vector<128xf32>
    %9 = vector.shape_cast %8 : vector<128xf32> to vector<1x128xf32>
    %cst_10 = arith.constant 0.000000e+00 : f32
    %10 = vector.broadcast %cst_10 : f32 to vector<1x128xf32>
    %11 = arith.addf %10, %9 : vector<1x128xf32>
    %12 = arith.mulf %5, %5 : vector<16x128xf32>
    %cst_11 = arith.constant dense<0.000000e+00> : vector<128xf32>
    %13 = vector.multi_reduction <add>, %12, %cst_11 [0] : vector<16x128xf32> to vector<128xf32>
    %14 = vector.shape_cast %13 : vector<128xf32> to vector<1x128xf32>
    %cst_12 = arith.constant 0.000000e+00 : f32
    %15 = vector.broadcast %cst_12 : f32 to vector<1x128xf32>
    %16 = arith.addf %15, %14 : vector<1x128xf32>
    %cst_13 = arith.constant 6.250000e-02 : f32
    %17 = vector.broadcast %cst_13 : f32 to vector<1x128xf32>
    %18 = arith.mulf %11, %17 : vector<1x128xf32>
    %cst_14 = arith.constant 6.250000e-02 : f32
    %19 = vector.broadcast %cst_14 : f32 to vector<1x128xf32>
    %20 = arith.mulf %16, %19 : vector<1x128xf32>
    %21 = arith.mulf %18, %18 : vector<1x128xf32>
    %22 = arith.subf %20, %21 : vector<1x128xf32>
    %cst_15 = arith.constant 0.000000e+00 : f32
    %23 = vector.broadcast %cst_15 : f32 to vector<1x128xf32>
    %24 = arith.maximumf %22, %23 : vector<1x128xf32>
    %cst_16 = arith.constant 9.99999974E-6 : f32
    %25 = vector.broadcast %cst_16 : f32 to vector<1x128xf32>
    %26 = arith.addf %24, %25 : vector<1x128xf32>
    %27 = math.rsqrt %26 : vector<1x128xf32>
    %28 = arith.mulf %27, %6 : vector<1x128xf32>
    %29 = arith.mulf %18, %28 : vector<1x128xf32>
    %30 = arith.subf %7, %29 : vector<1x128xf32>
    %31 = vector.broadcast %28 : vector<1x128xf32> to vector<16x128xf32>
    %32 = arith.mulf %5, %31 : vector<16x128xf32>
    %33 = vector.broadcast %30 : vector<1x128xf32> to vector<16x128xf32>
    %34 = arith.addf %32, %33 : vector<16x128xf32>
    %35 = arith.negf %34 : vector<16x128xf32>
    %36 = math.exp %35 : vector<16x128xf32>
    %cst_17 = arith.constant 1.000000e+00 : f32
    %37 = vector.broadcast %cst_17 : f32 to vector<16x128xf32>
    %38 = arith.addf %37, %36 : vector<16x128xf32>
    %39 = arith.divf %37, %38 : vector<16x128xf32>
    %40 = arith.mulf %34, %39 : vector<16x128xf32>
    %c1_i32 = arith.constant 1 : i32
    %41 = tpu.dynamic_rotate %40 by %c1_i32 dim 0 : vector<16x128xf32>, i32 -> vector<16x128xf32>
    %42 = tpu.iota {dimensions = array<i32: 0>} : vector<16x128xi32>
    %c8_i32 = arith.constant 8 : i32
    %c0_i32 = arith.constant 0 : i32
    %43 = arith.cmpi eq, %c8_i32, %c0_i32 : i32
    %c1_i32_18 = arith.constant 1 : i32
    %44 = arith.select %43, %c1_i32_18, %c8_i32 : i32
    %45 = vector.broadcast %44 : i32 to vector<16x128xi32>
    %46 = arith.remsi %42, %45 : vector<16x128xi32>
    %c0_i32_19 = arith.constant 0 : i32
    %47 = vector.broadcast %c0_i32_19 : i32 to vector<16x128xi32>
    %48 = arith.cmpi ne, %46, %47 : vector<16x128xi32>
    %c0_i32_20 = arith.constant 0 : i32
    %49 = vector.broadcast %c0_i32_20 : i32 to vector<16x128xi32>
    %50 = arith.cmpi slt, %46, %49 : vector<16x128xi32>
    %c0_i32_21 = arith.constant 0 : i32
    %51 = arith.cmpi slt, %44, %c0_i32_21 : i32
    %52 = vector.broadcast %51 : i1 to vector<16x128xi1>
    %53 = vector.broadcast %52 : vector<16x128xi1> to vector<16x128xi1>
    %54 = arith.xori %50, %53 : vector<16x128xi1>
    %55 = arith.andi %54, %48 : vector<16x128xi1>
    %56 = vector.broadcast %44 : i32 to vector<16x128xi32>
    %57 = arith.addi %46, %56 : vector<16x128xi32>
    %58 = arith.select %55, %57, %46 : vector<16x128xi1>, vector<16x128xi32>
    %c0_i32_22 = arith.constant 0 : i32
    %59 = vector.broadcast %c0_i32_22 : i32 to vector<16x128xi32>
    %60 = arith.cmpi eq, %58, %59 : vector<16x128xi32>
    %cst_23 = arith.constant 0.000000e+00 : f32
    %61 = vector.broadcast %cst_23 : f32 to vector<16x128xf32>
    %62 = arith.select %60, %61, %41 : vector<16x128xi1>, vector<16x128xf32>
    %c15_i32 = arith.constant 15 : i32
    %63 = tpu.dynamic_rotate %40 by %c15_i32 dim 0 : vector<16x128xf32>, i32 -> vector<16x128xf32>
    %64 = tpu.iota {dimensions = array<i32: 0>} : vector<16x128xi32>
    %c8_i32_24 = arith.constant 8 : i32
    %c0_i32_25 = arith.constant 0 : i32
    %65 = arith.cmpi eq, %c8_i32_24, %c0_i32_25 : i32
    %c1_i32_26 = arith.constant 1 : i32
    %66 = arith.select %65, %c1_i32_26, %c8_i32_24 : i32
    %67 = vector.broadcast %66 : i32 to vector<16x128xi32>
    %68 = arith.remsi %64, %67 : vector<16x128xi32>
    %c0_i32_27 = arith.constant 0 : i32
    %69 = vector.broadcast %c0_i32_27 : i32 to vector<16x128xi32>
    %70 = arith.cmpi ne, %68, %69 : vector<16x128xi32>
    %c0_i32_28 = arith.constant 0 : i32
    %71 = vector.broadcast %c0_i32_28 : i32 to vector<16x128xi32>
    %72 = arith.cmpi slt, %68, %71 : vector<16x128xi32>
    %c0_i32_29 = arith.constant 0 : i32
    %73 = arith.cmpi slt, %66, %c0_i32_29 : i32
    %74 = vector.broadcast %73 : i1 to vector<16x128xi1>
    %75 = vector.broadcast %74 : vector<16x128xi1> to vector<16x128xi1>
    %76 = arith.xori %72, %75 : vector<16x128xi1>
    %77 = arith.andi %76, %70 : vector<16x128xi1>
    %78 = vector.broadcast %66 : i32 to vector<16x128xi32>
    %79 = arith.addi %68, %78 : vector<16x128xi32>
    %80 = arith.select %77, %79, %68 : vector<16x128xi1>, vector<16x128xi32>
    %c7_i32 = arith.constant 7 : i32
    %81 = vector.broadcast %c7_i32 : i32 to vector<16x128xi32>
    %82 = arith.cmpi eq, %80, %81 : vector<16x128xi32>
    %cst_30 = arith.constant 0.000000e+00 : f32
    %83 = vector.broadcast %cst_30 : f32 to vector<16x128xf32>
    %84 = arith.select %82, %83, %63 : vector<16x128xi1>, vector<16x128xf32>
    %85 = tpu.concatenate %62, %40, %84 in 1 : vector<16x128xf32>, vector<16x128xf32>, vector<16x128xf32> -> vector<16x384xf32>
    %86 = arith.truncf %85 : vector<16x384xf32> to vector<16x384xbf16>
    %c0_31 = arith.constant 0 : index
    %c0_32 = arith.constant 0 : index
    %87 = vector.load %arg6[%c0_31, %c0_32] : memref<384x128xbf16, #tpu.memory_space<vmem>>, vector<384x128xbf16>
    %cst_33 = arith.constant dense<0.000000e+00> : vector<16x128xf32>
    %88 = tpu.matmul %86, %87, %cst_33 {dimension_numbers = #tpu.dot_dimension_numbers<[1], [0], [0], [1], [0, 0, 1, 1], [], []>} : vector<16x384xbf16>, vector<384x128xbf16>, vector<16x128xf32> -> vector<16x128xf32>
    %c0_34 = arith.constant 0 : index
    %c0_35 = arith.constant 0 : index
    %89 = vector.load %arg7[%c0_34, %c0_35] : memref<1x128xf32, #tpu.memory_space<vmem>>, vector<1x128xf32>
    %90 = vector.broadcast %89 : vector<1x128xf32> to vector<16x128xf32>
    %91 = arith.addf %88, %90 : vector<16x128xf32>
    %c0_36 = arith.constant 0 : index
    %c0_37 = arith.constant 0 : index
    %92 = vector.load %arg8[%c0_36, %c0_37] : memref<1x128xf32, #tpu.memory_space<vmem>>, vector<1x128xf32>
    %c0_38 = arith.constant 0 : index
    %c0_39 = arith.constant 0 : index
    %93 = vector.load %arg9[%c0_38, %c0_39] : memref<1x128xf32, #tpu.memory_space<vmem>>, vector<1x128xf32>
    %cst_40 = arith.constant dense<0.000000e+00> : vector<128xf32>
    %94 = vector.multi_reduction <add>, %91, %cst_40 [0] : vector<16x128xf32> to vector<128xf32>
    %95 = vector.shape_cast %94 : vector<128xf32> to vector<1x128xf32>
    %cst_41 = arith.constant 0.000000e+00 : f32
    %96 = vector.broadcast %cst_41 : f32 to vector<1x128xf32>
    %97 = arith.addf %96, %95 : vector<1x128xf32>
    %98 = arith.mulf %91, %91 : vector<16x128xf32>
    %cst_42 = arith.constant dense<0.000000e+00> : vector<128xf32>
    %99 = vector.multi_reduction <add>, %98, %cst_42 [0] : vector<16x128xf32> to vector<128xf32>
    %100 = vector.shape_cast %99 : vector<128xf32> to vector<1x128xf32>
    %cst_43 = arith.constant 0.000000e+00 : f32
    %101 = vector.broadcast %cst_43 : f32 to vector<1x128xf32>
    %102 = arith.addf %101, %100 : vector<1x128xf32>
    %cst_44 = arith.constant 6.250000e-02 : f32
    %103 = vector.broadcast %cst_44 : f32 to vector<1x128xf32>
    %104 = arith.mulf %97, %103 : vector<1x128xf32>
    %cst_45 = arith.constant 6.250000e-02 : f32
    %105 = vector.broadcast %cst_45 : f32 to vector<1x128xf32>
    %106 = arith.mulf %102, %105 : vector<1x128xf32>
    %107 = arith.mulf %104, %104 : vector<1x128xf32>
    %108 = arith.subf %106, %107 : vector<1x128xf32>
    %cst_46 = arith.constant 0.000000e+00 : f32
    %109 = vector.broadcast %cst_46 : f32 to vector<1x128xf32>
    %110 = arith.maximumf %108, %109 : vector<1x128xf32>
    %cst_47 = arith.constant 9.99999974E-6 : f32
    %111 = vector.broadcast %cst_47 : f32 to vector<1x128xf32>
    %112 = arith.addf %110, %111 : vector<1x128xf32>
    %113 = math.rsqrt %112 : vector<1x128xf32>
    %114 = arith.mulf %113, %92 : vector<1x128xf32>
    %115 = arith.mulf %104, %114 : vector<1x128xf32>
    %116 = arith.subf %93, %115 : vector<1x128xf32>
    %117 = vector.broadcast %114 : vector<1x128xf32> to vector<16x128xf32>
    %118 = arith.mulf %91, %117 : vector<16x128xf32>
    %119 = vector.broadcast %116 : vector<1x128xf32> to vector<16x128xf32>
    %120 = arith.addf %118, %119 : vector<16x128xf32>
    %121 = arith.negf %120 : vector<16x128xf32>
    %122 = math.exp %121 : vector<16x128xf32>
    %cst_48 = arith.constant 1.000000e+00 : f32
    %123 = vector.broadcast %cst_48 : f32 to vector<16x128xf32>
    %124 = arith.addf %123, %122 : vector<16x128xf32>
    %125 = arith.divf %123, %124 : vector<16x128xf32>
    %126 = arith.mulf %120, %125 : vector<16x128xf32>
    %127 = arith.truncf %126 : vector<16x128xf32> to vector<16x128xbf16>
    %c0_49 = arith.constant 0 : index
    %c0_50 = arith.constant 0 : index
    %128 = vector.load %arg10[%c0_49, %c0_50] : memref<128x128xbf16, #tpu.memory_space<vmem>>, vector<128x128xbf16>
    %cst_51 = arith.constant dense<0.000000e+00> : vector<16x128xf32>
    %129 = tpu.matmul %127, %128, %cst_51 {dimension_numbers = #tpu.dot_dimension_numbers<[1], [0], [0], [1], [0, 0, 1, 1], [], []>} : vector<16x128xbf16>, vector<128x128xbf16>, vector<16x128xf32> -> vector<16x128xf32>
    %c0_52 = arith.constant 0 : index
    %c0_53 = arith.constant 0 : index
    %130 = vector.load %arg11[%c0_52, %c0_53] : memref<1x128xf32, #tpu.memory_space<vmem>>, vector<1x128xf32>
    %131 = vector.broadcast %130 : vector<1x128xf32> to vector<16x128xf32>
    %132 = arith.addf %129, %131 : vector<16x128xf32>
    %c0_54 = arith.constant 0 : index
    %c0_55 = arith.constant 0 : index
    %133 = vector.load %arg12[%c0_54, %c0_55] : memref<1x128xf32, #tpu.memory_space<vmem>>, vector<1x128xf32>
    %c0_56 = arith.constant 0 : index
    %c0_57 = arith.constant 0 : index
    %134 = vector.load %arg13[%c0_56, %c0_57] : memref<1x128xf32, #tpu.memory_space<vmem>>, vector<1x128xf32>
    %cst_58 = arith.constant dense<0.000000e+00> : vector<128xf32>
    %135 = vector.multi_reduction <add>, %132, %cst_58 [0] : vector<16x128xf32> to vector<128xf32>
    %136 = vector.shape_cast %135 : vector<128xf32> to vector<1x128xf32>
    %cst_59 = arith.constant 0.000000e+00 : f32
    %137 = vector.broadcast %cst_59 : f32 to vector<1x128xf32>
    %138 = arith.addf %137, %136 : vector<1x128xf32>
    %139 = arith.mulf %132, %132 : vector<16x128xf32>
    %cst_60 = arith.constant dense<0.000000e+00> : vector<128xf32>
    %140 = vector.multi_reduction <add>, %139, %cst_60 [0] : vector<16x128xf32> to vector<128xf32>
    %141 = vector.shape_cast %140 : vector<128xf32> to vector<1x128xf32>
    %cst_61 = arith.constant 0.000000e+00 : f32
    %142 = vector.broadcast %cst_61 : f32 to vector<1x128xf32>
    %143 = arith.addf %142, %141 : vector<1x128xf32>
    %cst_62 = arith.constant 6.250000e-02 : f32
    %144 = vector.broadcast %cst_62 : f32 to vector<1x128xf32>
    %145 = arith.mulf %138, %144 : vector<1x128xf32>
    %cst_63 = arith.constant 6.250000e-02 : f32
    %146 = vector.broadcast %cst_63 : f32 to vector<1x128xf32>
    %147 = arith.mulf %143, %146 : vector<1x128xf32>
    %148 = arith.mulf %145, %145 : vector<1x128xf32>
    %149 = arith.subf %147, %148 : vector<1x128xf32>
    %cst_64 = arith.constant 0.000000e+00 : f32
    %150 = vector.broadcast %cst_64 : f32 to vector<1x128xf32>
    %151 = arith.maximumf %149, %150 : vector<1x128xf32>
    %cst_65 = arith.constant 9.99999974E-6 : f32
    %152 = vector.broadcast %cst_65 : f32 to vector<1x128xf32>
    %153 = arith.addf %151, %152 : vector<1x128xf32>
    %154 = math.rsqrt %153 : vector<1x128xf32>
    %155 = arith.mulf %154, %133 : vector<1x128xf32>
    %156 = arith.mulf %145, %155 : vector<1x128xf32>
    %157 = arith.subf %134, %156 : vector<1x128xf32>
    %158 = vector.broadcast %155 : vector<1x128xf32> to vector<16x128xf32>
    %159 = arith.mulf %132, %158 : vector<16x128xf32>
    %160 = vector.broadcast %157 : vector<1x128xf32> to vector<16x128xf32>
    %161 = arith.addf %159, %160 : vector<16x128xf32>
    %162 = arith.extf %0 : vector<16x128xbf16> to vector<16x128xf32>
    %163 = arith.addf %161, %162 : vector<16x128xf32>
    %164 = arith.negf %163 : vector<16x128xf32>
    %165 = math.exp %164 : vector<16x128xf32>
    %cst_66 = arith.constant 1.000000e+00 : f32
    %166 = vector.broadcast %cst_66 : f32 to vector<16x128xf32>
    %167 = arith.addf %166, %165 : vector<16x128xf32>
    %168 = arith.divf %166, %167 : vector<16x128xf32>
    %169 = arith.mulf %163, %168 : vector<16x128xf32>
    %170 = arith.truncf %169 : vector<16x128xf32> to vector<16x128xbf16>
    %c0_67 = arith.constant 0 : index
    %c0_68 = arith.constant 0 : index
    %171 = vector.load %arg14[%c0_67, %c0_68] : memref<16x128xbf16, #tpu.memory_space<vmem>>, vector<16x128xbf16>
    tpu.vector_store %arg14[%c0_67, %c0_68], %170 {strides = array<i32>} : memref<16x128xbf16, #tpu.memory_space<vmem>>, vector<16x128xbf16>,
    return
  }
  func.func @transform_0(%arg0: i32) -> (i32, i32) {
    %c0_i32 = arith.constant 0 : i32
    %c0_i32_0 = arith.constant 0 : i32
    %c0_i32_1 = arith.constant 0 : i32
    return %c0_i32, %c0_i32_0 : i32, i32
  }
  func.func @transform_1(%arg0: i32) -> (i32, i32) {
    %c0_i32 = arith.constant 0 : i32
    %c0_i32_0 = arith.constant 0 : i32
    %c0_i32_1 = arith.constant 0 : i32
    return %c0_i32, %c0_i32_0 : i32, i32
  }
  func.func @transform_2(%arg0: i32) -> (i32, i32) {
    %c0_i32 = arith.constant 0 : i32
    %c0_i32_0 = arith.constant 0 : i32
    %c0_i32_1 = arith.constant 0 : i32
    return %c0_i32, %c0_i32_0 : i32, i32
  }
  func.func @transform_3(%arg0: i32) -> (i32, i32) {
    %c0_i32 = arith.constant 0 : i32
    %c0_i32_0 = arith.constant 0 : i32
    %c0_i32_1 = arith.constant 0 : i32
    return %c0_i32, %c0_i32_0 : i32, i32
  }
  func.func @transform_4(%arg0: i32) -> (i32, i32) {
    %c0_i32 = arith.constant 0 : i32
    %c0_i32_0 = arith.constant 0 : i32
    %c0_i32_1 = arith.constant 0 : i32
    return %c0_i32, %c0_i32_0 : i32, i32
  }
  func.func @transform_5(%arg0: i32) -> (i32, i32) {
    %c0_i32 = arith.constant 0 : i32
    %c0_i32_0 = arith.constant 0 : i32
    %c0_i32_1 = arith.constant 0 : i32
    return %c0_i32, %c0_i32_0 : i32, i32
  }
  func.func @transform_6(%arg0: i32) -> (i32, i32) {
    %c0_i32 = arith.constant 0 : i32
    %c0_i32_0 = arith.constant 0 : i32
    %c0_i32_1 = arith.constant 0 : i32
    return %c0_i32, %c0_i32_0 : i32, i32
  }
  func.func @transform_7(%arg0: i32) -> (i32, i32) {
    %c0_i32 = arith.constant 0 : i32
    %c0_i32_0 = arith.constant 0 : i32
    %c0_i32_1 = arith.constant 0 : i32
    return %c0_i32, %c0_i32_0 : i32, i32
  }
  func.func @transform_8(%arg0: i32) -> (i32, i32) {
    %c0_i32 = arith.constant 0 : i32
    %c0_i32_0 = arith.constant 0 : i32
    %c0_i32_1 = arith.constant 0 : i32
    return %c0_i32, %c0_i32_0 : i32, i32
  }
  func.func @transform_9(%arg0: i32) -> (i32, i32) {
    %c0_i32 = arith.constant 0 : i32
    %c0_i32_0 = arith.constant 0 : i32
    %c0_i32_1 = arith.constant 0 : i32
    return %c0_i32, %c0_i32_0 : i32, i32
  }
  func.func @transform_10(%arg0: i32) -> (i32, i32) {
    %c0_i32 = arith.constant 0 : i32
    %c0_i32_0 = arith.constant 0 : i32
    %c0_i32_1 = arith.constant 0 : i32
    return %c0_i32, %c0_i32_0 : i32, i32
  }
  func.func @transform_11(%arg0: i32) -> (i32, i32) {
    %c0_i32 = arith.constant 0 : i32
    %c0_i32_0 = arith.constant 0 : i32
    %c0_i32_1 = arith.constant 0 : i32
    return %c0_i32, %c0_i32_0 : i32, i32
  }
  func.func @transform_12(%arg0: i32) -> (i32, i32) {
    %c0_i32 = arith.constant 0 : i32
    %c0_i32_0 = arith.constant 0 : i32
    %c0_i32_1 = arith.constant 0 : i32
    return %c0_i32, %c0_i32_0 : i32, i32
  }
  func.func @transform_13(%arg0: i32) -> (i32, i32) {
    %c0_i32 = arith.constant 0 : i32
    %c0_i32_0 = arith.constant 0 : i32
    %c0_i32_1 = arith.constant 0 : i32
    return %c0_i32, %c0_i32_0 : i32, i32
  }
}

module attributes {stable_mosaic.version = 11 : i64} {
  func.func @block_s2_kernel(%arg0: i32, %arg1: memref<16x128xbf16, #tpu.memory_space<vmem>>, %arg2: memref<16x128xbf16, #tpu.memory_space<vmem>>, %arg3: memref<128x128xbf16, #tpu.memory_space<vmem>>, %arg4: memref<1x128xf32, #tpu.memory_space<vmem>>, %arg5: memref<1x128xf32, #tpu.memory_space<vmem>>, %arg6: memref<1x128xf32, #tpu.memory_space<vmem>>, %arg7: memref<128x128xbf16, #tpu.memory_space<vmem>>, %arg8: memref<1x128xf32, #tpu.memory_space<vmem>>, %arg9: memref<1x128xf32, #tpu.memory_space<vmem>>, %arg10: memref<1x128xf32, #tpu.memory_space<vmem>>, %arg11: memref<384x128xbf16, #tpu.memory_space<vmem>>, %arg12: memref<1x128xf32, #tpu.memory_space<vmem>>, %arg13: memref<1x128xf32, #tpu.memory_space<vmem>>, %arg14: memref<1x128xf32, #tpu.memory_space<vmem>>, %arg15: memref<128x128xbf16, #tpu.memory_space<vmem>>, %arg16: memref<1x128xf32, #tpu.memory_space<vmem>>, %arg17: memref<1x128xf32, #tpu.memory_space<vmem>>, %arg18: memref<1x128xf32, #tpu.memory_space<vmem>>, %arg19: memref<16x128xbf16, #tpu.memory_space<vmem>>) attributes {dimension_semantics = [#tpu.dimension_semantics<arbitrary>], iteration_bounds = array<i64: 1>, scalar_prefetch = 0 : i64, scratch_operands = 0 : i64, tpu.core_type = #tpu.core_type<tc>, window_params = [{pipeline_mode = #tpu.pipeline_mode<synchronous>, transform_indices = @transform_0, window_bounds = array<i64: 16, 128>}, {pipeline_mode = #tpu.pipeline_mode<synchronous>, transform_indices = @transform_1, window_bounds = array<i64: 16, 128>}, {pipeline_mode = #tpu.pipeline_mode<synchronous>, transform_indices = @transform_2, window_bounds = array<i64: 128, 128>}, {pipeline_mode = #tpu.pipeline_mode<synchronous>, transform_indices = @transform_3, window_bounds = array<i64: 1, 128>}, {pipeline_mode = #tpu.pipeline_mode<synchronous>, transform_indices = @transform_4, window_bounds = array<i64: 1, 128>}, {pipeline_mode = #tpu.pipeline_mode<synchronous>, transform_indices = @transform_5, window_bounds = array<i64: 1, 128>}, {pipeline_mode = #tpu.pipeline_mode<synchronous>, transform_indices = @transform_6, window_bounds = array<i64: 128, 128>}, {pipeline_mode = #tpu.pipeline_mode<synchronous>, transform_indices = @transform_7, window_bounds = array<i64: 1, 128>}, {pipeline_mode = #tpu.pipeline_mode<synchronous>, transform_indices = @transform_8, window_bounds = array<i64: 1, 128>}, {pipeline_mode = #tpu.pipeline_mode<synchronous>, transform_indices = @transform_9, window_bounds = array<i64: 1, 128>}, {pipeline_mode = #tpu.pipeline_mode<synchronous>, transform_indices = @transform_10, window_bounds = array<i64: 384, 128>}, {pipeline_mode = #tpu.pipeline_mode<synchronous>, transform_indices = @transform_11, window_bounds = array<i64: 1, 128>}, {pipeline_mode = #tpu.pipeline_mode<synchronous>, transform_indices = @transform_12, window_bounds = array<i64: 1, 128>}, {pipeline_mode = #tpu.pipeline_mode<synchronous>, transform_indices = @transform_13, window_bounds = array<i64: 1, 128>}, {pipeline_mode = #tpu.pipeline_mode<synchronous>, transform_indices = @transform_14, window_bounds = array<i64: 128, 128>}, {pipeline_mode = #tpu.pipeline_mode<synchronous>, transform_indices = @transform_15, window_bounds = array<i64: 1, 128>}, {pipeline_mode = #tpu.pipeline_mode<synchronous>, transform_indices = @transform_16, window_bounds = array<i64: 1, 128>}, {pipeline_mode = #tpu.pipeline_mode<synchronous>, transform_indices = @transform_17, window_bounds = array<i64: 1, 128>}, {pipeline_mode = #tpu.pipeline_mode<synchronous>, transform_indices = @transform_18, window_bounds = array<i64: 16, 128>}]} {
    %c0 = arith.constant 0 : index
    %c0_0 = arith.constant 0 : index
    %0 = vector.load %arg1[%c0, %c0_0] : memref<16x128xbf16, #tpu.memory_space<vmem>>, vector<16x128xbf16>
    %c0_1 = arith.constant 0 : index
    %c0_2 = arith.constant 0 : index
    %1 = vector.load %arg2[%c0_1, %c0_2] : memref<16x128xbf16, #tpu.memory_space<vmem>>, vector<16x128xbf16>
    %c0_3 = arith.constant 0 : index
    %c0_4 = arith.constant 0 : index
    %2 = vector.load %arg7[%c0_3, %c0_4] : memref<128x128xbf16, #tpu.memory_space<vmem>>, vector<128x128xbf16>
    %c0_5 = arith.constant 0 : index
    %c0_6 = arith.constant 0 : index
    %3 = vector.load %arg8[%c0_5, %c0_6] : memref<1x128xf32, #tpu.memory_space<vmem>>, vector<1x128xf32>
    %cst = arith.constant dense<0.000000e+00> : vector<16x128xf32>
    %4 = tpu.matmul %0, %2, %cst {dimension_numbers = #tpu.dot_dimension_numbers<[1], [0], [0], [1], [0, 0, 1, 1], [], []>} : vector<16x128xbf16>, vector<128x128xbf16>, vector<16x128xf32> -> vector<16x128xf32>
    %5 = vector.broadcast %3 : vector<1x128xf32> to vector<16x128xf32>
    %6 = arith.addf %4, %5 : vector<16x128xf32>
    %cst_7 = arith.constant dense<0.000000e+00> : vector<16x128xf32>
    %7 = tpu.matmul %1, %2, %cst_7 {dimension_numbers = #tpu.dot_dimension_numbers<[1], [0], [0], [1], [0, 0, 1, 1], [], []>} : vector<16x128xbf16>, vector<128x128xbf16>, vector<16x128xf32> -> vector<16x128xf32>
    %8 = vector.broadcast %3 : vector<1x128xf32> to vector<16x128xf32>
    %9 = arith.addf %7, %8 : vector<16x128xf32>
    %c0_8 = arith.constant 0 : index
    %c0_9 = arith.constant 0 : index
    %10 = vector.load %arg9[%c0_8, %c0_9] : memref<1x128xf32, #tpu.memory_space<vmem>>, vector<1x128xf32>
    %c0_10 = arith.constant 0 : index
    %c0_11 = arith.constant 0 : index
    %11 = vector.load %arg10[%c0_10, %c0_11] : memref<1x128xf32, #tpu.memory_space<vmem>>, vector<1x128xf32>
    %cst_12 = arith.constant dense<0.000000e+00> : vector<128xf32>
    %12 = vector.multi_reduction <add>, %6, %cst_12 [0] : vector<16x128xf32> to vector<128xf32>
    %13 = vector.shape_cast %12 : vector<128xf32> to vector<1x128xf32>
    %cst_13 = arith.constant 0.000000e+00 : f32
    %14 = vector.broadcast %cst_13 : f32 to vector<1x128xf32>
    %15 = arith.addf %14, %13 : vector<1x128xf32>
    %cst_14 = arith.constant dense<0.000000e+00> : vector<128xf32>
    %16 = vector.multi_reduction <add>, %9, %cst_14 [0] : vector<16x128xf32> to vector<128xf32>
    %17 = vector.shape_cast %16 : vector<128xf32> to vector<1x128xf32>
    %18 = arith.addf %15, %17 : vector<1x128xf32>
    %19 = arith.mulf %6, %6 : vector<16x128xf32>
    %cst_15 = arith.constant dense<0.000000e+00> : vector<128xf32>
    %20 = vector.multi_reduction <add>, %19, %cst_15 [0] : vector<16x128xf32> to vector<128xf32>
    %21 = vector.shape_cast %20 : vector<128xf32> to vector<1x128xf32>
    %cst_16 = arith.constant 0.000000e+00 : f32
    %22 = vector.broadcast %cst_16 : f32 to vector<1x128xf32>
    %23 = arith.addf %22, %21 : vector<1x128xf32>
    %24 = arith.mulf %9, %9 : vector<16x128xf32>
    %cst_17 = arith.constant dense<0.000000e+00> : vector<128xf32>
    %25 = vector.multi_reduction <add>, %24, %cst_17 [0] : vector<16x128xf32> to vector<128xf32>
    %26 = vector.shape_cast %25 : vector<128xf32> to vector<1x128xf32>
    %27 = arith.addf %23, %26 : vector<1x128xf32>
    %cst_18 = arith.constant 3.125000e-02 : f32
    %28 = vector.broadcast %cst_18 : f32 to vector<1x128xf32>
    %29 = arith.mulf %18, %28 : vector<1x128xf32>
    %cst_19 = arith.constant 3.125000e-02 : f32
    %30 = vector.broadcast %cst_19 : f32 to vector<1x128xf32>
    %31 = arith.mulf %27, %30 : vector<1x128xf32>
    %32 = arith.mulf %29, %29 : vector<1x128xf32>
    %33 = arith.subf %31, %32 : vector<1x128xf32>
    %cst_20 = arith.constant 0.000000e+00 : f32
    %34 = vector.broadcast %cst_20 : f32 to vector<1x128xf32>
    %35 = arith.maximumf %33, %34 : vector<1x128xf32>
    %cst_21 = arith.constant 9.99999974E-6 : f32
    %36 = vector.broadcast %cst_21 : f32 to vector<1x128xf32>
    %37 = arith.addf %35, %36 : vector<1x128xf32>
    %38 = math.rsqrt %37 : vector<1x128xf32>
    %39 = arith.mulf %38, %10 : vector<1x128xf32>
    %40 = arith.mulf %29, %39 : vector<1x128xf32>
    %41 = arith.subf %11, %40 : vector<1x128xf32>
    %42 = vector.broadcast %39 : vector<1x128xf32> to vector<16x128xf32>
    %43 = arith.mulf %6, %42 : vector<16x128xf32>
    %44 = vector.broadcast %41 : vector<1x128xf32> to vector<16x128xf32>
    %45 = arith.addf %43, %44 : vector<16x128xf32>
    %46 = arith.negf %45 : vector<16x128xf32>
    %47 = math.exp %46 : vector<16x128xf32>
    %cst_22 = arith.constant 1.000000e+00 : f32
    %48 = vector.broadcast %cst_22 : f32 to vector<16x128xf32>
    %49 = arith.addf %48, %47 : vector<16x128xf32>
    %50 = arith.divf %48, %49 : vector<16x128xf32>
    %51 = arith.mulf %45, %50 : vector<16x128xf32>
    %52 = vector.broadcast %39 : vector<1x128xf32> to vector<16x128xf32>
    %53 = arith.mulf %9, %52 : vector<16x128xf32>
    %54 = vector.broadcast %41 : vector<1x128xf32> to vector<16x128xf32>
    %55 = arith.addf %53, %54 : vector<16x128xf32>
    %56 = arith.negf %55 : vector<16x128xf32>
    %57 = math.exp %56 : vector<16x128xf32>
    %cst_23 = arith.constant 1.000000e+00 : f32
    %58 = vector.broadcast %cst_23 : f32 to vector<16x128xf32>
    %59 = arith.addf %58, %57 : vector<16x128xf32>
    %60 = arith.divf %58, %59 : vector<16x128xf32>
    %61 = arith.mulf %55, %60 : vector<16x128xf32>
    %c1_i32 = arith.constant 1 : i32
    %62 = tpu.dynamic_rotate %61 by %c1_i32 dim 0 : vector<16x128xf32>, i32 -> vector<16x128xf32>
    %63 = tpu.iota {dimensions = array<i32: 0>} : vector<16x128xi32>
    %c8_i32 = arith.constant 8 : i32
    %c0_i32 = arith.constant 0 : i32
    %64 = arith.cmpi eq, %c8_i32, %c0_i32 : i32
    %c1_i32_24 = arith.constant 1 : i32
    %65 = arith.select %64, %c1_i32_24, %c8_i32 : i32
    %66 = vector.broadcast %65 : i32 to vector<16x128xi32>
    %67 = arith.remsi %63, %66 : vector<16x128xi32>
    %c0_i32_25 = arith.constant 0 : i32
    %68 = vector.broadcast %c0_i32_25 : i32 to vector<16x128xi32>
    %69 = arith.cmpi ne, %67, %68 : vector<16x128xi32>
    %c0_i32_26 = arith.constant 0 : i32
    %70 = vector.broadcast %c0_i32_26 : i32 to vector<16x128xi32>
    %71 = arith.cmpi slt, %67, %70 : vector<16x128xi32>
    %c0_i32_27 = arith.constant 0 : i32
    %72 = arith.cmpi slt, %65, %c0_i32_27 : i32
    %73 = vector.broadcast %72 : i1 to vector<16x128xi1>
    %74 = vector.broadcast %73 : vector<16x128xi1> to vector<16x128xi1>
    %75 = arith.xori %71, %74 : vector<16x128xi1>
    %76 = arith.andi %75, %69 : vector<16x128xi1>
    %77 = vector.broadcast %65 : i32 to vector<16x128xi32>
    %78 = arith.addi %67, %77 : vector<16x128xi32>
    %79 = arith.select %76, %78, %67 : vector<16x128xi1>, vector<16x128xi32>
    %c0_i32_28 = arith.constant 0 : i32
    %80 = vector.broadcast %c0_i32_28 : i32 to vector<16x128xi32>
    %81 = arith.cmpi eq, %79, %80 : vector<16x128xi32>
    %cst_29 = arith.constant 0.000000e+00 : f32
    %82 = vector.broadcast %cst_29 : f32 to vector<16x128xf32>
    %83 = arith.select %81, %82, %62 : vector<16x128xi1>, vector<16x128xf32>
    %84 = tpu.concatenate %83, %51, %61 in 1 : vector<16x128xf32>, vector<16x128xf32>, vector<16x128xf32> -> vector<16x384xf32>
    %85 = arith.truncf %84 : vector<16x384xf32> to vector<16x384xbf16>
    %c0_30 = arith.constant 0 : index
    %c0_31 = arith.constant 0 : index
    %86 = vector.load %arg11[%c0_30, %c0_31] : memref<384x128xbf16, #tpu.memory_space<vmem>>, vector<384x128xbf16>
    %cst_32 = arith.constant dense<0.000000e+00> : vector<16x128xf32>
    %87 = tpu.matmul %85, %86, %cst_32 {dimension_numbers = #tpu.dot_dimension_numbers<[1], [0], [0], [1], [0, 0, 1, 1], [], []>} : vector<16x384xbf16>, vector<384x128xbf16>, vector<16x128xf32> -> vector<16x128xf32>
    %c0_33 = arith.constant 0 : index
    %c0_34 = arith.constant 0 : index
    %88 = vector.load %arg12[%c0_33, %c0_34] : memref<1x128xf32, #tpu.memory_space<vmem>>, vector<1x128xf32>
    %89 = vector.broadcast %88 : vector<1x128xf32> to vector<16x128xf32>
    %90 = arith.addf %87, %89 : vector<16x128xf32>
    %c0_35 = arith.constant 0 : index
    %c0_36 = arith.constant 0 : index
    %91 = vector.load %arg13[%c0_35, %c0_36] : memref<1x128xf32, #tpu.memory_space<vmem>>, vector<1x128xf32>
    %c0_37 = arith.constant 0 : index
    %c0_38 = arith.constant 0 : index
    %92 = vector.load %arg14[%c0_37, %c0_38] : memref<1x128xf32, #tpu.memory_space<vmem>>, vector<1x128xf32>
    %cst_39 = arith.constant dense<0.000000e+00> : vector<128xf32>
    %93 = vector.multi_reduction <add>, %90, %cst_39 [0] : vector<16x128xf32> to vector<128xf32>
    %94 = vector.shape_cast %93 : vector<128xf32> to vector<1x128xf32>
    %cst_40 = arith.constant 0.000000e+00 : f32
    %95 = vector.broadcast %cst_40 : f32 to vector<1x128xf32>
    %96 = arith.addf %95, %94 : vector<1x128xf32>
    %97 = arith.mulf %90, %90 : vector<16x128xf32>
    %cst_41 = arith.constant dense<0.000000e+00> : vector<128xf32>
    %98 = vector.multi_reduction <add>, %97, %cst_41 [0] : vector<16x128xf32> to vector<128xf32>
    %99 = vector.shape_cast %98 : vector<128xf32> to vector<1x128xf32>
    %cst_42 = arith.constant 0.000000e+00 : f32
    %100 = vector.broadcast %cst_42 : f32 to vector<1x128xf32>
    %101 = arith.addf %100, %99 : vector<1x128xf32>
    %cst_43 = arith.constant 6.250000e-02 : f32
    %102 = vector.broadcast %cst_43 : f32 to vector<1x128xf32>
    %103 = arith.mulf %96, %102 : vector<1x128xf32>
    %cst_44 = arith.constant 6.250000e-02 : f32
    %104 = vector.broadcast %cst_44 : f32 to vector<1x128xf32>
    %105 = arith.mulf %101, %104 : vector<1x128xf32>
    %106 = arith.mulf %103, %103 : vector<1x128xf32>
    %107 = arith.subf %105, %106 : vector<1x128xf32>
    %cst_45 = arith.constant 0.000000e+00 : f32
    %108 = vector.broadcast %cst_45 : f32 to vector<1x128xf32>
    %109 = arith.maximumf %107, %108 : vector<1x128xf32>
    %cst_46 = arith.constant 9.99999974E-6 : f32
    %110 = vector.broadcast %cst_46 : f32 to vector<1x128xf32>
    %111 = arith.addf %109, %110 : vector<1x128xf32>
    %112 = math.rsqrt %111 : vector<1x128xf32>
    %113 = arith.mulf %112, %91 : vector<1x128xf32>
    %114 = arith.mulf %103, %113 : vector<1x128xf32>
    %115 = arith.subf %92, %114 : vector<1x128xf32>
    %116 = vector.broadcast %113 : vector<1x128xf32> to vector<16x128xf32>
    %117 = arith.mulf %90, %116 : vector<16x128xf32>
    %118 = vector.broadcast %115 : vector<1x128xf32> to vector<16x128xf32>
    %119 = arith.addf %117, %118 : vector<16x128xf32>
    %120 = arith.negf %119 : vector<16x128xf32>
    %121 = math.exp %120 : vector<16x128xf32>
    %cst_47 = arith.constant 1.000000e+00 : f32
    %122 = vector.broadcast %cst_47 : f32 to vector<16x128xf32>
    %123 = arith.addf %122, %121 : vector<16x128xf32>
    %124 = arith.divf %122, %123 : vector<16x128xf32>
    %125 = arith.mulf %119, %124 : vector<16x128xf32>
    %126 = arith.truncf %125 : vector<16x128xf32> to vector<16x128xbf16>
    %c0_48 = arith.constant 0 : index
    %c0_49 = arith.constant 0 : index
    %127 = vector.load %arg15[%c0_48, %c0_49] : memref<128x128xbf16, #tpu.memory_space<vmem>>, vector<128x128xbf16>
    %cst_50 = arith.constant dense<0.000000e+00> : vector<16x128xf32>
    %128 = tpu.matmul %126, %127, %cst_50 {dimension_numbers = #tpu.dot_dimension_numbers<[1], [0], [0], [1], [0, 0, 1, 1], [], []>} : vector<16x128xbf16>, vector<128x128xbf16>, vector<16x128xf32> -> vector<16x128xf32>
    %c0_51 = arith.constant 0 : index
    %c0_52 = arith.constant 0 : index
    %129 = vector.load %arg16[%c0_51, %c0_52] : memref<1x128xf32, #tpu.memory_space<vmem>>, vector<1x128xf32>
    %130 = vector.broadcast %129 : vector<1x128xf32> to vector<16x128xf32>
    %131 = arith.addf %128, %130 : vector<16x128xf32>
    %c0_53 = arith.constant 0 : index
    %c0_54 = arith.constant 0 : index
    %132 = vector.load %arg17[%c0_53, %c0_54] : memref<1x128xf32, #tpu.memory_space<vmem>>, vector<1x128xf32>
    %c0_55 = arith.constant 0 : index
    %c0_56 = arith.constant 0 : index
    %133 = vector.load %arg18[%c0_55, %c0_56] : memref<1x128xf32, #tpu.memory_space<vmem>>, vector<1x128xf32>
    %cst_57 = arith.constant dense<0.000000e+00> : vector<128xf32>
    %134 = vector.multi_reduction <add>, %131, %cst_57 [0] : vector<16x128xf32> to vector<128xf32>
    %135 = vector.shape_cast %134 : vector<128xf32> to vector<1x128xf32>
    %cst_58 = arith.constant 0.000000e+00 : f32
    %136 = vector.broadcast %cst_58 : f32 to vector<1x128xf32>
    %137 = arith.addf %136, %135 : vector<1x128xf32>
    %138 = arith.mulf %131, %131 : vector<16x128xf32>
    %cst_59 = arith.constant dense<0.000000e+00> : vector<128xf32>
    %139 = vector.multi_reduction <add>, %138, %cst_59 [0] : vector<16x128xf32> to vector<128xf32>
    %140 = vector.shape_cast %139 : vector<128xf32> to vector<1x128xf32>
    %cst_60 = arith.constant 0.000000e+00 : f32
    %141 = vector.broadcast %cst_60 : f32 to vector<1x128xf32>
    %142 = arith.addf %141, %140 : vector<1x128xf32>
    %cst_61 = arith.constant 6.250000e-02 : f32
    %143 = vector.broadcast %cst_61 : f32 to vector<1x128xf32>
    %144 = arith.mulf %137, %143 : vector<1x128xf32>
    %cst_62 = arith.constant 6.250000e-02 : f32
    %145 = vector.broadcast %cst_62 : f32 to vector<1x128xf32>
    %146 = arith.mulf %142, %145 : vector<1x128xf32>
    %147 = arith.mulf %144, %144 : vector<1x128xf32>
    %148 = arith.subf %146, %147 : vector<1x128xf32>
    %cst_63 = arith.constant 0.000000e+00 : f32
    %149 = vector.broadcast %cst_63 : f32 to vector<1x128xf32>
    %150 = arith.maximumf %148, %149 : vector<1x128xf32>
    %cst_64 = arith.constant 9.99999974E-6 : f32
    %151 = vector.broadcast %cst_64 : f32 to vector<1x128xf32>
    %152 = arith.addf %150, %151 : vector<1x128xf32>
    %153 = math.rsqrt %152 : vector<1x128xf32>
    %154 = arith.mulf %153, %132 : vector<1x128xf32>
    %155 = arith.mulf %144, %154 : vector<1x128xf32>
    %156 = arith.subf %133, %155 : vector<1x128xf32>
    %157 = vector.broadcast %154 : vector<1x128xf32> to vector<16x128xf32>
    %158 = arith.mulf %131, %157 : vector<16x128xf32>
    %159 = vector.broadcast %156 : vector<1x128xf32> to vector<16x128xf32>
    %160 = arith.addf %158, %159 : vector<16x128xf32>
    %c0_65 = arith.constant 0 : index
    %c0_66 = arith.constant 0 : index
    %161 = vector.load %arg3[%c0_65, %c0_66] : memref<128x128xbf16, #tpu.memory_space<vmem>>, vector<128x128xbf16>
    %cst_67 = arith.constant dense<0.000000e+00> : vector<16x128xf32>
    %162 = tpu.matmul %0, %161, %cst_67 {dimension_numbers = #tpu.dot_dimension_numbers<[1], [0], [0], [1], [0, 0, 1, 1], [], []>} : vector<16x128xbf16>, vector<128x128xbf16>, vector<16x128xf32> -> vector<16x128xf32>
    %c0_68 = arith.constant 0 : index
    %c0_69 = arith.constant 0 : index
    %163 = vector.load %arg4[%c0_68, %c0_69] : memref<1x128xf32, #tpu.memory_space<vmem>>, vector<1x128xf32>
    %164 = vector.broadcast %163 : vector<1x128xf32> to vector<16x128xf32>
    %165 = arith.addf %162, %164 : vector<16x128xf32>
    %c0_70 = arith.constant 0 : index
    %c0_71 = arith.constant 0 : index
    %166 = vector.load %arg5[%c0_70, %c0_71] : memref<1x128xf32, #tpu.memory_space<vmem>>, vector<1x128xf32>
    %c0_72 = arith.constant 0 : index
    %c0_73 = arith.constant 0 : index
    %167 = vector.load %arg6[%c0_72, %c0_73] : memref<1x128xf32, #tpu.memory_space<vmem>>, vector<1x128xf32>
    %cst_74 = arith.constant dense<0.000000e+00> : vector<128xf32>
    %168 = vector.multi_reduction <add>, %165, %cst_74 [0] : vector<16x128xf32> to vector<128xf32>
    %169 = vector.shape_cast %168 : vector<128xf32> to vector<1x128xf32>
    %cst_75 = arith.constant 0.000000e+00 : f32
    %170 = vector.broadcast %cst_75 : f32 to vector<1x128xf32>
    %171 = arith.addf %170, %169 : vector<1x128xf32>
    %172 = arith.mulf %165, %165 : vector<16x128xf32>
    %cst_76 = arith.constant dense<0.000000e+00> : vector<128xf32>
    %173 = vector.multi_reduction <add>, %172, %cst_76 [0] : vector<16x128xf32> to vector<128xf32>
    %174 = vector.shape_cast %173 : vector<128xf32> to vector<1x128xf32>
    %cst_77 = arith.constant 0.000000e+00 : f32
    %175 = vector.broadcast %cst_77 : f32 to vector<1x128xf32>
    %176 = arith.addf %175, %174 : vector<1x128xf32>
    %cst_78 = arith.constant 6.250000e-02 : f32
    %177 = vector.broadcast %cst_78 : f32 to vector<1x128xf32>
    %178 = arith.mulf %171, %177 : vector<1x128xf32>
    %cst_79 = arith.constant 6.250000e-02 : f32
    %179 = vector.broadcast %cst_79 : f32 to vector<1x128xf32>
    %180 = arith.mulf %176, %179 : vector<1x128xf32>
    %181 = arith.mulf %178, %178 : vector<1x128xf32>
    %182 = arith.subf %180, %181 : vector<1x128xf32>
    %cst_80 = arith.constant 0.000000e+00 : f32
    %183 = vector.broadcast %cst_80 : f32 to vector<1x128xf32>
    %184 = arith.maximumf %182, %183 : vector<1x128xf32>
    %cst_81 = arith.constant 9.99999974E-6 : f32
    %185 = vector.broadcast %cst_81 : f32 to vector<1x128xf32>
    %186 = arith.addf %184, %185 : vector<1x128xf32>
    %187 = math.rsqrt %186 : vector<1x128xf32>
    %188 = arith.mulf %187, %166 : vector<1x128xf32>
    %189 = arith.mulf %178, %188 : vector<1x128xf32>
    %190 = arith.subf %167, %189 : vector<1x128xf32>
    %191 = vector.broadcast %188 : vector<1x128xf32> to vector<16x128xf32>
    %192 = arith.mulf %165, %191 : vector<16x128xf32>
    %193 = vector.broadcast %190 : vector<1x128xf32> to vector<16x128xf32>
    %194 = arith.addf %192, %193 : vector<16x128xf32>
    %195 = arith.addf %160, %194 : vector<16x128xf32>
    %196 = arith.negf %195 : vector<16x128xf32>
    %197 = math.exp %196 : vector<16x128xf32>
    %cst_82 = arith.constant 1.000000e+00 : f32
    %198 = vector.broadcast %cst_82 : f32 to vector<16x128xf32>
    %199 = arith.addf %198, %197 : vector<16x128xf32>
    %200 = arith.divf %198, %199 : vector<16x128xf32>
    %201 = arith.mulf %195, %200 : vector<16x128xf32>
    %202 = arith.truncf %201 : vector<16x128xf32> to vector<16x128xbf16>
    %c0_83 = arith.constant 0 : index
    %c0_84 = arith.constant 0 : index
    %203 = vector.load %arg19[%c0_83, %c0_84] : memref<16x128xbf16, #tpu.memory_space<vmem>>, vector<16x128xbf16>
    tpu.vector_store %arg19[%c0_83, %c0_84], %202 {strides = array<i32>} : memref<16x128xbf16, #tpu.memory_space<vmem>>, vector<16x128xbf16>,
    return
  }
  func.func @transform_0(%arg0: i32) -> (i32, i32) {
    %c0_i32 = arith.constant 0 : i32
    %c0_i32_0 = arith.constant 0 : i32
    %c0_i32_1 = arith.constant 0 : i32
    return %c0_i32, %c0_i32_0 : i32, i32
  }
  func.func @transform_1(%arg0: i32) -> (i32, i32) {
    %c0_i32 = arith.constant 0 : i32
    %c0_i32_0 = arith.constant 0 : i32
    %c0_i32_1 = arith.constant 0 : i32
    return %c0_i32, %c0_i32_0 : i32, i32
  }
  func.func @transform_2(%arg0: i32) -> (i32, i32) {
    %c0_i32 = arith.constant 0 : i32
    %c0_i32_0 = arith.constant 0 : i32
    %c0_i32_1 = arith.constant 0 : i32
    return %c0_i32, %c0_i32_0 : i32, i32
  }
  func.func @transform_3(%arg0: i32) -> (i32, i32) {
    %c0_i32 = arith.constant 0 : i32
    %c0_i32_0 = arith.constant 0 : i32
    %c0_i32_1 = arith.constant 0 : i32
    return %c0_i32, %c0_i32_0 : i32, i32
  }
  func.func @transform_4(%arg0: i32) -> (i32, i32) {
    %c0_i32 = arith.constant 0 : i32
    %c0_i32_0 = arith.constant 0 : i32
    %c0_i32_1 = arith.constant 0 : i32
    return %c0_i32, %c0_i32_0 : i32, i32
  }
  func.func @transform_5(%arg0: i32) -> (i32, i32) {
    %c0_i32 = arith.constant 0 : i32
    %c0_i32_0 = arith.constant 0 : i32
    %c0_i32_1 = arith.constant 0 : i32
    return %c0_i32, %c0_i32_0 : i32, i32
  }
  func.func @transform_6(%arg0: i32) -> (i32, i32) {
    %c0_i32 = arith.constant 0 : i32
    %c0_i32_0 = arith.constant 0 : i32
    %c0_i32_1 = arith.constant 0 : i32
    return %c0_i32, %c0_i32_0 : i32, i32
  }
  func.func @transform_7(%arg0: i32) -> (i32, i32) {
    %c0_i32 = arith.constant 0 : i32
    %c0_i32_0 = arith.constant 0 : i32
    %c0_i32_1 = arith.constant 0 : i32
    return %c0_i32, %c0_i32_0 : i32, i32
  }
  func.func @transform_8(%arg0: i32) -> (i32, i32) {
    %c0_i32 = arith.constant 0 : i32
    %c0_i32_0 = arith.constant 0 : i32
    %c0_i32_1 = arith.constant 0 : i32
    return %c0_i32, %c0_i32_0 : i32, i32
  }
  func.func @transform_9(%arg0: i32) -> (i32, i32) {
    %c0_i32 = arith.constant 0 : i32
    %c0_i32_0 = arith.constant 0 : i32
    %c0_i32_1 = arith.constant 0 : i32
    return %c0_i32, %c0_i32_0 : i32, i32
  }
  func.func @transform_10(%arg0: i32) -> (i32, i32) {
    %c0_i32 = arith.constant 0 : i32
    %c0_i32_0 = arith.constant 0 : i32
    %c0_i32_1 = arith.constant 0 : i32
    return %c0_i32, %c0_i32_0 : i32, i32
  }
  func.func @transform_11(%arg0: i32) -> (i32, i32) {
    %c0_i32 = arith.constant 0 : i32
    %c0_i32_0 = arith.constant 0 : i32
    %c0_i32_1 = arith.constant 0 : i32
    return %c0_i32, %c0_i32_0 : i32, i32
  }
  func.func @transform_12(%arg0: i32) -> (i32, i32) {
    %c0_i32 = arith.constant 0 : i32
    %c0_i32_0 = arith.constant 0 : i32
    %c0_i32_1 = arith.constant 0 : i32
    return %c0_i32, %c0_i32_0 : i32, i32
  }
  func.func @transform_13(%arg0: i32) -> (i32, i32) {
    %c0_i32 = arith.constant 0 : i32
    %c0_i32_0 = arith.constant 0 : i32
    %c0_i32_1 = arith.constant 0 : i32
    return %c0_i32, %c0_i32_0 : i32, i32
  }
  func.func @transform_14(%arg0: i32) -> (i32, i32) {
    %c0_i32 = arith.constant 0 : i32
    %c0_i32_0 = arith.constant 0 : i32
    %c0_i32_1 = arith.constant 0 : i32
    return %c0_i32, %c0_i32_0 : i32, i32
  }
  func.func @transform_15(%arg0: i32) -> (i32, i32) {
    %c0_i32 = arith.constant 0 : i32
    %c0_i32_0 = arith.constant 0 : i32
    %c0_i32_1 = arith.constant 0 : i32
    return %c0_i32, %c0_i32_0 : i32, i32
  }
  func.func @transform_16(%arg0: i32) -> (i32, i32) {
    %c0_i32 = arith.constant 0 : i32
    %c0_i32_0 = arith.constant 0 : i32
    %c0_i32_1 = arith.constant 0 : i32
    return %c0_i32, %c0_i32_0 : i32, i32
  }
  func.func @transform_17(%arg0: i32) -> (i32, i32) {
    %c0_i32 = arith.constant 0 : i32
    %c0_i32_0 = arith.constant 0 : i32
    %c0_i32_1 = arith.constant 0 : i32
    return %c0_i32, %c0_i32_0 : i32, i32
  }
  func.func @transform_18(%arg0: i32) -> (i32, i32) {
    %c0_i32 = arith.constant 0 : i32
    %c0_i32_0 = arith.constant 0 : i32
    %c0_i32_1 = arith.constant 0 : i32
    return %c0_i32, %c0_i32_0 : i32, i32
  }
}

module attributes {stable_mosaic.version = 11 : i64} {
  func.func @block_s2_kernel(%arg0: i32, %arg1: memref<8x128xbf16, #tpu.memory_space<vmem>>, %arg2: memref<8x128xbf16, #tpu.memory_space<vmem>>, %arg3: memref<128x128xbf16, #tpu.memory_space<vmem>>, %arg4: memref<1x128xf32, #tpu.memory_space<vmem>>, %arg5: memref<1x128xf32, #tpu.memory_space<vmem>>, %arg6: memref<1x128xf32, #tpu.memory_space<vmem>>, %arg7: memref<128x128xbf16, #tpu.memory_space<vmem>>, %arg8: memref<1x128xf32, #tpu.memory_space<vmem>>, %arg9: memref<1x128xf32, #tpu.memory_space<vmem>>, %arg10: memref<1x128xf32, #tpu.memory_space<vmem>>, %arg11: memref<384x128xbf16, #tpu.memory_space<vmem>>, %arg12: memref<1x128xf32, #tpu.memory_space<vmem>>, %arg13: memref<1x128xf32, #tpu.memory_space<vmem>>, %arg14: memref<1x128xf32, #tpu.memory_space<vmem>>, %arg15: memref<128x128xbf16, #tpu.memory_space<vmem>>, %arg16: memref<1x128xf32, #tpu.memory_space<vmem>>, %arg17: memref<1x128xf32, #tpu.memory_space<vmem>>, %arg18: memref<1x128xf32, #tpu.memory_space<vmem>>, %arg19: memref<8x128xbf16, #tpu.memory_space<vmem>>) attributes {dimension_semantics = [#tpu.dimension_semantics<arbitrary>], iteration_bounds = array<i64: 1>, scalar_prefetch = 0 : i64, scratch_operands = 0 : i64, tpu.core_type = #tpu.core_type<tc>, window_params = [{pipeline_mode = #tpu.pipeline_mode<synchronous>, transform_indices = @transform_0, window_bounds = array<i64: 8, 128>}, {pipeline_mode = #tpu.pipeline_mode<synchronous>, transform_indices = @transform_1, window_bounds = array<i64: 8, 128>}, {pipeline_mode = #tpu.pipeline_mode<synchronous>, transform_indices = @transform_2, window_bounds = array<i64: 128, 128>}, {pipeline_mode = #tpu.pipeline_mode<synchronous>, transform_indices = @transform_3, window_bounds = array<i64: 1, 128>}, {pipeline_mode = #tpu.pipeline_mode<synchronous>, transform_indices = @transform_4, window_bounds = array<i64: 1, 128>}, {pipeline_mode = #tpu.pipeline_mode<synchronous>, transform_indices = @transform_5, window_bounds = array<i64: 1, 128>}, {pipeline_mode = #tpu.pipeline_mode<synchronous>, transform_indices = @transform_6, window_bounds = array<i64: 128, 128>}, {pipeline_mode = #tpu.pipeline_mode<synchronous>, transform_indices = @transform_7, window_bounds = array<i64: 1, 128>}, {pipeline_mode = #tpu.pipeline_mode<synchronous>, transform_indices = @transform_8, window_bounds = array<i64: 1, 128>}, {pipeline_mode = #tpu.pipeline_mode<synchronous>, transform_indices = @transform_9, window_bounds = array<i64: 1, 128>}, {pipeline_mode = #tpu.pipeline_mode<synchronous>, transform_indices = @transform_10, window_bounds = array<i64: 384, 128>}, {pipeline_mode = #tpu.pipeline_mode<synchronous>, transform_indices = @transform_11, window_bounds = array<i64: 1, 128>}, {pipeline_mode = #tpu.pipeline_mode<synchronous>, transform_indices = @transform_12, window_bounds = array<i64: 1, 128>}, {pipeline_mode = #tpu.pipeline_mode<synchronous>, transform_indices = @transform_13, window_bounds = array<i64: 1, 128>}, {pipeline_mode = #tpu.pipeline_mode<synchronous>, transform_indices = @transform_14, window_bounds = array<i64: 128, 128>}, {pipeline_mode = #tpu.pipeline_mode<synchronous>, transform_indices = @transform_15, window_bounds = array<i64: 1, 128>}, {pipeline_mode = #tpu.pipeline_mode<synchronous>, transform_indices = @transform_16, window_bounds = array<i64: 1, 128>}, {pipeline_mode = #tpu.pipeline_mode<synchronous>, transform_indices = @transform_17, window_bounds = array<i64: 1, 128>}, {pipeline_mode = #tpu.pipeline_mode<synchronous>, transform_indices = @transform_18, window_bounds = array<i64: 8, 128>}]} {
    %c0 = arith.constant 0 : index
    %c0_0 = arith.constant 0 : index
    %0 = vector.load %arg1[%c0, %c0_0] : memref<8x128xbf16, #tpu.memory_space<vmem>>, vector<8x128xbf16>
    %c0_1 = arith.constant 0 : index
    %c0_2 = arith.constant 0 : index
    %1 = vector.load %arg2[%c0_1, %c0_2] : memref<8x128xbf16, #tpu.memory_space<vmem>>, vector<8x128xbf16>
    %c0_3 = arith.constant 0 : index
    %c0_4 = arith.constant 0 : index
    %2 = vector.load %arg7[%c0_3, %c0_4] : memref<128x128xbf16, #tpu.memory_space<vmem>>, vector<128x128xbf16>
    %c0_5 = arith.constant 0 : index
    %c0_6 = arith.constant 0 : index
    %3 = vector.load %arg8[%c0_5, %c0_6] : memref<1x128xf32, #tpu.memory_space<vmem>>, vector<1x128xf32>
    %cst = arith.constant dense<0.000000e+00> : vector<8x128xf32>
    %4 = tpu.matmul %0, %2, %cst {dimension_numbers = #tpu.dot_dimension_numbers<[1], [0], [0], [1], [0, 0, 1, 1], [], []>} : vector<8x128xbf16>, vector<128x128xbf16>, vector<8x128xf32> -> vector<8x128xf32>
    %5 = vector.broadcast %3 : vector<1x128xf32> to vector<8x128xf32>
    %6 = arith.addf %4, %5 : vector<8x128xf32>
    %cst_7 = arith.constant dense<0.000000e+00> : vector<8x128xf32>
    %7 = tpu.matmul %1, %2, %cst_7 {dimension_numbers = #tpu.dot_dimension_numbers<[1], [0], [0], [1], [0, 0, 1, 1], [], []>} : vector<8x128xbf16>, vector<128x128xbf16>, vector<8x128xf32> -> vector<8x128xf32>
    %8 = vector.broadcast %3 : vector<1x128xf32> to vector<8x128xf32>
    %9 = arith.addf %7, %8 : vector<8x128xf32>
    %c0_8 = arith.constant 0 : index
    %c0_9 = arith.constant 0 : index
    %10 = vector.load %arg9[%c0_8, %c0_9] : memref<1x128xf32, #tpu.memory_space<vmem>>, vector<1x128xf32>
    %c0_10 = arith.constant 0 : index
    %c0_11 = arith.constant 0 : index
    %11 = vector.load %arg10[%c0_10, %c0_11] : memref<1x128xf32, #tpu.memory_space<vmem>>, vector<1x128xf32>
    %cst_12 = arith.constant dense<0.000000e+00> : vector<128xf32>
    %12 = vector.multi_reduction <add>, %6, %cst_12 [0] : vector<8x128xf32> to vector<128xf32>
    %13 = vector.shape_cast %12 : vector<128xf32> to vector<1x128xf32>
    %cst_13 = arith.constant 0.000000e+00 : f32
    %14 = vector.broadcast %cst_13 : f32 to vector<1x128xf32>
    %15 = arith.addf %14, %13 : vector<1x128xf32>
    %cst_14 = arith.constant dense<0.000000e+00> : vector<128xf32>
    %16 = vector.multi_reduction <add>, %9, %cst_14 [0] : vector<8x128xf32> to vector<128xf32>
    %17 = vector.shape_cast %16 : vector<128xf32> to vector<1x128xf32>
    %18 = arith.addf %15, %17 : vector<1x128xf32>
    %19 = arith.mulf %6, %6 : vector<8x128xf32>
    %cst_15 = arith.constant dense<0.000000e+00> : vector<128xf32>
    %20 = vector.multi_reduction <add>, %19, %cst_15 [0] : vector<8x128xf32> to vector<128xf32>
    %21 = vector.shape_cast %20 : vector<128xf32> to vector<1x128xf32>
    %cst_16 = arith.constant 0.000000e+00 : f32
    %22 = vector.broadcast %cst_16 : f32 to vector<1x128xf32>
    %23 = arith.addf %22, %21 : vector<1x128xf32>
    %24 = arith.mulf %9, %9 : vector<8x128xf32>
    %cst_17 = arith.constant dense<0.000000e+00> : vector<128xf32>
    %25 = vector.multi_reduction <add>, %24, %cst_17 [0] : vector<8x128xf32> to vector<128xf32>
    %26 = vector.shape_cast %25 : vector<128xf32> to vector<1x128xf32>
    %27 = arith.addf %23, %26 : vector<1x128xf32>
    %cst_18 = arith.constant 6.250000e-02 : f32
    %28 = vector.broadcast %cst_18 : f32 to vector<1x128xf32>
    %29 = arith.mulf %18, %28 : vector<1x128xf32>
    %cst_19 = arith.constant 6.250000e-02 : f32
    %30 = vector.broadcast %cst_19 : f32 to vector<1x128xf32>
    %31 = arith.mulf %27, %30 : vector<1x128xf32>
    %32 = arith.mulf %29, %29 : vector<1x128xf32>
    %33 = arith.subf %31, %32 : vector<1x128xf32>
    %cst_20 = arith.constant 0.000000e+00 : f32
    %34 = vector.broadcast %cst_20 : f32 to vector<1x128xf32>
    %35 = arith.maximumf %33, %34 : vector<1x128xf32>
    %cst_21 = arith.constant 9.99999974E-6 : f32
    %36 = vector.broadcast %cst_21 : f32 to vector<1x128xf32>
    %37 = arith.addf %35, %36 : vector<1x128xf32>
    %38 = math.rsqrt %37 : vector<1x128xf32>
    %39 = arith.mulf %38, %10 : vector<1x128xf32>
    %40 = arith.mulf %29, %39 : vector<1x128xf32>
    %41 = arith.subf %11, %40 : vector<1x128xf32>
    %42 = vector.broadcast %39 : vector<1x128xf32> to vector<8x128xf32>
    %43 = arith.mulf %6, %42 : vector<8x128xf32>
    %44 = vector.broadcast %41 : vector<1x128xf32> to vector<8x128xf32>
    %45 = arith.addf %43, %44 : vector<8x128xf32>
    %46 = arith.negf %45 : vector<8x128xf32>
    %47 = math.exp %46 : vector<8x128xf32>
    %cst_22 = arith.constant 1.000000e+00 : f32
    %48 = vector.broadcast %cst_22 : f32 to vector<8x128xf32>
    %49 = arith.addf %48, %47 : vector<8x128xf32>
    %50 = arith.divf %48, %49 : vector<8x128xf32>
    %51 = arith.mulf %45, %50 : vector<8x128xf32>
    %52 = vector.broadcast %39 : vector<1x128xf32> to vector<8x128xf32>
    %53 = arith.mulf %9, %52 : vector<8x128xf32>
    %54 = vector.broadcast %41 : vector<1x128xf32> to vector<8x128xf32>
    %55 = arith.addf %53, %54 : vector<8x128xf32>
    %56 = arith.negf %55 : vector<8x128xf32>
    %57 = math.exp %56 : vector<8x128xf32>
    %cst_23 = arith.constant 1.000000e+00 : f32
    %58 = vector.broadcast %cst_23 : f32 to vector<8x128xf32>
    %59 = arith.addf %58, %57 : vector<8x128xf32>
    %60 = arith.divf %58, %59 : vector<8x128xf32>
    %61 = arith.mulf %55, %60 : vector<8x128xf32>
    %c1_i32 = arith.constant 1 : i32
    %62 = tpu.dynamic_rotate %61 by %c1_i32 dim 0 : vector<8x128xf32>, i32 -> vector<8x128xf32>
    %63 = tpu.iota {dimensions = array<i32: 0>} : vector<8x128xi32>
    %c4_i32 = arith.constant 4 : i32
    %c0_i32 = arith.constant 0 : i32
    %64 = arith.cmpi eq, %c4_i32, %c0_i32 : i32
    %c1_i32_24 = arith.constant 1 : i32
    %65 = arith.select %64, %c1_i32_24, %c4_i32 : i32
    %66 = vector.broadcast %65 : i32 to vector<8x128xi32>
    %67 = arith.remsi %63, %66 : vector<8x128xi32>
    %c0_i32_25 = arith.constant 0 : i32
    %68 = vector.broadcast %c0_i32_25 : i32 to vector<8x128xi32>
    %69 = arith.cmpi ne, %67, %68 : vector<8x128xi32>
    %c0_i32_26 = arith.constant 0 : i32
    %70 = vector.broadcast %c0_i32_26 : i32 to vector<8x128xi32>
    %71 = arith.cmpi slt, %67, %70 : vector<8x128xi32>
    %c0_i32_27 = arith.constant 0 : i32
    %72 = arith.cmpi slt, %65, %c0_i32_27 : i32
    %73 = vector.broadcast %72 : i1 to vector<8x128xi1>
    %74 = vector.broadcast %73 : vector<8x128xi1> to vector<8x128xi1>
    %75 = arith.xori %71, %74 : vector<8x128xi1>
    %76 = arith.andi %75, %69 : vector<8x128xi1>
    %77 = vector.broadcast %65 : i32 to vector<8x128xi32>
    %78 = arith.addi %67, %77 : vector<8x128xi32>
    %79 = arith.select %76, %78, %67 : vector<8x128xi1>, vector<8x128xi32>
    %c0_i32_28 = arith.constant 0 : i32
    %80 = vector.broadcast %c0_i32_28 : i32 to vector<8x128xi32>
    %81 = arith.cmpi eq, %79, %80 : vector<8x128xi32>
    %cst_29 = arith.constant 0.000000e+00 : f32
    %82 = vector.broadcast %cst_29 : f32 to vector<8x128xf32>
    %83 = arith.select %81, %82, %62 : vector<8x128xi1>, vector<8x128xf32>
    %84 = tpu.concatenate %83, %51, %61 in 1 : vector<8x128xf32>, vector<8x128xf32>, vector<8x128xf32> -> vector<8x384xf32>
    %85 = arith.truncf %84 : vector<8x384xf32> to vector<8x384xbf16>
    %c0_30 = arith.constant 0 : index
    %c0_31 = arith.constant 0 : index
    %86 = vector.load %arg11[%c0_30, %c0_31] : memref<384x128xbf16, #tpu.memory_space<vmem>>, vector<384x128xbf16>
    %cst_32 = arith.constant dense<0.000000e+00> : vector<8x128xf32>
    %87 = tpu.matmul %85, %86, %cst_32 {dimension_numbers = #tpu.dot_dimension_numbers<[1], [0], [0], [1], [0, 0, 1, 1], [], []>} : vector<8x384xbf16>, vector<384x128xbf16>, vector<8x128xf32> -> vector<8x128xf32>
    %c0_33 = arith.constant 0 : index
    %c0_34 = arith.constant 0 : index
    %88 = vector.load %arg12[%c0_33, %c0_34] : memref<1x128xf32, #tpu.memory_space<vmem>>, vector<1x128xf32>
    %89 = vector.broadcast %88 : vector<1x128xf32> to vector<8x128xf32>
    %90 = arith.addf %87, %89 : vector<8x128xf32>
    %c0_35 = arith.constant 0 : index
    %c0_36 = arith.constant 0 : index
    %91 = vector.load %arg13[%c0_35, %c0_36] : memref<1x128xf32, #tpu.memory_space<vmem>>, vector<1x128xf32>
    %c0_37 = arith.constant 0 : index
    %c0_38 = arith.constant 0 : index
    %92 = vector.load %arg14[%c0_37, %c0_38] : memref<1x128xf32, #tpu.memory_space<vmem>>, vector<1x128xf32>
    %cst_39 = arith.constant dense<0.000000e+00> : vector<128xf32>
    %93 = vector.multi_reduction <add>, %90, %cst_39 [0] : vector<8x128xf32> to vector<128xf32>
    %94 = vector.shape_cast %93 : vector<128xf32> to vector<1x128xf32>
    %cst_40 = arith.constant 0.000000e+00 : f32
    %95 = vector.broadcast %cst_40 : f32 to vector<1x128xf32>
    %96 = arith.addf %95, %94 : vector<1x128xf32>
    %97 = arith.mulf %90, %90 : vector<8x128xf32>
    %cst_41 = arith.constant dense<0.000000e+00> : vector<128xf32>
    %98 = vector.multi_reduction <add>, %97, %cst_41 [0] : vector<8x128xf32> to vector<128xf32>
    %99 = vector.shape_cast %98 : vector<128xf32> to vector<1x128xf32>
    %cst_42 = arith.constant 0.000000e+00 : f32
    %100 = vector.broadcast %cst_42 : f32 to vector<1x128xf32>
    %101 = arith.addf %100, %99 : vector<1x128xf32>
    %cst_43 = arith.constant 1.250000e-01 : f32
    %102 = vector.broadcast %cst_43 : f32 to vector<1x128xf32>
    %103 = arith.mulf %96, %102 : vector<1x128xf32>
    %cst_44 = arith.constant 1.250000e-01 : f32
    %104 = vector.broadcast %cst_44 : f32 to vector<1x128xf32>
    %105 = arith.mulf %101, %104 : vector<1x128xf32>
    %106 = arith.mulf %103, %103 : vector<1x128xf32>
    %107 = arith.subf %105, %106 : vector<1x128xf32>
    %cst_45 = arith.constant 0.000000e+00 : f32
    %108 = vector.broadcast %cst_45 : f32 to vector<1x128xf32>
    %109 = arith.maximumf %107, %108 : vector<1x128xf32>
    %cst_46 = arith.constant 9.99999974E-6 : f32
    %110 = vector.broadcast %cst_46 : f32 to vector<1x128xf32>
    %111 = arith.addf %109, %110 : vector<1x128xf32>
    %112 = math.rsqrt %111 : vector<1x128xf32>
    %113 = arith.mulf %112, %91 : vector<1x128xf32>
    %114 = arith.mulf %103, %113 : vector<1x128xf32>
    %115 = arith.subf %92, %114 : vector<1x128xf32>
    %116 = vector.broadcast %113 : vector<1x128xf32> to vector<8x128xf32>
    %117 = arith.mulf %90, %116 : vector<8x128xf32>
    %118 = vector.broadcast %115 : vector<1x128xf32> to vector<8x128xf32>
    %119 = arith.addf %117, %118 : vector<8x128xf32>
    %120 = arith.negf %119 : vector<8x128xf32>
    %121 = math.exp %120 : vector<8x128xf32>
    %cst_47 = arith.constant 1.000000e+00 : f32
    %122 = vector.broadcast %cst_47 : f32 to vector<8x128xf32>
    %123 = arith.addf %122, %121 : vector<8x128xf32>
    %124 = arith.divf %122, %123 : vector<8x128xf32>
    %125 = arith.mulf %119, %124 : vector<8x128xf32>
    %126 = arith.truncf %125 : vector<8x128xf32> to vector<8x128xbf16>
    %c0_48 = arith.constant 0 : index
    %c0_49 = arith.constant 0 : index
    %127 = vector.load %arg15[%c0_48, %c0_49] : memref<128x128xbf16, #tpu.memory_space<vmem>>, vector<128x128xbf16>
    %cst_50 = arith.constant dense<0.000000e+00> : vector<8x128xf32>
    %128 = tpu.matmul %126, %127, %cst_50 {dimension_numbers = #tpu.dot_dimension_numbers<[1], [0], [0], [1], [0, 0, 1, 1], [], []>} : vector<8x128xbf16>, vector<128x128xbf16>, vector<8x128xf32> -> vector<8x128xf32>
    %c0_51 = arith.constant 0 : index
    %c0_52 = arith.constant 0 : index
    %129 = vector.load %arg16[%c0_51, %c0_52] : memref<1x128xf32, #tpu.memory_space<vmem>>, vector<1x128xf32>
    %130 = vector.broadcast %129 : vector<1x128xf32> to vector<8x128xf32>
    %131 = arith.addf %128, %130 : vector<8x128xf32>
    %c0_53 = arith.constant 0 : index
    %c0_54 = arith.constant 0 : index
    %132 = vector.load %arg17[%c0_53, %c0_54] : memref<1x128xf32, #tpu.memory_space<vmem>>, vector<1x128xf32>
    %c0_55 = arith.constant 0 : index
    %c0_56 = arith.constant 0 : index
    %133 = vector.load %arg18[%c0_55, %c0_56] : memref<1x128xf32, #tpu.memory_space<vmem>>, vector<1x128xf32>
    %cst_57 = arith.constant dense<0.000000e+00> : vector<128xf32>
    %134 = vector.multi_reduction <add>, %131, %cst_57 [0] : vector<8x128xf32> to vector<128xf32>
    %135 = vector.shape_cast %134 : vector<128xf32> to vector<1x128xf32>
    %cst_58 = arith.constant 0.000000e+00 : f32
    %136 = vector.broadcast %cst_58 : f32 to vector<1x128xf32>
    %137 = arith.addf %136, %135 : vector<1x128xf32>
    %138 = arith.mulf %131, %131 : vector<8x128xf32>
    %cst_59 = arith.constant dense<0.000000e+00> : vector<128xf32>
    %139 = vector.multi_reduction <add>, %138, %cst_59 [0] : vector<8x128xf32> to vector<128xf32>
    %140 = vector.shape_cast %139 : vector<128xf32> to vector<1x128xf32>
    %cst_60 = arith.constant 0.000000e+00 : f32
    %141 = vector.broadcast %cst_60 : f32 to vector<1x128xf32>
    %142 = arith.addf %141, %140 : vector<1x128xf32>
    %cst_61 = arith.constant 1.250000e-01 : f32
    %143 = vector.broadcast %cst_61 : f32 to vector<1x128xf32>
    %144 = arith.mulf %137, %143 : vector<1x128xf32>
    %cst_62 = arith.constant 1.250000e-01 : f32
    %145 = vector.broadcast %cst_62 : f32 to vector<1x128xf32>
    %146 = arith.mulf %142, %145 : vector<1x128xf32>
    %147 = arith.mulf %144, %144 : vector<1x128xf32>
    %148 = arith.subf %146, %147 : vector<1x128xf32>
    %cst_63 = arith.constant 0.000000e+00 : f32
    %149 = vector.broadcast %cst_63 : f32 to vector<1x128xf32>
    %150 = arith.maximumf %148, %149 : vector<1x128xf32>
    %cst_64 = arith.constant 9.99999974E-6 : f32
    %151 = vector.broadcast %cst_64 : f32 to vector<1x128xf32>
    %152 = arith.addf %150, %151 : vector<1x128xf32>
    %153 = math.rsqrt %152 : vector<1x128xf32>
    %154 = arith.mulf %153, %132 : vector<1x128xf32>
    %155 = arith.mulf %144, %154 : vector<1x128xf32>
    %156 = arith.subf %133, %155 : vector<1x128xf32>
    %157 = vector.broadcast %154 : vector<1x128xf32> to vector<8x128xf32>
    %158 = arith.mulf %131, %157 : vector<8x128xf32>
    %159 = vector.broadcast %156 : vector<1x128xf32> to vector<8x128xf32>
    %160 = arith.addf %158, %159 : vector<8x128xf32>
    %c0_65 = arith.constant 0 : index
    %c0_66 = arith.constant 0 : index
    %161 = vector.load %arg3[%c0_65, %c0_66] : memref<128x128xbf16, #tpu.memory_space<vmem>>, vector<128x128xbf16>
    %cst_67 = arith.constant dense<0.000000e+00> : vector<8x128xf32>
    %162 = tpu.matmul %0, %161, %cst_67 {dimension_numbers = #tpu.dot_dimension_numbers<[1], [0], [0], [1], [0, 0, 1, 1], [], []>} : vector<8x128xbf16>, vector<128x128xbf16>, vector<8x128xf32> -> vector<8x128xf32>
    %c0_68 = arith.constant 0 : index
    %c0_69 = arith.constant 0 : index
    %163 = vector.load %arg4[%c0_68, %c0_69] : memref<1x128xf32, #tpu.memory_space<vmem>>, vector<1x128xf32>
    %164 = vector.broadcast %163 : vector<1x128xf32> to vector<8x128xf32>
    %165 = arith.addf %162, %164 : vector<8x128xf32>
    %c0_70 = arith.constant 0 : index
    %c0_71 = arith.constant 0 : index
    %166 = vector.load %arg5[%c0_70, %c0_71] : memref<1x128xf32, #tpu.memory_space<vmem>>, vector<1x128xf32>
    %c0_72 = arith.constant 0 : index
    %c0_73 = arith.constant 0 : index
    %167 = vector.load %arg6[%c0_72, %c0_73] : memref<1x128xf32, #tpu.memory_space<vmem>>, vector<1x128xf32>
    %cst_74 = arith.constant dense<0.000000e+00> : vector<128xf32>
    %168 = vector.multi_reduction <add>, %165, %cst_74 [0] : vector<8x128xf32> to vector<128xf32>
    %169 = vector.shape_cast %168 : vector<128xf32> to vector<1x128xf32>
    %cst_75 = arith.constant 0.000000e+00 : f32
    %170 = vector.broadcast %cst_75 : f32 to vector<1x128xf32>
    %171 = arith.addf %170, %169 : vector<1x128xf32>
    %172 = arith.mulf %165, %165 : vector<8x128xf32>
    %cst_76 = arith.constant dense<0.000000e+00> : vector<128xf32>
    %173 = vector.multi_reduction <add>, %172, %cst_76 [0] : vector<8x128xf32> to vector<128xf32>
    %174 = vector.shape_cast %173 : vector<128xf32> to vector<1x128xf32>
    %cst_77 = arith.constant 0.000000e+00 : f32
    %175 = vector.broadcast %cst_77 : f32 to vector<1x128xf32>
    %176 = arith.addf %175, %174 : vector<1x128xf32>
    %cst_78 = arith.constant 1.250000e-01 : f32
    %177 = vector.broadcast %cst_78 : f32 to vector<1x128xf32>
    %178 = arith.mulf %171, %177 : vector<1x128xf32>
    %cst_79 = arith.constant 1.250000e-01 : f32
    %179 = vector.broadcast %cst_79 : f32 to vector<1x128xf32>
    %180 = arith.mulf %176, %179 : vector<1x128xf32>
    %181 = arith.mulf %178, %178 : vector<1x128xf32>
    %182 = arith.subf %180, %181 : vector<1x128xf32>
    %cst_80 = arith.constant 0.000000e+00 : f32
    %183 = vector.broadcast %cst_80 : f32 to vector<1x128xf32>
    %184 = arith.maximumf %182, %183 : vector<1x128xf32>
    %cst_81 = arith.constant 9.99999974E-6 : f32
    %185 = vector.broadcast %cst_81 : f32 to vector<1x128xf32>
    %186 = arith.addf %184, %185 : vector<1x128xf32>
    %187 = math.rsqrt %186 : vector<1x128xf32>
    %188 = arith.mulf %187, %166 : vector<1x128xf32>
    %189 = arith.mulf %178, %188 : vector<1x128xf32>
    %190 = arith.subf %167, %189 : vector<1x128xf32>
    %191 = vector.broadcast %188 : vector<1x128xf32> to vector<8x128xf32>
    %192 = arith.mulf %165, %191 : vector<8x128xf32>
    %193 = vector.broadcast %190 : vector<1x128xf32> to vector<8x128xf32>
    %194 = arith.addf %192, %193 : vector<8x128xf32>
    %195 = arith.addf %160, %194 : vector<8x128xf32>
    %196 = arith.negf %195 : vector<8x128xf32>
    %197 = math.exp %196 : vector<8x128xf32>
    %cst_82 = arith.constant 1.000000e+00 : f32
    %198 = vector.broadcast %cst_82 : f32 to vector<8x128xf32>
    %199 = arith.addf %198, %197 : vector<8x128xf32>
    %200 = arith.divf %198, %199 : vector<8x128xf32>
    %201 = arith.mulf %195, %200 : vector<8x128xf32>
    %202 = arith.truncf %201 : vector<8x128xf32> to vector<8x128xbf16>
    %c0_83 = arith.constant 0 : index
    %c0_84 = arith.constant 0 : index
    %203 = vector.load %arg19[%c0_83, %c0_84] : memref<8x128xbf16, #tpu.memory_space<vmem>>, vector<8x128xbf16>
    tpu.vector_store %arg19[%c0_83, %c0_84], %202 {strides = array<i32>} : memref<8x128xbf16, #tpu.memory_space<vmem>>, vector<8x128xbf16>,
    return
  }
  func.func @transform_0(%arg0: i32) -> (i32, i32) {
    %c0_i32 = arith.constant 0 : i32
    %c0_i32_0 = arith.constant 0 : i32
    %c0_i32_1 = arith.constant 0 : i32
    return %c0_i32, %c0_i32_0 : i32, i32
  }
  func.func @transform_1(%arg0: i32) -> (i32, i32) {
    %c0_i32 = arith.constant 0 : i32
    %c0_i32_0 = arith.constant 0 : i32
    %c0_i32_1 = arith.constant 0 : i32
    return %c0_i32, %c0_i32_0 : i32, i32
  }
  func.func @transform_2(%arg0: i32) -> (i32, i32) {
    %c0_i32 = arith.constant 0 : i32
    %c0_i32_0 = arith.constant 0 : i32
    %c0_i32_1 = arith.constant 0 : i32
    return %c0_i32, %c0_i32_0 : i32, i32
  }
  func.func @transform_3(%arg0: i32) -> (i32, i32) {
    %c0_i32 = arith.constant 0 : i32
    %c0_i32_0 = arith.constant 0 : i32
    %c0_i32_1 = arith.constant 0 : i32
    return %c0_i32, %c0_i32_0 : i32, i32
  }
  func.func @transform_4(%arg0: i32) -> (i32, i32) {
    %c0_i32 = arith.constant 0 : i32
    %c0_i32_0 = arith.constant 0 : i32
    %c0_i32_1 = arith.constant 0 : i32
    return %c0_i32, %c0_i32_0 : i32, i32
  }
  func.func @transform_5(%arg0: i32) -> (i32, i32) {
    %c0_i32 = arith.constant 0 : i32
    %c0_i32_0 = arith.constant 0 : i32
    %c0_i32_1 = arith.constant 0 : i32
    return %c0_i32, %c0_i32_0 : i32, i32
  }
  func.func @transform_6(%arg0: i32) -> (i32, i32) {
    %c0_i32 = arith.constant 0 : i32
    %c0_i32_0 = arith.constant 0 : i32
    %c0_i32_1 = arith.constant 0 : i32
    return %c0_i32, %c0_i32_0 : i32, i32
  }
  func.func @transform_7(%arg0: i32) -> (i32, i32) {
    %c0_i32 = arith.constant 0 : i32
    %c0_i32_0 = arith.constant 0 : i32
    %c0_i32_1 = arith.constant 0 : i32
    return %c0_i32, %c0_i32_0 : i32, i32
  }
  func.func @transform_8(%arg0: i32) -> (i32, i32) {
    %c0_i32 = arith.constant 0 : i32
    %c0_i32_0 = arith.constant 0 : i32
    %c0_i32_1 = arith.constant 0 : i32
    return %c0_i32, %c0_i32_0 : i32, i32
  }
  func.func @transform_9(%arg0: i32) -> (i32, i32) {
    %c0_i32 = arith.constant 0 : i32
    %c0_i32_0 = arith.constant 0 : i32
    %c0_i32_1 = arith.constant 0 : i32
    return %c0_i32, %c0_i32_0 : i32, i32
  }
  func.func @transform_10(%arg0: i32) -> (i32, i32) {
    %c0_i32 = arith.constant 0 : i32
    %c0_i32_0 = arith.constant 0 : i32
    %c0_i32_1 = arith.constant 0 : i32
    return %c0_i32, %c0_i32_0 : i32, i32
  }
  func.func @transform_11(%arg0: i32) -> (i32, i32) {
    %c0_i32 = arith.constant 0 : i32
    %c0_i32_0 = arith.constant 0 : i32
    %c0_i32_1 = arith.constant 0 : i32
    return %c0_i32, %c0_i32_0 : i32, i32
  }
  func.func @transform_12(%arg0: i32) -> (i32, i32) {
    %c0_i32 = arith.constant 0 : i32
    %c0_i32_0 = arith.constant 0 : i32
    %c0_i32_1 = arith.constant 0 : i32
    return %c0_i32, %c0_i32_0 : i32, i32
  }
  func.func @transform_13(%arg0: i32) -> (i32, i32) {
    %c0_i32 = arith.constant 0 : i32
    %c0_i32_0 = arith.constant 0 : i32
    %c0_i32_1 = arith.constant 0 : i32
    return %c0_i32, %c0_i32_0 : i32, i32
  }
  func.func @transform_14(%arg0: i32) -> (i32, i32) {
    %c0_i32 = arith.constant 0 : i32
    %c0_i32_0 = arith.constant 0 : i32
    %c0_i32_1 = arith.constant 0 : i32
    return %c0_i32, %c0_i32_0 : i32, i32
  }
  func.func @transform_15(%arg0: i32) -> (i32, i32) {
    %c0_i32 = arith.constant 0 : i32
    %c0_i32_0 = arith.constant 0 : i32
    %c0_i32_1 = arith.constant 0 : i32
    return %c0_i32, %c0_i32_0 : i32, i32
  }
  func.func @transform_16(%arg0: i32) -> (i32, i32) {
    %c0_i32 = arith.constant 0 : i32
    %c0_i32_0 = arith.constant 0 : i32
    %c0_i32_1 = arith.constant 0 : i32
    return %c0_i32, %c0_i32_0 : i32, i32
  }
  func.func @transform_17(%arg0: i32) -> (i32, i32) {
    %c0_i32 = arith.constant 0 : i32
    %c0_i32_0 = arith.constant 0 : i32
    %c0_i32_1 = arith.constant 0 : i32
    return %c0_i32, %c0_i32_0 : i32, i32
  }
  func.func @transform_18(%arg0: i32) -> (i32, i32) {
    %c0_i32 = arith.constant 0 : i32
    %c0_i32_0 = arith.constant 0 : i32
    %c0_i32_1 = arith.constant 0 : i32
    return %c0_i32, %c0_i32_0 : i32, i32
  }
}

module attributes {stable_mosaic.version = 11 : i64} {
  func.func @head_kernel(%arg0: i32, %arg1: memref<2x4x128xbf16, #tpu.memory_space<vmem>>, %arg2: memref<128x128xbf16, #tpu.memory_space<vmem>>, %arg3: memref<1x128xf32, #tpu.memory_space<vmem>>, %arg4: memref<2x128xf32, #tpu.memory_space<vmem>>) attributes {dimension_semantics = [#tpu.dimension_semantics<arbitrary>], iteration_bounds = array<i64: 1>, scalar_prefetch = 0 : i64, scratch_operands = 0 : i64, tpu.core_type = #tpu.core_type<tc>, window_params = [{pipeline_mode = #tpu.pipeline_mode<synchronous>, transform_indices = @transform_0, window_bounds = array<i64: 2, 4, 128>}, {pipeline_mode = #tpu.pipeline_mode<synchronous>, transform_indices = @transform_1, window_bounds = array<i64: 128, 128>}, {pipeline_mode = #tpu.pipeline_mode<synchronous>, transform_indices = @transform_2, window_bounds = array<i64: 1, 128>}, {pipeline_mode = #tpu.pipeline_mode<synchronous>, transform_indices = @transform_3, window_bounds = array<i64: 2, 128>}]} {
    %c0 = arith.constant 0 : index
    %c0_0 = arith.constant 0 : index
    %c0_1 = arith.constant 0 : index
    %0 = vector.load %arg1[%c0, %c0_0, %c0_1] : memref<2x4x128xbf16, #tpu.memory_space<vmem>>, vector<1x4x128xbf16>
    %1 = vector.shape_cast %0 : vector<1x4x128xbf16> to vector<4x128xbf16>
    %2 = arith.extf %1 : vector<4x128xbf16> to vector<4x128xf32>
    %cst = arith.constant dense<0.000000e+00> : vector<128xf32>
    %3 = vector.multi_reduction <add>, %2, %cst [0] : vector<4x128xf32> to vector<128xf32>
    %4 = vector.shape_cast %3 : vector<128xf32> to vector<1x128xf32>
    %cst_2 = arith.constant 4.000000e+00 : f32
    %5 = vector.broadcast %cst_2 : f32 to vector<1x128xf32>
    %6 = arith.divf %4, %5 : vector<1x128xf32>
    %c1 = arith.constant 1 : index
    %c0_3 = arith.constant 0 : index
    %c0_4 = arith.constant 0 : index
    %7 = vector.load %arg1[%c1, %c0_3, %c0_4] : memref<2x4x128xbf16, #tpu.memory_space<vmem>>, vector<1x4x128xbf16>
    %8 = vector.shape_cast %7 : vector<1x4x128xbf16> to vector<4x128xbf16>
    %9 = arith.extf %8 : vector<4x128xbf16> to vector<4x128xf32>
    %cst_5 = arith.constant dense<0.000000e+00> : vector<128xf32>
    %10 = vector.multi_reduction <add>, %9, %cst_5 [0] : vector<4x128xf32> to vector<128xf32>
    %11 = vector.shape_cast %10 : vector<128xf32> to vector<1x128xf32>
    %cst_6 = arith.constant 4.000000e+00 : f32
    %12 = vector.broadcast %cst_6 : f32 to vector<1x128xf32>
    %13 = arith.divf %11, %12 : vector<1x128xf32>
    %14 = tpu.concatenate %6, %13 in 0 : vector<1x128xf32>, vector<1x128xf32> -> vector<2x128xf32>
    %15 = arith.truncf %14 : vector<2x128xf32> to vector<2x128xbf16>
    %c0_7 = arith.constant 0 : index
    %c0_8 = arith.constant 0 : index
    %16 = vector.load %arg2[%c0_7, %c0_8] : memref<128x128xbf16, #tpu.memory_space<vmem>>, vector<128x128xbf16>
    %cst_9 = arith.constant dense<0.000000e+00> : vector<2x128xf32>
    %17 = tpu.matmul %15, %16, %cst_9 {dimension_numbers = #tpu.dot_dimension_numbers<[1], [0], [0], [1], [0, 0, 1, 1], [], []>} : vector<2x128xbf16>, vector<128x128xbf16>, vector<2x128xf32> -> vector<2x128xf32>
    %c0_10 = arith.constant 0 : index
    %c0_11 = arith.constant 0 : index
    %18 = vector.load %arg3[%c0_10, %c0_11] : memref<1x128xf32, #tpu.memory_space<vmem>>, vector<1x128xf32>
    %19 = vector.broadcast %18 : vector<1x128xf32> to vector<2x128xf32>
    %20 = arith.addf %17, %19 : vector<2x128xf32>
    %cst_12 = arith.constant dense<0xFF800000> : vector<2xf32>
    %21 = vector.multi_reduction <maximumf>, %20, %cst_12 [1] : vector<2x128xf32> to vector<2xf32>
    %22 = vector.shape_cast %21 : vector<2xf32> to vector<2x1xf32>
    %23 = vector.broadcast %22 : vector<2x1xf32> to vector<2x128xf32>
    %24 = arith.subf %20, %23 : vector<2x128xf32>
    %25 = math.exp %24 : vector<2x128xf32>
    %cst_13 = arith.constant dense<0.000000e+00> : vector<2xf32>
    %26 = vector.multi_reduction <add>, %25, %cst_13 [1] : vector<2x128xf32> to vector<2xf32>
    %27 = vector.shape_cast %26 : vector<2xf32> to vector<2x1xf32>
    %28 = tpu.reciprocal %27 {approx = true} : vector<2x1xf32> -> vector<2x1xf32>
    %29 = vector.broadcast %28 : vector<2x1xf32> to vector<2x128xf32>
    %30 = arith.mulf %25, %29 : vector<2x128xf32>
    %c0_14 = arith.constant 0 : index
    %c0_15 = arith.constant 0 : index
    %31 = vector.load %arg4[%c0_14, %c0_15] : memref<2x128xf32, #tpu.memory_space<vmem>>, vector<2x128xf32>
    tpu.vector_store %arg4[%c0_14, %c0_15], %30 {strides = array<i32>} : memref<2x128xf32, #tpu.memory_space<vmem>>, vector<2x128xf32>,
    return
  }
  func.func @transform_0(%arg0: i32) -> (i32, i32, i32) {
    %c0_i32 = arith.constant 0 : i32
    %c0_i32_0 = arith.constant 0 : i32
    %c0_i32_1 = arith.constant 0 : i32
    %c0_i32_2 = arith.constant 0 : i32
    return %c0_i32, %c0_i32_0, %c0_i32_1 : i32, i32, i32
  }
  func.func @transform_1(%arg0: i32) -> (i32, i32) {
    %c0_i32 = arith.constant 0 : i32
    %c0_i32_0 = arith.constant 0 : i32
    %c0_i32_1 = arith.constant 0 : i32
    return %c0_i32, %c0_i32_0 : i32, i32
  }
  func.func @transform_2(%arg0: i32) -> (i32, i32) {
    %c0_i32 = arith.constant 0 : i32
    %c0_i32_0 = arith.constant 0 : i32
    %c0_i32_1 = arith.constant 0 : i32
    return %c0_i32, %c0_i32_0 : i32, i32
  }
  func.func @transform_3(%arg0: i32) -> (i32, i32) {
    %c0_i32 = arith.constant 0 : i32
    %c0_i32_0 = arith.constant 0 : i32
    %c0_i32_1 = arith.constant 0 : i32
    return %c0_i32, %c0_i32_0 : i32, i32
  }
}

</mosaic_0001>

<llo_original>
// kernel: resnext_forward.5
$region0: #{resnext_forward.5}
  #allocation0 [shape = 'u32[]', space=smem, size = 0x4, offset = 0x4, fixed_abs, tag = 'smem constant byte address 0x4 - core index']
  #allocation1 [shape = 'u32[144,128]{1,0:T(1,128)}', space=vmem, size = 0x12000, scoped, tag = 'internal scratch']
  %s0 = inlined_call_operand.vmem [shape: bf16[32,128], index: 0, kind: input, shape index: {}]
  %s1 = inlined_call_operand.vmem [shape: bf16[32,128], index: 1, kind: input, shape index: {}]
  %s2 = inlined_call_operand.vmem [shape: bf16[128,128], index: 2, kind: input, shape index: {}]
  %s3 = inlined_call_operand.vmem [shape: f32[1,128], index: 3, kind: input, shape index: {}]
  %s4 = inlined_call_operand.vmem [shape: f32[1,128], index: 4, kind: input, shape index: {}]
  %s5 = inlined_call_operand.vmem [shape: f32[1,128], index: 5, kind: input, shape index: {}]
  %s6 = inlined_call_operand.vmem [shape: bf16[32,128], index: 6, kind: output, shape index: {}]
  %s7 = sld [smem:[#allocation0]]
  $region34: #{resnext_forward.5} parent=0
    _
  %s9 = ssub.s32 1, %s7
  %s10 = scalar_select 0, %s9, %s7
  // Predicated region
  $region2: #{resnext_forward.5} parent=0 // pred_check
    _
  $region3: #{resnext_forward.5} parent=0 // pred_check_branch
    %12 = sbr.rel (0) target = $region5
  $region4: #{resnext_forward.5} parent=0 // pred_region
    _
  $region5: #{resnext_forward.5} parent=0 // pred_fallthru
    _
  // Predicated region
  $region6: #{resnext_forward.5} parent=0 // pred_check
    _
  $region7: #{resnext_forward.5} parent=0 // pred_check_branch
    %14 = sbr.rel (0) target = $region9
  $region8: #{resnext_forward.5} parent=0 // pred_region
    _
  $region9: #{resnext_forward.5} parent=0 // pred_fallthru
    _
  // Predicated region
  $region10: #{resnext_forward.5} parent=0 // pred_check
    _
  $region11: #{resnext_forward.5} parent=0 // pred_check_branch
    %16 = sbr.rel (0) target = $region13
  $region12: #{resnext_forward.5} parent=0 // pred_region
    _
  $region13: #{resnext_forward.5} parent=0 // pred_fallthru
    _
  // Predicated region
  $region14: #{resnext_forward.5} parent=0 // pred_check
    _
  $region15: #{resnext_forward.5} parent=0 // pred_check_branch
    %18 = sbr.rel (0) target = $region17
  $region16: #{resnext_forward.5} parent=0 // pred_region
    _
  $region17: #{resnext_forward.5} parent=0 // pred_fallthru
    _
  // Predicated region
  $region18: #{resnext_forward.5} parent=0 // pred_check
    _
  $region19: #{resnext_forward.5} parent=0 // pred_check_branch
    %20 = sbr.rel (0) target = $region21
  $region20: #{resnext_forward.5} parent=0 // pred_region
    _
  $region21: #{resnext_forward.5} parent=0 // pred_fallthru
    _
  // Predicated region
  $region22: #{resnext_forward.5} parent=0 // pred_check
    _
  $region23: #{resnext_forward.5} parent=0 // pred_check_branch
    %22 = sbr.rel (0) target = $region25
  $region24: #{resnext_forward.5} parent=0 // pred_region
    _
  $region25: #{resnext_forward.5} parent=0 // pred_fallthru
    _
  %v24 = vld [vmem:[%s2] sm:$0xf]
  %v25 = vld [vmem:[%s2 + $0x4] sm:$0xf]
  %v26 = vld [vmem:[%s2 + $0x8] sm:$0xf]
  %v27 = vld [vmem:[%s2 + $0xc] sm:$0xf]
  %v28 = vld [vmem:[%s2 + $0x10] sm:$0xf]
  %v29 = vld [vmem:[%s2 + $0x14] sm:$0xf]
  %v30 = vld [vmem:[%s2 + $0x18] sm:$0xf]
  %v31 = vld [vmem:[%s2 + $0x1c] sm:$0xf]
  %v32 = vld [vmem:[%s2 + $0x20] sm:$0xf]
  %v33 = vld [vmem:[%s2 + $0x24] sm:$0xf]
  %v34 = vld [vmem:[%s2 + $0x28] sm:$0xf]
  %v35 = vld [vmem:[%s2 + $0x2c] sm:$0xf]
  %v36 = vld [vmem:[%s2 + $0x30] sm:$0xf]
  %v37 = vld [vmem:[%s2 + $0x34] sm:$0xf]
  %v38 = vld [vmem:[%s2 + $0x38] sm:$0xf]
  %v39 = vld [vmem:[%s2 + $0x3c] sm:$0xf]
  %v40 = vld [vmem:[%s3] sm:$0x1]
  %v41 = vld [vmem:[%s0] sm:$0xf]
  %v42 = vld [vmem:[%s0 + $0x4] sm:$0xf]
  %v43 = vld [vmem:[%s0 + $0x8] sm:$0xf]
  %v44 = vld [vmem:[%s0 + $0xc] sm:$0xf]
  %v46 = vlaneseq
  %v47 = vshrl.u32 %v46, 7
  %v48 = vsub.s32 0, %v47
  %v49 = vrot.slane %v40, %v48
  %v55 = vunpack.c.l.b16 %v41
  %v56 = vunpack.c.l.b16 %v42
  %v57 = vunpack.c.l.b16 %v43
  %v58 = vunpack.c.l.b16 %v44
  %v59 = vpack.c.b16 %v56, %v55
  %v60 = vpack.c.b16 %v58, %v57
  %v79 = vunpack.c.l.b16 %v24
  %v80 = vunpack.c.l.b16 %v25
  %v81 = vunpack.c.l.b16 %v26
  %v82 = vunpack.c.l.b16 %v27
  %v83 = vunpack.c.l.b16 %v28
  %v84 = vunpack.c.l.b16 %v29
  %v85 = vunpack.c.l.b16 %v30
  %v86 = vunpack.c.l.b16 %v31
  %v87 = vunpack.c.l.b16 %v32
  %v88 = vunpack.c.l.b16 %v33
  %v89 = vunpack.c.l.b16 %v34
  %v90 = vunpack.c.l.b16 %v35
  %v91 = vunpack.c.l.b16 %v36
  %v92 = vunpack.c.l.b16 %v37
  %v93 = vunpack.c.l.b16 %v38
  %v94 = vunpack.c.l.b16 %v39
  %v95 = vpack.c.b16 %v80, %v79
  %v96 = vpack.c.b16 %v82, %v81
  %v97 = vpack.c.b16 %v84, %v83
  %v98 = vpack.c.b16 %v86, %v85
  %v99 = vpack.c.b16 %v88, %v87
  %v100 = vpack.c.b16 %v90, %v89
  %v101 = vpack.c.b16 %v92, %v91
  %v102 = vpack.c.b16 %v94, %v93
  %111 = vmatprep.subr.bf16.mxu0 0
  %112 = vmatpush1.bf16.msra.mxu0 %v95
  %113 = vmatprep.subr.bf16.mxu0 0
  %114 = vmatpush1.bf16.msra.mxu0 %v96
  %115 = vmatprep.subr.bf16.mxu0 0
  %116 = vmatpush1.bf16.msra.mxu0 %v97
  %117 = vmatprep.subr.bf16.mxu0 0
  %118 = vmatpush1.bf16.msra.mxu0 %v98
  %119 = vmatprep.subr.bf16.mxu0 0
  %120 = vmatpush1.bf16.msra.mxu0 %v99
  %121 = vmatprep.subr.bf16.mxu0 0
  %122 = vmatpush1.bf16.msra.mxu0 %v100
  %123 = vmatprep.subr.bf16.mxu0 0
  %124 = vmatpush1.bf16.msra.mxu0 %v101
  %125 = vmatprep.subr.bf16.mxu0 0
  %126 = vmatpush1.bf16.msra.mxu0 %v102
  %127 = vmatprep.subr.bf16.mxu0 0
  %128 = vmatpush1.bf16.msra.mxu0 0
  %129 = vmatprep.subr.bf16.mxu0 0
  %130 = vmatpush1.bf16.msra.mxu0 0
  %131 = vmatprep.subr.bf16.mxu0 0
  %132 = vmatpush1.bf16.msra.mxu0 0
  %133 = vmatprep.subr.bf16.mxu0 0
  %134 = vmatpush1.bf16.msra.mxu0 0
  %135 = vmatprep.subr.bf16.mxu0 0
  %136 = vmatpush1.bf16.msra.mxu0 0
  %137 = vmatprep.subr.bf16.mxu0 0
  %138 = vmatpush1.bf16.msra.mxu0 0
  %139 = vmatprep.subr.bf16.mxu0 0
  %140 = vmatpush1.bf16.msra.mxu0 0
  %141 = vmatprep.subr.bf16.mxu0 0
  %142 = vmatpush1.bf16.msra.mxu0 0
  %143 = vmatprep.mubr.bf16.mxu0 0
  %144 = vmatmul.mubr.bf16.gmra.mrb[0].mxu0 %v59
  %v145 = vpop.f32.mrb[0].mxu0
  %v146 = vadd.f32 %v49, %v145
  %v147 = vpop.f32.mrb[0].mxu0
  %v148 = vpop.f32.mrb[0].mxu0
  %v149 = vadd.f32 %v49, %v148
  %v150 = vpop.f32.mrb[0].mxu0
  %151 = vmatprep.mubr.bf16.mxu0 0
  %152 = vmatmul.mubr.bf16.gmra.mrb[0].mxu0 %v60
  %v153 = vpop.f32.mrb[0].mxu0
  %v154 = vadd.f32 %v49, %v153
  %v155 = vpop.f32.mrb[0].mxu0
  %v156 = vpop.f32.mrb[0].mxu0
  %v157 = vadd.f32 %v49, %v156
  %v158 = vpop.f32.mrb[0].mxu0
  %159 = vdwg.mxu0
  %v160 = vld [vmem:[%s1] sm:$0xf]
  %v161 = vld [vmem:[%s1 + $0x4] sm:$0xf]
  %v162 = vld [vmem:[%s1 + $0x8] sm:$0xf]
  %v163 = vld [vmem:[%s1 + $0xc] sm:$0xf]
  %v168 = vunpack.c.l.b16 %v160
  %v169 = vunpack.c.l.b16 %v161
  %v170 = vunpack.c.l.b16 %v162
  %v171 = vunpack.c.l.b16 %v163
  %v172 = vpack.c.b16 %v169, %v168
  %v173 = vpack.c.b16 %v171, %v170
  %176 = vmatprep.subr.bf16.mxu0 0
  %177 = vmatpush1.bf16.msra.mxu0 %v95
  %178 = vmatprep.subr.bf16.mxu0 0
  %179 = vmatpush1.bf16.msra.mxu0 %v96
  %180 = vmatprep.subr.bf16.mxu0 0
  %181 = vmatpush1.bf16.msra.mxu0 %v97
  %182 = vmatprep.subr.bf16.mxu0 0
  %183 = vmatpush1.bf16.msra.mxu0 %v98
  %184 = vmatprep.subr.bf16.mxu0 0
  %185 = vmatpush1.bf16.msra.mxu0 %v99
  %186 = vmatprep.subr.bf16.mxu0 0
  %187 = vmatpush1.bf16.msra.mxu0 %v100
  %188 = vmatprep.subr.bf16.mxu0 0
  %189 = vmatpush1.bf16.msra.mxu0 %v101
  %190 = vmatprep.subr.bf16.mxu0 0
  %191 = vmatpush1.bf16.msra.mxu0 %v102
  %192 = vmatprep.subr.bf16.mxu0 0
  %193 = vmatpush1.bf16.msra.mxu0 0
  %194 = vmatprep.subr.bf16.mxu0 0
  %195 = vmatpush1.bf16.msra.mxu0 0
  %196 = vmatprep.subr.bf16.mxu0 0
  %197 = vmatpush1.bf16.msra.mxu0 0
  %198 = vmatprep.subr.bf16.mxu0 0
  %199 = vmatpush1.bf16.msra.mxu0 0
  %200 = vmatprep.subr.bf16.mxu0 0
  %201 = vmatpush1.bf16.msra.mxu0 0
  %202 = vmatprep.subr.bf16.mxu0 0
  %203 = vmatpush1.bf16.msra.mxu0 0
  %204 = vmatprep.subr.bf16.mxu0 0
  %205 = vmatpush1.bf16.msra.mxu0 0
  %206 = vmatprep.subr.bf16.mxu0 0
  %207 = vmatpush1.bf16.msra.mxu0 0
  %208 = vmatprep.mubr.bf16.mxu0 0
  %209 = vmatmul.mubr.bf16.gmra.mrb[0].mxu0 %v172
  %v210 = vpop.f32.mrb[0].mxu0
  %v211 = vadd.f32 %v49, %v210
  %v212 = vpop.f32.mrb[0].mxu0
  %v213 = vpop.f32.mrb[0].mxu0
  %v214 = vadd.f32 %v49, %v213
  %v215 = vpop.f32.mrb[0].mxu0
  %216 = vmatprep.mubr.bf16.mxu0 0
  %217 = vmatmul.mubr.bf16.gmra.mrb[0].mxu0 %v173
  %v218 = vpop.f32.mrb[0].mxu0
  %v219 = vadd.f32 %v49, %v218
  %v220 = vpop.f32.mrb[0].mxu0
  %v221 = vpop.f32.mrb[0].mxu0
  %v222 = vadd.f32 %v49, %v221
  %v223 = vpop.f32.mrb[0].mxu0
  %224 = vdwg.mxu0
  %v225 = vld [vmem:[%s4] sm:$0x1]
  %v226 = vld [vmem:[%s5] sm:$0x1]
  %v227 = vadd.f32 %v146, %v149
  %v228 = vadd.f32 %v227, %v154
  %v229 = vadd.f32 %v228, %v157
  %v230 = vrot.slane %v229, 4
  %v231 = vadd.f32 %v229, %v230
  %v232 = vrot.slane %v231, 2
  %v233 = vadd.f32 %v231, %v232
  %v234 = vrot.slane %v233, 1
  %v235 = vadd.f32 %v233, %v234
  %v236 = vadd.f32 %v235, 0.0
  %v237 = vadd.f32 %v211, %v214
  %v238 = vadd.f32 %v237, %v219
  %v239 = vadd.f32 %v238, %v222
  %v240 = vrot.slane %v239, 4
  %v241 = vadd.f32 %v239, %v240
  %v242 = vrot.slane %v241, 2
  %v243 = vadd.f32 %v241, %v242
  %v244 = vrot.slane %v243, 1
  %v245 = vadd.f32 %v243, %v244
  %v246 = vadd.f32 %v236, %v245
  %v247 = vmul.f32 %v146, %v146
  %v248 = vmul.f32 %v149, %v149
  %v249 = vmul.f32 %v154, %v154
  %v250 = vmul.f32 %v157, %v157
  %v251 = vadd.f32 %v247, %v248
  %v252 = vadd.f32 %v251, %v249
  %v253 = vadd.f32 %v252, %v250
  %v254 = vrot.slane %v253, 4
  %v255 = vadd.f32 %v253, %v254
  %v256 = vrot.slane %v255, 2
  %v257 = vadd.f32 %v255, %v256
  %v258 = vrot.slane %v257, 1
  %v259 = vadd.f32 %v257, %v258
  %v260 = vadd.f32 %v259, 0.0
  %v261 = vmul.f32 %v211, %v211
  %v262 = vmul.f32 %v214, %v214
  %v263 = vmul.f32 %v219, %v219
  %v264 = vmul.f32 %v222, %v222
  %v265 = vadd.f32 %v261, %v262
  %v266 = vadd.f32 %v265, %v263
  %v267 = vadd.f32 %v266, %v264
  %v268 = vrot.slane %v267, 4
  %v269 = vadd.f32 %v267, %v268
  %v270 = vrot.slane %v269, 2
  %v271 = vadd.f32 %v269, %v270
  %v272 = vrot.slane %v271, 1
  %v273 = vadd.f32 %v271, %v272
  %v274 = vadd.f32 %v260, %v273
  %v275 = vmul.f32 %v246, 0.015625
  %v276 = vmul.f32 %v274, 0.015625
  %v277 = vmul.f32 %v275, %v275
  %v278 = vsub.f32 %v276, %v277
  %v279 = vmax.f32 %v278, 0.0
  %v280 = vadd.f32 %v279, 1e-05
  %v281 = vrsqrt.pop %v280
  %v282 = vmul.f32 %v281, %v225
  %v283 = vmul.f32 %v275, %v282
  %v284 = vsub.f32 %v226, %v283
  %v285 = vlaneseq
  %v286 = vshrl.u32 %v285, 7
  %v287 = vsub.s32 0, %v286
  %v288 = vrot.slane %v282, %v287
  %v289 = vmul.f32 %v146, %v288
  %v290 = vmul.f32 %v149, %v288
  %v291 = vmul.f32 %v154, %v288
  %v292 = vmul.f32 %v157, %v288
  %v294 = vlaneseq
  %v295 = vshrl.u32 %v294, 7
  %v296 = vsub.s32 0, %v295
  %v297 = vrot.slane %v284, %v296
  %v299 = vadd.f32 %v289, %v297
  %v300 = vadd.f32 %v290, %v297
  %v301 = vadd.f32 %v291, %v297
  %v302 = vadd.f32 %v292, %v297
  %v303 = vxor.u32 %v299, 2147483648
  %v304 = vxor.u32 %v300, 2147483648
  %v305 = vxor.u32 %v301, 2147483648
  %v306 = vxor.u32 %v302, 2147483648
  %v307 = vmul.f32 %v303, 1.442695
  %v308 = vpow.pop %v307
  %v309 = vmul.f32 %v304, 1.442695
  %v310 = vpow.pop %v309
  %v311 = vmul.f32 %v305, 1.442695
  %v312 = vpow.pop %v311
  %v313 = vmul.f32 %v306, 1.442695
  %v314 = vpow.pop %v313
  %v315 = vadd.f32 %v308, 1.0
  %v316 = vadd.f32 %v310, 1.0
  %v317 = vadd.f32 %v312, 1.0
  %v318 = vadd.f32 %v314, 1.0
  %v319 = vrcp.pop %v315
  %v320 = vmul.f32 1.0, %v319
  %v321 = vrcp.pop %v316
  %v322 = vmul.f32 1.0, %v321
  %v323 = vrcp.pop %v317
  %v324 = vmul.f32 1.0, %v323
  %v325 = vrcp.pop %v318
  %v326 = vmul.f32 1.0, %v325
  %v327 = vmul.f32 %v299, %v320
  %v328 = vmul.f32 %v300, %v322
  %v329 = vmul.f32 %v301, %v324
  %v330 = vmul.f32 %v302, %v326
  %v331 = vmul.f32 %v211, %v288
  %v332 = vmul.f32 %v214, %v288
  %v333 = vmul.f32 %v219, %v288
  %v334 = vmul.f32 %v222, %v288
  %v335 = vadd.f32 %v331, %v297
  %v336 = vadd.f32 %v332, %v297
  %v337 = vadd.f32 %v333, %v297
  %v338 = vadd.f32 %v334, %v297
  %v339 = vxor.u32 %v335, 2147483648
  %v340 = vxor.u32 %v336, 2147483648
  %v341 = vxor.u32 %v337, 2147483648
  %v342 = vxor.u32 %v338, 2147483648
  %v343 = vmul.f32 %v339, 1.442695
  %v344 = vpow.pop %v343
  %v345 = vmul.f32 %v340, 1.442695
  %v346 = vpow.pop %v345
  %v347 = vmul.f32 %v341, 1.442695
  %v348 = vpow.pop %v347
  %v349 = vmul.f32 %v342, 1.442695
  %v350 = vpow.pop %v349
  %v351 = vadd.f32 %v344, 1.0
  %v352 = vadd.f32 %v346, 1.0
  %v353 = vadd.f32 %v348, 1.0
  %v354 = vadd.f32 %v350, 1.0
  %v355 = vrcp.pop %v351
  %v356 = vmul.f32 1.0, %v355
  %v357 = vrcp.pop %v352
  %v358 = vmul.f32 1.0, %v357
  %v359 = vrcp.pop %v353
  %v360 = vmul.f32 1.0, %v359
  %v361 = vrcp.pop %v354
  %v362 = vmul.f32 1.0, %v361
  %v363 = vmul.f32 %v335, %v356
  %v364 = vmul.f32 %v336, %v358
  %v365 = vmul.f32 %v337, %v360
  %v366 = vmul.f32 %v338, %v362
  %v367 = vrot.slane %v363, 7
  %v368 = vrot.slane %v364, 7
  %v369 = vrot.slane %v365, 7
  %v370 = vrot.slane %v366, 7
  %v371 = vlaneseq
  %v372 = vshrl.u32 %v371, 7
  %vm373 = vcmp.lt.s32.totalorder %v372, 1
  %v374 = vsel %vm373, %v369, %v370
  %v375 = vsel %vm373, %v368, %v369
  %v376 = vsel %vm373, %v367, %v368
  %v377 = vsel %vm373, %v370, %v367
  %v378 = vadd.s32 %v372, 8
  %v379 = vadd.s32 %v372, 16
  %v380 = vadd.s32 %v372, 24
  %vm381 = vcmp.lt.s32.totalorder %v372, 0
  %v382 = vsub.s32 0, %v372
  %v383 = vsel %vm381, %v382, %v372
  %v384 = vshrl.u32 %v383, 4
  %v385 = vand.u32 %v383, 15
  %v386 = vsub.s32 0, %v385
  %v387 = vsel %vm381, %v386, %v385
  %vm388 = vcmp.lt.s32.totalorder %v378, 0
  %v389 = vsub.s32 0, %v378
  %v390 = vsel %vm388, %v389, %v378
  %v391 = vshrl.u32 %v390, 4
  %v392 = vand.u32 %v390, 15
  %v393 = vsub.s32 0, %v392
  %v394 = vsel %vm388, %v393, %v392
  %vm395 = vcmp.lt.s32.totalorder %v379, 0
  %v396 = vsub.s32 0, %v379
  %v397 = vsel %vm395, %v396, %v379
  %v398 = vshrl.u32 %v397, 4
  %v399 = vand.u32 %v397, 15
  %v400 = vsub.s32 0, %v399
  %v401 = vsel %vm395, %v400, %v399
  %vm402 = vcmp.lt.s32.totalorder %v380, 0
  %v403 = vsub.s32 0, %v380
  %v404 = vsel %vm402, %v403, %v380
  %v405 = vshrl.u32 %v404, 4
  %v406 = vand.u32 %v404, 15
  %v407 = vsub.s32 0, %v406
  %v408 = vsel %vm402, %v407, %v406
  %vm409 = vcmp.ne.s32.totalorder %v387, 0
  %vm410 = vcmp.ne.s32.totalorder %v394, 0
  %vm411 = vcmp.ne.s32.totalorder %v401, 0
  %vm412 = vcmp.ne.s32.totalorder %v408, 0
  %vm413 = vcmp.lt.s32.totalorder %v387, 0
  %vm414 = vcmp.lt.s32.totalorder %v394, 0
  %vm415 = vcmp.lt.s32.totalorder %v401, 0
  %vm416 = vcmp.lt.s32.totalorder %v408, 0
  %vm417 = vmand %vm413, %vm409
  %vm418 = vmand %vm414, %vm410
  %vm419 = vmand %vm415, %vm411
  %vm420 = vmand %vm416, %vm412
  %v421 = vadd.s32 %v387, 16
  %v422 = vadd.s32 %v394, 16
  %v423 = vadd.s32 %v401, 16
  %v424 = vadd.s32 %v408, 16
  %v425 = vsel %vm417, %v421, %v387
  %v426 = vsel %vm418, %v422, %v394
  %v427 = vsel %vm419, %v423, %v401
  %v428 = vsel %vm420, %v424, %v408
  %vm429 = vcmp.eq.s32.totalorder %v425, 0
  %vm430 = vcmp.eq.s32.totalorder %v426, 0
  %vm431 = vcmp.eq.s32.totalorder %v427, 0
  %vm432 = vcmp.eq.s32.totalorder %v428, 0
  %v433 = vsel %vm429, -1e+30, %v377
  %v434 = vsel %vm430, -1e+30, %v376
  %v435 = vsel %vm431, -1e+30, %v375
  %v436 = vsel %vm432, -1e+30, %v374
  %v437 = vmax.f32 %v327, %v363
  %v438 = vmax.f32 %v328, %v364
  %v439 = vmax.f32 %v329, %v365
  %v440 = vmax.f32 %v330, %v366
  %v441 = vmax.f32 %v437, %v433
  %v442 = vmax.f32 %v438, %v434
  %v443 = vmax.f32 %v439, %v435
  %v444 = vmax.f32 %v440, %v436
  %v445 = vpack.c.bf16 %v442, %v441
  %v446 = vpack.c.bf16 %v444, %v443
  %v449 = vunpack.c.l.b16 %v445
  %v450 = vunpack.c.h.b16 %v445
  %v451 = vunpack.c.l.b16 %v446
  %v452 = vunpack.c.h.b16 %v446
  %v453 = vpack.c.b16 %v449, %v449
  %v454 = vpack.c.b16 %v450, %v450
  %v455 = vpack.c.b16 %v451, %v451
  %v456 = vpack.c.b16 %v452, %v452
  %461 = vst [vmem:[%s6] sm:$0xf] %v453
  %462 = vst [vmem:[%s6 + $0x4] sm:$0xf] %v454
  %463 = vst [vmem:[%s6 + $0x8] sm:$0xf] %v455
  %464 = vst [vmem:[%s6 + $0xc] sm:$0xf] %v456
  // Predicated region
  $region26: #{resnext_forward.5} parent=0 // pred_check
    _
  $region27: #{resnext_forward.5} parent=0 // pred_check_branch
    %466 = sbr.rel (0) target = $region29
  $region28: #{resnext_forward.5} parent=0 // pred_region
    _
  $region29: #{resnext_forward.5} parent=0 // pred_fallthru
    _
  // Predicated region
  $region30: #{resnext_forward.5} parent=0 // pred_check
    _
  $region31: #{resnext_forward.5} parent=0 // pred_check_branch
    %468 = sbr.rel (0) target = $region33
  $region32: #{resnext_forward.5} parent=0 // pred_region
    _
  $region33: #{resnext_forward.5} parent=0 // pred_fallthru
    _

// kernel: resnext_forward.7
$region0: #{resnext_forward.7}
  #allocation0 [shape = 'u32[]', space=smem, size = 0x4, offset = 0x4, fixed_abs, tag = 'smem constant byte address 0x4 - core index']
  #allocation1 [shape = 'u32[144,128]{1,0:T(1,128)}', space=vmem, size = 0x12000, scoped, tag = 'internal scratch']
  %s0 = inlined_call_operand.vmem [shape: bf16[16,128], index: 0, kind: input, shape index: {}]
  %s1 = inlined_call_operand.vmem [shape: bf16[128,128], index: 1, kind: input, shape index: {}]
  %s2 = inlined_call_operand.vmem [shape: f32[1,128], index: 2, kind: input, shape index: {}]
  %s3 = inlined_call_operand.vmem [shape: f32[1,128], index: 3, kind: input, shape index: {}]
  %s4 = inlined_call_operand.vmem [shape: f32[1,128], index: 4, kind: input, shape index: {}]
  %s5 = inlined_call_operand.vmem [shape: bf16[384,128], index: 5, kind: input, shape index: {}]
  %s6 = inlined_call_operand.vmem [shape: f32[1,128], index: 6, kind: input, shape index: {}]
  %s7 = inlined_call_operand.vmem [shape: f32[1,128], index: 7, kind: input, shape index: {}]
  %s8 = inlined_call_operand.vmem [shape: f32[1,128], index: 8, kind: input, shape index: {}]
  %s9 = inlined_call_operand.vmem [shape: bf16[128,128], index: 9, kind: input, shape index: {}]
  %s10 = inlined_call_operand.vmem [shape: f32[1,128], index: 10, kind: input, shape index: {}]
  %s11 = inlined_call_operand.vmem [shape: f32[1,128], index: 11, kind: input, shape index: {}]
  %s12 = inlined_call_operand.vmem [shape: f32[1,128], index: 12, kind: input, shape index: {}]
  %s13 = inlined_call_operand.vmem [shape: bf16[16,128], index: 13, kind: output, shape index: {}]
  %s14 = sld [smem:[#allocation0]]
  $region62: #{resnext_forward.7} parent=0
    _
  %s16 = ssub.s32 1, %s14
  %s17 = scalar_select 0, %s16, %s14
  // Predicated region
  $region2: #{resnext_forward.7} parent=0 // pred_check
    _
  $region3: #{resnext_forward.7} parent=0 // pred_check_branch
    %19 = sbr.rel (0) target = $region5
  $region4: #{resnext_forward.7} parent=0 // pred_region
    _
  $region5: #{resnext_forward.7} parent=0 // pred_fallthru
    _
  // Predicated region
  $region6: #{resnext_forward.7} parent=0 // pred_check
    _
  $region7: #{resnext_forward.7} parent=0 // pred_check_branch
    %21 = sbr.rel (0) target = $region9
  $region8: #{resnext_forward.7} parent=0 // pred_region
    _
  $region9: #{resnext_forward.7} parent=0 // pred_fallthru
    _
  // Predicated region
  $region10: #{resnext_forward.7} parent=0 // pred_check
    _
  $region11: #{resnext_forward.7} parent=0 // pred_check_branch
    %23 = sbr.rel (0) target = $region13
  $region12: #{resnext_forward.7} parent=0 // pred_region
    _
  $region13: #{resnext_forward.7} parent=0 // pred_fallthru
    _
  // Predicated region
  $region14: #{resnext_forward.7} parent=0 // pred_check
    _
  $region15: #{resnext_forward.7} parent=0 // pred_check_branch
    %25 = sbr.rel (0) target = $region17
  $region16: #{resnext_forward.7} parent=0 // pred_region
    _
  $region17: #{resnext_forward.7} parent=0 // pred_fallthru
    _
  // Predicated region
  $region18: #{resnext_forward.7} parent=0 // pred_check
    _
  $region19: #{resnext_forward.7} parent=0 // pred_check_branch
    %27 = sbr.rel (0) target = $region21
  $region20: #{resnext_forward.7} parent=0 // pred_region
    _
  $region21: #{resnext_forward.7} parent=0 // pred_fallthru
    _
  // Predicated region
  $region22: #{resnext_forward.7} parent=0 // pred_check
    _
  $region23: #{resnext_forward.7} parent=0 // pred_check_branch
    %29 = sbr.rel (0) target = $region25
  $region24: #{resnext_forward.7} parent=0 // pred_region
    _
  $region25: #{resnext_forward.7} parent=0 // pred_fallthru
    _
  // Predicated region
  $region26: #{resnext_forward.7} parent=0 // pred_check
    _
  $region27: #{resnext_forward.7} parent=0 // pred_check_branch
    %31 = sbr.rel (0) target = $region29
  $region28: #{resnext_forward.7} parent=0 // pred_region
    _
  $region29: #{resnext_forward.7} parent=0 // pred_fallthru
    _
  // Predicated region
  $region30: #{resnext_forward.7} parent=0 // pred_check
    _
  $region31: #{resnext_forward.7} parent=0 // pred_check_branch
    %33 = sbr.rel (0) target = $region33
  $region32: #{resnext_forward.7} parent=0 // pred_region
    _
  $region33: #{resnext_forward.7} parent=0 // pred_fallthru
    _
  // Predicated region
  $region34: #{resnext_forward.7} parent=0 // pred_check
    _
  $region35: #{resnext_forward.7} parent=0 // pred_check_branch
    %35 = sbr.rel (0) target = $region37
  $region36: #{resnext_forward.7} parent=0 // pred_region
    _
  $region37: #{resnext_forward.7} parent=0 // pred_fallthru
    _
  // Predicated region
  $region38: #{resnext_forward.7} parent=0 // pred_check
    _
  $region39: #{resnext_forward.7} parent=0 // pred_check_branch
    %37 = sbr.rel (0) target = $region41
  $region40: #{resnext_forward.7} parent=0 // pred_region
    _
  $region41: #{resnext_forward.7} parent=0 // pred_fallthru
    _
  // Predicated region
  $region42: #{resnext_forward.7} parent=0 // pred_check
    _
  $region43: #{resnext_forward.7} parent=0 // pred_check_branch
    %39 = sbr.rel (0) target = $region45
  $region44: #{resnext_forward.7} parent=0 // pred_region
    _
  $region45: #{resnext_forward.7} parent=0 // pred_fallthru
    _
  // Predicated region
  $region46: #{resnext_forward.7} parent=0 // pred_check
    _
  $region47: #{resnext_forward.7} parent=0 // pred_check_branch
    %41 = sbr.rel (0) target = $region49
  $region48: #{resnext_forward.7} parent=0 // pred_region
    _
  $region49: #{resnext_forward.7} parent=0 // pred_fallthru
    _
  // Predicated region
  $region50: #{resnext_forward.7} parent=0 // pred_check
    _
  $region51: #{resnext_forward.7} parent=0 // pred_check_branch
    %43 = sbr.rel (0) target = $region53
  $region52: #{resnext_forward.7} parent=0 // pred_region
    _
  $region53: #{resnext_forward.7} parent=0 // pred_fallthru
    _
  %v45 = vld [vmem:[%s0] sm:$0xf]
  %v46 = vld [vmem:[%s0 + $0x4] sm:$0xf]
  %v47 = vld [vmem:[%s1] sm:$0xf]
  %v48 = vld [vmem:[%s1 + $0x4] sm:$0xf]
  %v49 = vld [vmem:[%s1 + $0x8] sm:$0xf]
  %v50 = vld [vmem:[%s1 + $0xc] sm:$0xf]
  %v51 = vld [vmem:[%s1 + $0x10] sm:$0xf]
  %v52 = vld [vmem:[%s1 + $0x14] sm:$0xf]
  %v53 = vld [vmem:[%s1 + $0x18] sm:$0xf]
  %v54 = vld [vmem:[%s1 + $0x1c] sm:$0xf]
  %v55 = vld [vmem:[%s1 + $0x20] sm:$0xf]
  %v56 = vld [vmem:[%s1 + $0x24] sm:$0xf]
  %v57 = vld [vmem:[%s1 + $0x28] sm:$0xf]
  %v58 = vld [vmem:[%s1 + $0x2c] sm:$0xf]
  %v59 = vld [vmem:[%s1 + $0x30] sm:$0xf]
  %v60 = vld [vmem:[%s1 + $0x34] sm:$0xf]
  %v61 = vld [vmem:[%s1 + $0x38] sm:$0xf]
  %v62 = vld [vmem:[%s1 + $0x3c] sm:$0xf]
  %v63 = vld [vmem:[%s2] sm:$0x1]
  %v65 = vlaneseq
  %v66 = vshrl.u32 %v65, 7
  %v67 = vsub.s32 0, %v66
  %v68 = vrot.slane %v63, %v67
  %v72 = vunpack.c.l.b16 %v45
  %v73 = vunpack.c.l.b16 %v46
  %v74 = vpack.c.b16 %v73, %v72
  %v92 = vunpack.c.l.b16 %v47
  %v93 = vunpack.c.l.b16 %v48
  %v94 = vunpack.c.l.b16 %v49
  %v95 = vunpack.c.l.b16 %v50
  %v96 = vunpack.c.l.b16 %v51
  %v97 = vunpack.c.l.b16 %v52
  %v98 = vunpack.c.l.b16 %v53
  %v99 = vunpack.c.l.b16 %v54
  %v100 = vunpack.c.l.b16 %v55
  %v101 = vunpack.c.l.b16 %v56
  %v102 = vunpack.c.l.b16 %v57
  %v103 = vunpack.c.l.b16 %v58
  %v104 = vunpack.c.l.b16 %v59
  %v105 = vunpack.c.l.b16 %v60
  %v106 = vunpack.c.l.b16 %v61
  %v107 = vunpack.c.l.b16 %v62
  %v108 = vpack.c.b16 %v93, %v92
  %v109 = vpack.c.b16 %v95, %v94
  %v110 = vpack.c.b16 %v97, %v96
  %v111 = vpack.c.b16 %v99, %v98
  %v112 = vpack.c.b16 %v101, %v100
  %v113 = vpack.c.b16 %v103, %v102
  %v114 = vpack.c.b16 %v105, %v104
  %v115 = vpack.c.b16 %v107, %v106
  %124 = vmatprep.subr.bf16.mxu0 0
  %125 = vmatpush1.bf16.msra.mxu0 %v108
  %126 = vmatprep.subr.bf16.mxu0 0
  %127 = vmatpush1.bf16.msra.mxu0 %v109
  %128 = vmatprep.subr.bf16.mxu0 0
  %129 = vmatpush1.bf16.msra.mxu0 %v110
  %130 = vmatprep.subr.bf16.mxu0 0
  %131 = vmatpush1.bf16.msra.mxu0 %v111
  %132 = vmatprep.subr.bf16.mxu0 0
  %133 = vmatpush1.bf16.msra.mxu0 %v112
  %134 = vmatprep.subr.bf16.mxu0 0
  %135 = vmatpush1.bf16.msra.mxu0 %v113
  %136 = vmatprep.subr.bf16.mxu0 0
  %137 = vmatpush1.bf16.msra.mxu0 %v114
  %138 = vmatprep.subr.bf16.mxu0 0
  %139 = vmatpush1.bf16.msra.mxu0 %v115
  %140 = vmatprep.subr.bf16.mxu0 0
  %141 = vmatpush1.bf16.msra.mxu0 0
  %142 = vmatprep.subr.bf16.mxu0 0
  %143 = vmatpush1.bf16.msra.mxu0 0
  %144 = vmatprep.subr.bf16.mxu0 0
  %145 = vmatpush1.bf16.msra.mxu0 0
  %146 = vmatprep.subr.bf16.mxu0 0
  %147 = vmatpush1.bf16.msra.mxu0 0
  %148 = vmatprep.subr.bf16.mxu0 0
  %149 = vmatpush1.bf16.msra.mxu0 0
  %150 = vmatprep.subr.bf16.mxu0 0
  %151 = vmatpush1.bf16.msra.mxu0 0
  %152 = vmatprep.subr.bf16.mxu0 0
  %153 = vmatpush1.bf16.msra.mxu0 0
  %154 = vmatprep.subr.bf16.mxu0 0
  %155 = vmatpush1.bf16.msra.mxu0 0
  %156 = vmatprep.mubr.bf16.mxu0 0
  %157 = vmatmul.mubr.bf16.gmra.mrb[0].mxu0 %v74
  %v158 = vpop.f32.mrb[0].mxu0
  %v159 = vadd.f32 %v68, %v158
  %v160 = vpop.f32.mrb[0].mxu0
  %v161 = vpop.f32.mrb[0].mxu0
  %v162 = vadd.f32 %v68, %v161
  %v163 = vpop.f32.mrb[0].mxu0
  %164 = vdwg.mxu0
  %v165 = vld [vmem:[%s3] sm:$0x1]
  %v166 = vld [vmem:[%s4] sm:$0x1]
  %v167 = vadd.f32 %v159, %v162
  %v168 = vrot.slane %v167, 4
  %v169 = vadd.f32 %v167, %v168
  %v170 = vrot.slane %v169, 2
  %v171 = vadd.f32 %v169, %v170
  %v172 = vrot.slane %v171, 1
  %v173 = vadd.f32 %v171, %v172
  %v174 = vadd.f32 %v173, 0.0
  %v175 = vmul.f32 %v159, %v159
  %v176 = vmul.f32 %v162, %v162
  %v177 = vadd.f32 %v175, %v176
  %v178 = vrot.slane %v177, 4
  %v179 = vadd.f32 %v177, %v178
  %v180 = vrot.slane %v179, 2
  %v181 = vadd.f32 %v179, %v180
  %v182 = vrot.slane %v181, 1
  %v183 = vadd.f32 %v181, %v182
  %v184 = vadd.f32 %v183, 0.0
  %v185 = vmul.f32 %v174, 0.0625
  %v186 = vmul.f32 %v184, 0.0625
  %v187 = vmul.f32 %v185, %v185
  %v188 = vsub.f32 %v186, %v187
  %v189 = vmax.f32 %v188, 0.0
  %v190 = vadd.f32 %v189, 1e-05
  %v191 = vrsqrt.pop %v190
  %v192 = vmul.f32 %v191, %v165
  %v193 = vmul.f32 %v185, %v192
  %v194 = vsub.f32 %v166, %v193
  %v195 = vlaneseq
  %v196 = vshrl.u32 %v195, 7
  %v197 = vsub.s32 0, %v196
  %v198 = vrot.slane %v192, %v197
  %v199 = vmul.f32 %v159, %v198
  %v200 = vmul.f32 %v162, %v198
  %v202 = vlaneseq
  %v203 = vshrl.u32 %v202, 7
  %v204 = vsub.s32 0, %v203
  %v205 = vrot.slane %v194, %v204
  %v207 = vadd.f32 %v199, %v205
  %v208 = vadd.f32 %v200, %v205
  %v209 = vxor.u32 %v207, 2147483648
  %v210 = vxor.u32 %v208, 2147483648
  %v211 = vmul.f32 %v209, 1.442695
  %v212 = vpow.pop %v211
  %v213 = vmul.f32 %v210, 1.442695
  %v214 = vpow.pop %v213
  %v215 = vadd.f32 %v212, 1.0
  %v216 = vadd.f32 %v214, 1.0
  %v217 = vrcp.pop %v215
  %v218 = vmul.f32 1.0, %v217
  %v219 = vrcp.pop %v216
  %v220 = vmul.f32 1.0, %v219
  %v221 = vmul.f32 %v207, %v218
  %v222 = vmul.f32 %v208, %v220
  %v223 = vrot.slane %v221, 7
  %v224 = vrot.slane %v222, 7
  %v225 = vlaneseq
  %v226 = vshrl.u32 %v225, 7
  %vm227 = vcmp.lt.s32.totalorder %v226, 1
  %v228 = vsel %vm227, %v223, %v224
  %v229 = vsel %vm227, %v224, %v223
  %v230 = vadd.s32 %v226, 8
  %vm231 = vcmp.lt.s32.totalorder %v226, 0
  %v232 = vsub.s32 0, %v226
  %v233 = vsel %vm231, %v232, %v226
  %v234 = vshrl.u32 %v233, 3
  %v235 = vand.u32 %v233, 7
  %v236 = vsub.s32 0, %v235
  %v237 = vsel %vm231, %v236, %v235
  %vm238 = vcmp.lt.s32.totalorder %v230, 0
  %v239 = vsub.s32 0, %v230
  %v240 = vsel %vm238, %v239, %v230
  %v241 = vshrl.u32 %v240, 3
  %v242 = vand.u32 %v240, 7
  %v243 = vsub.s32 0, %v242
  %v244 = vsel %vm238, %v243, %v242
  %vm245 = vcmp.ne.s32.totalorder %v237, 0
  %vm246 = vcmp.ne.s32.totalorder %v244, 0
  %vm247 = vcmp.lt.s32.totalorder %v237, 0
  %vm248 = vcmp.lt.s32.totalorder %v244, 0
  %vm249 = vmand %vm247, %vm245
  %vm250 = vmand %vm248, %vm246
  %v251 = vadd.s32 %v237, 8
  %v252 = vadd.s32 %v244, 8
  %v253 = vsel %vm249, %v251, %v237
  %v254 = vsel %vm250, %v252, %v244
  %vm255 = vcmp.eq.s32.totalorder %v253, 0
  %vm256 = vcmp.eq.s32.totalorder %v254, 0
  %v257 = vsel %vm255, 0.0, %v229
  %v258 = vsel %vm256, 0.0, %v228
  %v259 = vrot.slane %v221, 1
  %v260 = vrot.slane %v222, 1
  %vm261 = vcmp.lt.s32.totalorder %v226, 7
  %v262 = vsel %vm261, %v259, %v260
  %v263 = vsel %vm261, %v260, %v259
  %vm264 = vcmp.eq.s32.totalorder %v253, 7
  %vm265 = vcmp.eq.s32.totalorder %v254, 7
  %v266 = vsel %vm264, 0.0, %v262
  %v267 = vsel %vm265, 0.0, %v263
  %v268 = vpack.c.bf16 %v258, %v257
  %v269 = vpack.c.bf16 %v222, %v221
  %v270 = vpack.c.bf16 %v267, %v266
  %v271 = vld [vmem:[%s5] sm:$0xf]
  %v272 = vld [vmem:[%s5 + $0x4] sm:$0xf]
  %v273 = vld [vmem:[%s5 + $0x8] sm:$0xf]
  %v274 = vld [vmem:[%s5 + $0xc] sm:$0xf]
  %v275 = vld [vmem:[%s5 + $0x10] sm:$0xf]
  %v276 = vld [vmem:[%s5 + $0x14] sm:$0xf]
  %v277 = vld [vmem:[%s5 + $0x18] sm:$0xf]
  %v278 = vld [vmem:[%s5 + $0x1c] sm:$0xf]
  %v279 = vld [vmem:[%s5 + $0x20] sm:$0xf]
  %v280 = vld [vmem:[%s5 + $0x24] sm:$0xf]
  %v281 = vld [vmem:[%s5 + $0x28] sm:$0xf]
  %v282 = vld [vmem:[%s5 + $0x2c] sm:$0xf]
  %v283 = vld [vmem:[%s5 + $0x30] sm:$0xf]
  %v284 = vld [vmem:[%s5 + $0x34] sm:$0xf]
  %v285 = vld [vmem:[%s5 + $0x38] sm:$0xf]
  %v286 = vld [vmem:[%s5 + $0x3c] sm:$0xf]
  %v287 = vld [vmem:[%s5 + $0x40] sm:$0xf]
  %v288 = vld [vmem:[%s5 + $0x44] sm:$0xf]
  %v289 = vld [vmem:[%s5 + $0x48] sm:$0xf]
  %v290 = vld [vmem:[%s5 + $0x4c] sm:$0xf]
  %v291 = vld [vmem:[%s5 + $0x50] sm:$0xf]
  %v292 = vld [vmem:[%s5 + $0x54] sm:$0xf]
  %v293 = vld [vmem:[%s5 + $0x58] sm:$0xf]
  %v294 = vld [vmem:[%s5 + $0x5c] sm:$0xf]
  %v295 = vld [vmem:[%s5 + $0x60] sm:$0xf]
  %v296 = vld [vmem:[%s5 + $0x64] sm:$0xf]
  %v297 = vld [vmem:[%s5 + $0x68] sm:$0xf]
  %v298 = vld [vmem:[%s5 + $0x6c] sm:$0xf]
  %v299 = vld [vmem:[%s5 + $0x70] sm:$0xf]
  %v300 = vld [vmem:[%s5 + $0x74] sm:$0xf]
  %v301 = vld [vmem:[%s5 + $0x78] sm:$0xf]
  %v302 = vld [vmem:[%s5 + $0x7c] sm:$0xf]
  %v303 = vld [vmem:[%s5 + $0x80] sm:$0xf]
  %v304 = vld [vmem:[%s5 + $0x84] sm:$0xf]
  %v305 = vld [vmem:[%s5 + $0x88] sm:$0xf]
  %v306 = vld [vmem:[%s5 + $0x8c] sm:$0xf]
  %v307 = vld [vmem:[%s5 + $0x90] sm:$0xf]
  %v308 = vld [vmem:[%s5 + $0x94] sm:$0xf]
  %v309 = vld [vmem:[%s5 + $0x98] sm:$0xf]
  %v310 = vld [vmem:[%s5 + $0x9c] sm:$0xf]
  %v311 = vld [vmem:[%s5 + $0xa0] sm:$0xf]
  %v312 = vld [vmem:[%s5 + $0xa4] sm:$0xf]
  %v313 = vld [vmem:[%s5 + $0xa8] sm:$0xf]
  %v314 = vld [vmem:[%s5 + $0xac] sm:$0xf]
  %v315 = vld [vmem:[%s5 + $0xb0] sm:$0xf]
  %v316 = vld [vmem:[%s5 + $0xb4] sm:$0xf]
  %v317 = vld [vmem:[%s5 + $0xb8] sm:$0xf]
  %v318 = vld [vmem:[%s5 + $0xbc] sm:$0xf]
  %v319 = vld [vmem:[%s6] sm:$0x1]
  %v321 = vlaneseq
  %v322 = vshrl.u32 %v321, 7
  %v323 = vsub.s32 0, %v322
  %v324 = vrot.slane %v319, %v323
  %v374 = vunpack.c.l.b16 %v271
  %v375 = vunpack.c.l.b16 %v272
  %v376 = vunpack.c.l.b16 %v273
  %v377 = vunpack.c.l.b16 %v274
  %v378 = vunpack.c.l.b16 %v275
  %v379 = vunpack.c.l.b16 %v276
  %v380 = vunpack.c.l.b16 %v277
  %v381 = vunpack.c.l.b16 %v278
  %v382 = vunpack.c.l.b16 %v279
  %v383 = vunpack.c.l.b16 %v280
  %v384 = vunpack.c.l.b16 %v281
  %v385 = vunpack.c.l.b16 %v282
  %v386 = vunpack.c.l.b16 %v283
  %v387 = vunpack.c.l.b16 %v284
  %v388 = vunpack.c.l.b16 %v285
  %v389 = vunpack.c.l.b16 %v286
  %v390 = vunpack.c.l.b16 %v287
  %v391 = vunpack.c.l.b16 %v288
  %v392 = vunpack.c.l.b16 %v289
  %v393 = vunpack.c.l.b16 %v290
  %v394 = vunpack.c.l.b16 %v291
  %v395 = vunpack.c.l.b16 %v292
  %v396 = vunpack.c.l.b16 %v293
  %v397 = vunpack.c.l.b16 %v294
  %v398 = vunpack.c.l.b16 %v295
  %v399 = vunpack.c.l.b16 %v296
  %v400 = vunpack.c.l.b16 %v297
  %v401 = vunpack.c.l.b16 %v298
  %v402 = vunpack.c.l.b16 %v299
  %v403 = vunpack.c.l.b16 %v300
  %v404 = vunpack.c.l.b16 %v301
  %v405 = vunpack.c.l.b16 %v302
  %v406 = vunpack.c.l.b16 %v303
  %v407 = vunpack.c.l.b16 %v304
  %v408 = vunpack.c.l.b16 %v305
  %v409 = vunpack.c.l.b16 %v306
  %v410 = vunpack.c.l.b16 %v307
  %v411 = vunpack.c.l.b16 %v308
  %v412 = vunpack.c.l.b16 %v309
  %v413 = vunpack.c.l.b16 %v310
  %v414 = vunpack.c.l.b16 %v311
  %v415 = vunpack.c.l.b16 %v312
  %v416 = vunpack.c.l.b16 %v313
  %v417 = vunpack.c.l.b16 %v314
  %v418 = vunpack.c.l.b16 %v315
  %v419 = vunpack.c.l.b16 %v316
  %v420 = vunpack.c.l.b16 %v317
  %v421 = vunpack.c.l.b16 %v318
  %v422 = vpack.c.b16 %v375, %v374
  %v423 = vpack.c.b16 %v377, %v376
  %v424 = vpack.c.b16 %v379, %v378
  %v425 = vpack.c.b16 %v381, %v380
  %v426 = vpack.c.b16 %v383, %v382
  %v427 = vpack.c.b16 %v385, %v384
  %v428 = vpack.c.b16 %v387, %v386
  %v429 = vpack.c.b16 %v389, %v388
  %v430 = vpack.c.b16 %v391, %v390
  %v431 = vpack.c.b16 %v393, %v392
  %v432 = vpack.c.b16 %v395, %v394
  %v433 = vpack.c.b16 %v397, %v396
  %v434 = vpack.c.b16 %v399, %v398
  %v435 = vpack.c.b16 %v401, %v400
  %v436 = vpack.c.b16 %v403, %v402
  %v437 = vpack.c.b16 %v405, %v404
  %v438 = vpack.c.b16 %v407, %v406
  %v439 = vpack.c.b16 %v409, %v408
  %v440 = vpack.c.b16 %v411, %v410
  %v441 = vpack.c.b16 %v413, %v412
  %v442 = vpack.c.b16 %v415, %v414
  %v443 = vpack.c.b16 %v417, %v416
  %v444 = vpack.c.b16 %v419, %v418
  %v445 = vpack.c.b16 %v421, %v420
  %470 = vmatprep.subr.bf16.mxu0 0
  %471 = vmatpush1.bf16.msra.mxu0 %v422
  %472 = vmatprep.subr.bf16.mxu0 0
  %473 = vmatpush1.bf16.msra.mxu0 %v423
  %474 = vmatprep.subr.bf16.mxu0 0
  %475 = vmatpush1.bf16.msra.mxu0 %v424
  %476 = vmatprep.subr.bf16.mxu0 0
  %477 = vmatpush1.bf16.msra.mxu0 %v425
  %478 = vmatprep.subr.bf16.mxu0 0
  %479 = vmatpush1.bf16.msra.mxu0 %v426
  %480 = vmatprep.subr.bf16.mxu0 0
  %481 = vmatpush1.bf16.msra.mxu0 %v427
  %482 = vmatprep.subr.bf16.mxu0 0
  %483 = vmatpush1.bf16.msra.mxu0 %v428
  %484 = vmatprep.subr.bf16.mxu0 0
  %485 = vmatpush1.bf16.msra.mxu0 %v429
  %486 = vmatprep.subr.bf16.mxu0 0
  %487 = vmatpush1.bf16.msra.mxu0 %v430
  %488 = vmatprep.subr.bf16.mxu0 0
  %489 = vmatpush1.bf16.msra.mxu0 %v431
  %490 = vmatprep.subr.bf16.mxu0 0
  %491 = vmatpush1.bf16.msra.mxu0 %v432
  %492 = vmatprep.subr.bf16.mxu0 0
  %493 = vmatpush1.bf16.msra.mxu0 %v433
  %494 = vmatprep.subr.bf16.mxu0 0
  %495 = vmatpush1.bf16.msra.mxu0 %v434
  %496 = vmatprep.subr.bf16.mxu0 0
  %497 = vmatpush1.bf16.msra.mxu0 %v435
  %498 = vmatprep.subr.bf16.mxu0 0
  %499 = vmatpush1.bf16.msra.mxu0 %v436
  %500 = vmatprep.subr.bf16.mxu0 0
  %501 = vmatpush1.bf16.msra.mxu0 %v437
  %502 = vmatprep.mubr.bf16.mxu0 %v269
  %503 = vmatmul.mubr.bf16.gmra.mrb[0].mxu0 %v268
  %v504 = vpop.f32.mrb[0].mxu0
  %v505 = vadd.f32 %v324, %v504
  %v506 = vpop.f32.mrb[0].mxu0
  %v507 = vpop.f32.mrb[0].mxu0
  %v508 = vadd.f32 %v324, %v507
  %v509 = vpop.f32.mrb[0].mxu0
  %510 = vdwg.mxu0
  %511 = vmatprep.subr.bf16.mxu0 0
  %512 = vmatpush1.bf16.msra.mxu0 %v438
  %513 = vmatprep.subr.bf16.mxu0 0
  %514 = vmatpush1.bf16.msra.mxu0 %v439
  %515 = vmatprep.subr.bf16.mxu0 0
  %516 = vmatpush1.bf16.msra.mxu0 %v440
  %517 = vmatprep.subr.bf16.mxu0 0
  %518 = vmatpush1.bf16.msra.mxu0 %v441
  %519 = vmatprep.subr.bf16.mxu0 0
  %520 = vmatpush1.bf16.msra.mxu0 %v442
  %521 = vmatprep.subr.bf16.mxu0 0
  %522 = vmatpush1.bf16.msra.mxu0 %v443
  %523 = vmatprep.subr.bf16.mxu0 0
  %524 = vmatpush1.bf16.msra.mxu0 %v444
  %525 = vmatprep.subr.bf16.mxu0 0
  %526 = vmatpush1.bf16.msra.mxu0 %v445
  %527 = vmatprep.subr.bf16.mxu0 0
  %528 = vmatpush1.bf16.msra.mxu0 0
  %529 = vmatprep.subr.bf16.mxu0 0
  %530 = vmatpush1.bf16.msra.mxu0 0
  %531 = vmatprep.subr.bf16.mxu0 0
  %532 = vmatpush1.bf16.msra.mxu0 0
  %533 = vmatprep.subr.bf16.mxu0 0
  %534 = vmatpush1.bf16.msra.mxu0 0
  %535 = vmatprep.subr.bf16.mxu0 0
  %536 = vmatpush1.bf16.msra.mxu0 0
  %537 = vmatprep.subr.bf16.mxu0 0
  %538 = vmatpush1.bf16.msra.mxu0 0
  %539 = vmatprep.subr.bf16.mxu0 0
  %540 = vmatpush1.bf16.msra.mxu0 0
  %541 = vmatprep.subr.bf16.mxu0 0
  %542 = vmatpush1.bf16.msra.mxu0 0
  %543 = vmatprep.mubr.bf16.mxu0 0
  %544 = vmatmul.mubr.bf16.gmra.mrb[0].mxu0 %v270
  %v545 = vpop.f32.mrb[0].mxu0
  %v546 = vadd.f32 %v505, %v545
  %v547 = vpop.f32.mrb[0].mxu0
  %v548 = vpop.f32.mrb[0].mxu0
  %v549 = vadd.f32 %v508, %v548
  %v550 = vpop.f32.mrb[0].mxu0
  %551 = vdwg.mxu0
  %v552 = vld [vmem:[%s7] sm:$0x1]
  %v553 = vld [vmem:[%s8] sm:$0x1]
  %v554 = vadd.f32 %v546, %v549
  %v555 = vrot.slane %v554, 4
  %v556 = vadd.f32 %v554, %v555
  %v557 = vrot.slane %v556, 2
  %v558 = vadd.f32 %v556, %v557
  %v559 = vrot.slane %v558, 1
  %v560 = vadd.f32 %v558, %v559
  %v561 = vadd.f32 %v560, 0.0
  %v562 = vmul.f32 %v546, %v546
  %v563 = vmul.f32 %v549, %v549
  %v564 = vadd.f32 %v562, %v563
  %v565 = vrot.slane %v564, 4
  %v566 = vadd.f32 %v564, %v565
  %v567 = vrot.slane %v566, 2
  %v568 = vadd.f32 %v566, %v567
  %v569 = vrot.slane %v568, 1
  %v570 = vadd.f32 %v568, %v569
  %v571 = vadd.f32 %v570, 0.0
  %v572 = vmul.f32 %v561, 0.0625
  %v573 = vmul.f32 %v571, 0.0625
  %v574 = vmul.f32 %v572, %v572
  %v575 = vsub.f32 %v573, %v574
  %v576 = vmax.f32 %v575, 0.0
  %v577 = vadd.f32 %v576, 1e-05
  %v578 = vrsqrt.pop %v577
  %v579 = vmul.f32 %v578, %v552
  %v580 = vmul.f32 %v572, %v579
  %v581 = vsub.f32 %v553, %v580
  %v582 = vlaneseq
  %v583 = vshrl.u32 %v582, 7
  %v584 = vsub.s32 0, %v583
  %v585 = vrot.slane %v579, %v584
  %v586 = vmul.f32 %v546, %v585
  %v587 = vmul.f32 %v549, %v585
  %v589 = vlaneseq
  %v590 = vshrl.u32 %v589, 7
  %v591 = vsub.s32 0, %v590
  %v592 = vrot.slane %v581, %v591
  %v594 = vadd.f32 %v586, %v592
  %v595 = vadd.f32 %v587, %v592
  %v596 = vxor.u32 %v594, 2147483648
  %v597 = vxor.u32 %v595, 2147483648
  %v598 = vmul.f32 %v596, 1.442695
  %v599 = vpow.pop %v598
  %v600 = vmul.f32 %v597, 1.442695
  %v601 = vpow.pop %v600
  %v602 = vadd.f32 %v599, 1.0
  %v603 = vadd.f32 %v601, 1.0
  %v604 = vrcp.pop %v602
  %v605 = vmul.f32 1.0, %v604
  %v606 = vrcp.pop %v603
  %v607 = vmul.f32 1.0, %v606
  %v608 = vmul.f32 %v594, %v605
  %v609 = vmul.f32 %v595, %v607
  %v610 = vpack.c.bf16 %v609, %v608
  %v611 = vld [vmem:[%s9] sm:$0xf]
  %v612 = vld [vmem:[%s9 + $0x4] sm:$0xf]
  %v613 = vld [vmem:[%s9 + $0x8] sm:$0xf]
  %v614 = vld [vmem:[%s9 + $0xc] sm:$0xf]
  %v615 = vld [vmem:[%s9 + $0x10] sm:$0xf]
  %v616 = vld [vmem:[%s9 + $0x14] sm:$0xf]
  %v617 = vld [vmem:[%s9 + $0x18] sm:$0xf]
  %v618 = vld [vmem:[%s9 + $0x1c] sm:$0xf]
  %v619 = vld [vmem:[%s9 + $0x20] sm:$0xf]
  %v620 = vld [vmem:[%s9 + $0x24] sm:$0xf]
  %v621 = vld [vmem:[%s9 + $0x28] sm:$0xf]
  %v622 = vld [vmem:[%s9 + $0x2c] sm:$0xf]
  %v623 = vld [vmem:[%s9 + $0x30] sm:$0xf]
  %v624 = vld [vmem:[%s9 + $0x34] sm:$0xf]
  %v625 = vld [vmem:[%s9 + $0x38] sm:$0xf]
  %v626 = vld [vmem:[%s9 + $0x3c] sm:$0xf]
  %v627 = vld [vmem:[%s10] sm:$0x1]
  %v629 = vlaneseq
  %v630 = vshrl.u32 %v629, 7
  %v631 = vsub.s32 0, %v630
  %v632 = vrot.slane %v627, %v631
  %v650 = vunpack.c.l.b16 %v611
  %v651 = vunpack.c.l.b16 %v612
  %v652 = vunpack.c.l.b16 %v613
  %v653 = vunpack.c.l.b16 %v614
  %v654 = vunpack.c.l.b16 %v615
  %v655 = vunpack.c.l.b16 %v616
  %v656 = vunpack.c.l.b16 %v617
  %v657 = vunpack.c.l.b16 %v618
  %v658 = vunpack.c.l.b16 %v619
  %v659 = vunpack.c.l.b16 %v620
  %v660 = vunpack.c.l.b16 %v621
  %v661 = vunpack.c.l.b16 %v622
  %v662 = vunpack.c.l.b16 %v623
  %v663 = vunpack.c.l.b16 %v624
  %v664 = vunpack.c.l.b16 %v625
  %v665 = vunpack.c.l.b16 %v626
  %v666 = vpack.c.b16 %v651, %v650
  %v667 = vpack.c.b16 %v653, %v652
  %v668 = vpack.c.b16 %v655, %v654
  %v669 = vpack.c.b16 %v657, %v656
  %v670 = vpack.c.b16 %v659, %v658
  %v671 = vpack.c.b16 %v661, %v660
  %v672 = vpack.c.b16 %v663, %v662
  %v673 = vpack.c.b16 %v665, %v664
  %682 = vmatprep.subr.bf16.mxu0 0
  %683 = vmatpush1.bf16.msra.mxu0 %v666
  %684 = vmatprep.subr.bf16.mxu0 0
  %685 = vmatpush1.bf16.msra.mxu0 %v667
  %686 = vmatprep.subr.bf16.mxu0 0
  %687 = vmatpush1.bf16.msra.mxu0 %v668
  %688 = vmatprep.subr.bf16.mxu0 0
  %689 = vmatpush1.bf16.msra.mxu0 %v669
  %690 = vmatprep.subr.bf16.mxu0 0
  %691 = vmatpush1.bf16.msra.mxu0 %v670
  %692 = vmatprep.subr.bf16.mxu0 0
  %693 = vmatpush1.bf16.msra.mxu0 %v671
  %694 = vmatprep.subr.bf16.mxu0 0
  %695 = vmatpush1.bf16.msra.mxu0 %v672
  %696 = vmatprep.subr.bf16.mxu0 0
  %697 = vmatpush1.bf16.msra.mxu0 %v673
  %698 = vmatprep.subr.bf16.mxu0 0
  %699 = vmatpush1.bf16.msra.mxu0 0
  %700 = vmatprep.subr.bf16.mxu0 0
  %701 = vmatpush1.bf16.msra.mxu0 0
  %702 = vmatprep.subr.bf16.mxu0 0
  %703 = vmatpush1.bf16.msra.mxu0 0
  %704 = vmatprep.subr.bf16.mxu0 0
  %705 = vmatpush1.bf16.msra.mxu0 0
  %706 = vmatprep.subr.bf16.mxu0 0
  %707 = vmatpush1.bf16.msra.mxu0 0
  %708 = vmatprep.subr.bf16.mxu0 0
  %709 = vmatpush1.bf16.msra.mxu0 0
  %710 = vmatprep.subr.bf16.mxu0 0
  %711 = vmatpush1.bf16.msra.mxu0 0
  %712 = vmatprep.subr.bf16.mxu0 0
  %713 = vmatpush1.bf16.msra.mxu0 0
  %714 = vmatprep.mubr.bf16.mxu0 0
  %715 = vmatmul.mubr.bf16.gmra.mrb[0].mxu0 %v610
  %v716 = vpop.f32.mrb[0].mxu0
  %v717 = vadd.f32 %v632, %v716
  %v718 = vpop.f32.mrb[0].mxu0
  %v719 = vpop.f32.mrb[0].mxu0
  %v720 = vadd.f32 %v632, %v719
  %v721 = vpop.f32.mrb[0].mxu0
  %722 = vdwg.mxu0
  %v723 = vld [vmem:[%s11] sm:$0x1]
  %v724 = vld [vmem:[%s12] sm:$0x1]
  %v725 = vadd.f32 %v717, %v720
  %v726 = vrot.slane %v725, 4
  %v727 = vadd.f32 %v725, %v726
  %v728 = vrot.slane %v727, 2
  %v729 = vadd.f32 %v727, %v728
  %v730 = vrot.slane %v729, 1
  %v731 = vadd.f32 %v729, %v730
  %v732 = vadd.f32 %v731, 0.0
  %v733 = vmul.f32 %v717, %v717
  %v734 = vmul.f32 %v720, %v720
  %v735 = vadd.f32 %v733, %v734
  %v736 = vrot.slane %v735, 4
  %v737 = vadd.f32 %v735, %v736
  %v738 = vrot.slane %v737, 2
  %v739 = vadd.f32 %v737, %v738
  %v740 = vrot.slane %v739, 1
  %v741 = vadd.f32 %v739, %v740
  %v742 = vadd.f32 %v741, 0.0
  %v743 = vmul.f32 %v732, 0.0625
  %v744 = vmul.f32 %v742, 0.0625
  %v745 = vmul.f32 %v743, %v743
  %v746 = vsub.f32 %v744, %v745
  %v747 = vmax.f32 %v746, 0.0
  %v748 = vadd.f32 %v747, 1e-05
  %v749 = vrsqrt.pop %v748
  %v750 = vmul.f32 %v749, %v723
  %v751 = vmul.f32 %v743, %v750
  %v752 = vsub.f32 %v724, %v751
  %v753 = vlaneseq
  %v754 = vshrl.u32 %v753, 7
  %v755 = vsub.s32 0, %v754
  %v756 = vrot.slane %v750, %v755
  %v757 = vmul.f32 %v717, %v756
  %v758 = vmul.f32 %v720, %v756
  %v760 = vlaneseq
  %v761 = vshrl.u32 %v760, 7
  %v762 = vsub.s32 0, %v761
  %v763 = vrot.slane %v752, %v762
  %v765 = vadd.f32 %v757, %v763
  %v766 = vadd.f32 %v758, %v763
  %v767 = vunpack.c.l.bf16 %v45
  %v768 = vunpack.c.l.bf16 %v46
  %v769 = vadd.f32 %v765, %v767
  %v770 = vadd.f32 %v766, %v768
  %v771 = vxor.u32 %v769, 2147483648
  %v772 = vxor.u32 %v770, 2147483648
  %v773 = vmul.f32 %v771, 1.442695
  %v774 = vpow.pop %v773
  %v775 = vmul.f32 %v772, 1.442695
  %v776 = vpow.pop %v775
  %v777 = vadd.f32 %v774, 1.0
  %v778 = vadd.f32 %v776, 1.0
  %v779 = vrcp.pop %v777
  %v780 = vmul.f32 1.0, %v779
  %v781 = vrcp.pop %v778
  %v782 = vmul.f32 1.0, %v781
  %v783 = vmul.f32 %v769, %v780
  %v784 = vmul.f32 %v770, %v782
  %v785 = vpack.c.bf16 %v784, %v783
  %v787 = vunpack.c.l.b16 %v785
  %v788 = vunpack.c.h.b16 %v785
  %v789 = vpack.c.b16 %v787, %v787
  %v790 = vpack.c.b16 %v788, %v788
  %793 = vst [vmem:[%s13] sm:$0xf] %v789
  %794 = vst [vmem:[%s13 + $0x4] sm:$0xf] %v790
  // Predicated region
  $region54: #{resnext_forward.7} parent=0 // pred_check
    _
  $region55: #{resnext_forward.7} parent=0 // pred_check_branch
    %796 = sbr.rel (0) target = $region57
  $region56: #{resnext_forward.7} parent=0 // pred_region
    _
  $region57: #{resnext_forward.7} parent=0 // pred_fallthru
    _
  // Predicated region
  $region58: #{resnext_forward.7} parent=0 // pred_check
    _
  $region59: #{resnext_forward.7} parent=0 // pred_check_branch
    %798 = sbr.rel (0) target = $region61
  $region60: #{resnext_forward.7} parent=0 // pred_region
    _
  $region61: #{resnext_forward.7} parent=0 // pred_fallthru
    _

// kernel: resnext_forward.6
$region0: #{resnext_forward.6}
  #allocation0 [shape = 'u32[]', space=smem, size = 0x4, offset = 0x4, fixed_abs, tag = 'smem constant byte address 0x4 - core index']
  #allocation1 [shape = 'u32[144,128]{1,0:T(1,128)}', space=vmem, size = 0x12000, scoped, tag = 'internal scratch']
  %s0 = inlined_call_operand.vmem [shape: bf16[16,128], index: 0, kind: input, shape index: {}]
  %s1 = inlined_call_operand.vmem [shape: bf16[16,128], index: 1, kind: input, shape index: {}]
  %s2 = inlined_call_operand.vmem [shape: bf16[128,128], index: 2, kind: input, shape index: {}]
  %s3 = inlined_call_operand.vmem [shape: f32[1,128], index: 3, kind: input, shape index: {}]
  %s4 = inlined_call_operand.vmem [shape: f32[1,128], index: 4, kind: input, shape index: {}]
  %s5 = inlined_call_operand.vmem [shape: f32[1,128], index: 5, kind: input, shape index: {}]
  %s6 = inlined_call_operand.vmem [shape: bf16[128,128], index: 6, kind: input, shape index: {}]
  %s7 = inlined_call_operand.vmem [shape: f32[1,128], index: 7, kind: input, shape index: {}]
  %s8 = inlined_call_operand.vmem [shape: f32[1,128], index: 8, kind: input, shape index: {}]
  %s9 = inlined_call_operand.vmem [shape: f32[1,128], index: 9, kind: input, shape index: {}]
  %s10 = inlined_call_operand.vmem [shape: bf16[384,128], index: 10, kind: input, shape index: {}]
  %s11 = inlined_call_operand.vmem [shape: f32[1,128], index: 11, kind: input, shape index: {}]
  %s12 = inlined_call_operand.vmem [shape: f32[1,128], index: 12, kind: input, shape index: {}]
  %s13 = inlined_call_operand.vmem [shape: f32[1,128], index: 13, kind: input, shape index: {}]
  %s14 = inlined_call_operand.vmem [shape: bf16[128,128], index: 14, kind: input, shape index: {}]
  %s15 = inlined_call_operand.vmem [shape: f32[1,128], index: 15, kind: input, shape index: {}]
  %s16 = inlined_call_operand.vmem [shape: f32[1,128], index: 16, kind: input, shape index: {}]
  %s17 = inlined_call_operand.vmem [shape: f32[1,128], index: 17, kind: input, shape index: {}]
  %s18 = inlined_call_operand.vmem [shape: bf16[16,128], index: 18, kind: output, shape index: {}]
  %s19 = sld [smem:[#allocation0]]
  $region82: #{resnext_forward.6} parent=0
    _
  %s21 = ssub.s32 1, %s19
  %s22 = scalar_select 0, %s21, %s19
  // Predicated region
  $region2: #{resnext_forward.6} parent=0 // pred_check
    _
  $region3: #{resnext_forward.6} parent=0 // pred_check_branch
    %24 = sbr.rel (0) target = $region5
  $region4: #{resnext_forward.6} parent=0 // pred_region
    _
  $region5: #{resnext_forward.6} parent=0 // pred_fallthru
    _
  // Predicated region
  $region6: #{resnext_forward.6} parent=0 // pred_check
    _
  $region7: #{resnext_forward.6} parent=0 // pred_check_branch
    %26 = sbr.rel (0) target = $region9
  $region8: #{resnext_forward.6} parent=0 // pred_region
    _
  $region9: #{resnext_forward.6} parent=0 // pred_fallthru
    _
  // Predicated region
  $region10: #{resnext_forward.6} parent=0 // pred_check
    _
  $region11: #{resnext_forward.6} parent=0 // pred_check_branch
    %28 = sbr.rel (0) target = $region13
  $region12: #{resnext_forward.6} parent=0 // pred_region
    _
  $region13: #{resnext_forward.6} parent=0 // pred_fallthru
    _
  // Predicated region
  $region14: #{resnext_forward.6} parent=0 // pred_check
    _
  $region15: #{resnext_forward.6} parent=0 // pred_check_branch
    %30 = sbr.rel (0) target = $region17
  $region16: #{resnext_forward.6} parent=0 // pred_region
    _
  $region17: #{resnext_forward.6} parent=0 // pred_fallthru
    _
  // Predicated region
  $region18: #{resnext_forward.6} parent=0 // pred_check
    _
  $region19: #{resnext_forward.6} parent=0 // pred_check_branch
    %32 = sbr.rel (0) target = $region21
  $region20: #{resnext_forward.6} parent=0 // pred_region
    _
  $region21: #{resnext_forward.6} parent=0 // pred_fallthru
    _
  // Predicated region
  $region22: #{resnext_forward.6} parent=0 // pred_check
    _
  $region23: #{resnext_forward.6} parent=0 // pred_check_branch
    %34 = sbr.rel (0) target = $region25
  $region24: #{resnext_forward.6} parent=0 // pred_region
    _
  $region25: #{resnext_forward.6} parent=0 // pred_fallthru
    _
  // Predicated region
  $region26: #{resnext_forward.6} parent=0 // pred_check
    _
  $region27: #{resnext_forward.6} parent=0 // pred_check_branch
    %36 = sbr.rel (0) target = $region29
  $region28: #{resnext_forward.6} parent=0 // pred_region
    _
  $region29: #{resnext_forward.6} parent=0 // pred_fallthru
    _
  // Predicated region
  $region30: #{resnext_forward.6} parent=0 // pred_check
    _
  $region31: #{resnext_forward.6} parent=0 // pred_check_branch
    %38 = sbr.rel (0) target = $region33
  $region32: #{resnext_forward.6} parent=0 // pred_region
    _
  $region33: #{resnext_forward.6} parent=0 // pred_fallthru
    _
  // Predicated region
  $region34: #{resnext_forward.6} parent=0 // pred_check
    _
  $region35: #{resnext_forward.6} parent=0 // pred_check_branch
    %40 = sbr.rel (0) target = $region37
  $region36: #{resnext_forward.6} parent=0 // pred_region
    _
  $region37: #{resnext_forward.6} parent=0 // pred_fallthru
    _
  // Predicated region
  $region38: #{resnext_forward.6} parent=0 // pred_check
    _
  $region39: #{resnext_forward.6} parent=0 // pred_check_branch
    %42 = sbr.rel (0) target = $region41
  $region40: #{resnext_forward.6} parent=0 // pred_region
    _
  $region41: #{resnext_forward.6} parent=0 // pred_fallthru
    _
  // Predicated region
  $region42: #{resnext_forward.6} parent=0 // pred_check
    _
  $region43: #{resnext_forward.6} parent=0 // pred_check_branch
    %44 = sbr.rel (0) target = $region45
  $region44: #{resnext_forward.6} parent=0 // pred_region
    _
  $region45: #{resnext_forward.6} parent=0 // pred_fallthru
    _
  // Predicated region
  $region46: #{resnext_forward.6} parent=0 // pred_check
    _
  $region47: #{resnext_forward.6} parent=0 // pred_check_branch
    %46 = sbr.rel (0) target = $region49
  $region48: #{resnext_forward.6} parent=0 // pred_region
    _
  $region49: #{resnext_forward.6} parent=0 // pred_fallthru
    _
  // Predicated region
  $region50: #{resnext_forward.6} parent=0 // pred_check
    _
  $region51: #{resnext_forward.6} parent=0 // pred_check_branch
    %48 = sbr.rel (0) target = $region53
  $region52: #{resnext_forward.6} parent=0 // pred_region
    _
  $region53: #{resnext_forward.6} parent=0 // pred_fallthru
    _
  // Predicated region
  $region54: #{resnext_forward.6} parent=0 // pred_check
    _
  $region55: #{resnext_forward.6} parent=0 // pred_check_branch
    %50 = sbr.rel (0) target = $region57
  $region56: #{resnext_forward.6} parent=0 // pred_region
    _
  $region57: #{resnext_forward.6} parent=0 // pred_fallthru
    _
  // Predicated region
  $region58: #{resnext_forward.6} parent=0 // pred_check
    _
  $region59: #{resnext_forward.6} parent=0 // pred_check_branch
    %52 = sbr.rel (0) target = $region61
  $region60: #{resnext_forward.6} parent=0 // pred_region
    _
  $region61: #{resnext_forward.6} parent=0 // pred_fallthru
    _
  // Predicated region
  $region62: #{resnext_forward.6} parent=0 // pred_check
    _
  $region63: #{resnext_forward.6} parent=0 // pred_check_branch
    %54 = sbr.rel (0) target = $region65
  $region64: #{resnext_forward.6} parent=0 // pred_region
    _
  $region65: #{resnext_forward.6} parent=0 // pred_fallthru
    _
  // Predicated region
  $region66: #{resnext_forward.6} parent=0 // pred_check
    _
  $region67: #{resnext_forward.6} parent=0 // pred_check_branch
    %56 = sbr.rel (0) target = $region69
  $region68: #{resnext_forward.6} parent=0 // pred_region
    _
  $region69: #{resnext_forward.6} parent=0 // pred_fallthru
    _
  // Predicated region
  $region70: #{resnext_forward.6} parent=0 // pred_check
    _
  $region71: #{resnext_forward.6} parent=0 // pred_check_branch
    %58 = sbr.rel (0) target = $region73
  $region72: #{resnext_forward.6} parent=0 // pred_region
    _
  $region73: #{resnext_forward.6} parent=0 // pred_fallthru
    _
  %v60 = vld [vmem:[%s0] sm:$0xf]
  %v61 = vld [vmem:[%s0 + $0x4] sm:$0xf]
  %v62 = vld [vmem:[%s1] sm:$0xf]
  %v63 = vld [vmem:[%s1 + $0x4] sm:$0xf]
  %v64 = vld [vmem:[%s6] sm:$0xf]
  %v65 = vld [vmem:[%s6 + $0x4] sm:$0xf]
  %v66 = vld [vmem:[%s6 + $0x8] sm:$0xf]
  %v67 = vld [vmem:[%s6 + $0xc] sm:$0xf]
  %v68 = vld [vmem:[%s6 + $0x10] sm:$0xf]
  %v69 = vld [vmem:[%s6 + $0x14] sm:$0xf]
  %v70 = vld [vmem:[%s6 + $0x18] sm:$0xf]
  %v71 = vld [vmem:[%s6 + $0x1c] sm:$0xf]
  %v72 = vld [vmem:[%s6 + $0x20] sm:$0xf]
  %v73 = vld [vmem:[%s6 + $0x24] sm:$0xf]
  %v74 = vld [vmem:[%s6 + $0x28] sm:$0xf]
  %v75 = vld [vmem:[%s6 + $0x2c] sm:$0xf]
  %v76 = vld [vmem:[%s6 + $0x30] sm:$0xf]
  %v77 = vld [vmem:[%s6 + $0x34] sm:$0xf]
  %v78 = vld [vmem:[%s6 + $0x38] sm:$0xf]
  %v79 = vld [vmem:[%s6 + $0x3c] sm:$0xf]
  %v80 = vld [vmem:[%s7] sm:$0x1]
  %v82 = vlaneseq
  %v83 = vshrl.u32 %v82, 7
  %v84 = vsub.s32 0, %v83
  %v85 = vrot.slane %v80, %v84
  %v89 = vunpack.c.l.b16 %v60
  %v90 = vunpack.c.l.b16 %v61
  %v91 = vpack.c.b16 %v90, %v89
  %v109 = vunpack.c.l.b16 %v64
  %v110 = vunpack.c.l.b16 %v65
  %v111 = vunpack.c.l.b16 %v66
  %v112 = vunpack.c.l.b16 %v67
  %v113 = vunpack.c.l.b16 %v68
  %v114 = vunpack.c.l.b16 %v69
  %v115 = vunpack.c.l.b16 %v70
  %v116 = vunpack.c.l.b16 %v71
  %v117 = vunpack.c.l.b16 %v72
  %v118 = vunpack.c.l.b16 %v73
  %v119 = vunpack.c.l.b16 %v74
  %v120 = vunpack.c.l.b16 %v75
  %v121 = vunpack.c.l.b16 %v76
  %v122 = vunpack.c.l.b16 %v77
  %v123 = vunpack.c.l.b16 %v78
  %v124 = vunpack.c.l.b16 %v79
  %v125 = vpack.c.b16 %v110, %v109
  %v126 = vpack.c.b16 %v112, %v111
  %v127 = vpack.c.b16 %v114, %v113
  %v128 = vpack.c.b16 %v116, %v115
  %v129 = vpack.c.b16 %v118, %v117
  %v130 = vpack.c.b16 %v120, %v119
  %v131 = vpack.c.b16 %v122, %v121
  %v132 = vpack.c.b16 %v124, %v123
  %141 = vmatprep.subr.bf16.mxu0 0
  %142 = vmatpush1.bf16.msra.mxu0 %v125
  %143 = vmatprep.subr.bf16.mxu0 0
  %144 = vmatpush1.bf16.msra.mxu0 %v126
  %145 = vmatprep.subr.bf16.mxu0 0
  %146 = vmatpush1.bf16.msra.mxu0 %v127
  %147 = vmatprep.subr.bf16.mxu0 0
  %148 = vmatpush1.bf16.msra.mxu0 %v128
  %149 = vmatprep.subr.bf16.mxu0 0
  %150 = vmatpush1.bf16.msra.mxu0 %v129
  %151 = vmatprep.subr.bf16.mxu0 0
  %152 = vmatpush1.bf16.msra.mxu0 %v130
  %153 = vmatprep.subr.bf16.mxu0 0
  %154 = vmatpush1.bf16.msra.mxu0 %v131
  %155 = vmatprep.subr.bf16.mxu0 0
  %156 = vmatpush1.bf16.msra.mxu0 %v132
  %157 = vmatprep.subr.bf16.mxu0 0
  %158 = vmatpush1.bf16.msra.mxu0 0
  %159 = vmatprep.subr.bf16.mxu0 0
  %160 = vmatpush1.bf16.msra.mxu0 0
  %161 = vmatprep.subr.bf16.mxu0 0
  %162 = vmatpush1.bf16.msra.mxu0 0
  %163 = vmatprep.subr.bf16.mxu0 0
  %164 = vmatpush1.bf16.msra.mxu0 0
  %165 = vmatprep.subr.bf16.mxu0 0
  %166 = vmatpush1.bf16.msra.mxu0 0
  %167 = vmatprep.subr.bf16.mxu0 0
  %168 = vmatpush1.bf16.msra.mxu0 0
  %169 = vmatprep.subr.bf16.mxu0 0
  %170 = vmatpush1.bf16.msra.mxu0 0
  %171 = vmatprep.subr.bf16.mxu0 0
  %172 = vmatpush1.bf16.msra.mxu0 0
  %173 = vmatprep.mubr.bf16.mxu0 0
  %174 = vmatmul.mubr.bf16.gmra.mrb[0].mxu0 %v91
  %v175 = vpop.f32.mrb[0].mxu0
  %v176 = vadd.f32 %v85, %v175
  %v177 = vpop.f32.mrb[0].mxu0
  %v178 = vpop.f32.mrb[0].mxu0
  %v179 = vadd.f32 %v85, %v178
  %v180 = vpop.f32.mrb[0].mxu0
  %181 = vdwg.mxu0
  %v184 = vunpack.c.l.b16 %v62
  %v185 = vunpack.c.l.b16 %v63
  %v186 = vpack.c.b16 %v185, %v184
  %188 = vmatprep.subr.bf16.mxu0 0
  %189 = vmatpush1.bf16.msra.mxu0 %v125
  %190 = vmatprep.subr.bf16.mxu0 0
  %191 = vmatpush1.bf16.msra.mxu0 %v126
  %192 = vmatprep.subr.bf16.mxu0 0
  %193 = vmatpush1.bf16.msra.mxu0 %v127
  %194 = vmatprep.subr.bf16.mxu0 0
  %195 = vmatpush1.bf16.msra.mxu0 %v128
  %196 = vmatprep.subr.bf16.mxu0 0
  %197 = vmatpush1.bf16.msra.mxu0 %v129
  %198 = vmatprep.subr.bf16.mxu0 0
  %199 = vmatpush1.bf16.msra.mxu0 %v130
  %200 = vmatprep.subr.bf16.mxu0 0
  %201 = vmatpush1.bf16.msra.mxu0 %v131
  %202 = vmatprep.subr.bf16.mxu0 0
  %203 = vmatpush1.bf16.msra.mxu0 %v132
  %204 = vmatprep.subr.bf16.mxu0 0
  %205 = vmatpush1.bf16.msra.mxu0 0
  %206 = vmatprep.subr.bf16.mxu0 0
  %207 = vmatpush1.bf16.msra.mxu0 0
  %208 = vmatprep.subr.bf16.mxu0 0
  %209 = vmatpush1.bf16.msra.mxu0 0
  %210 = vmatprep.subr.bf16.mxu0 0
  %211 = vmatpush1.bf16.msra.mxu0 0
  %212 = vmatprep.subr.bf16.mxu0 0
  %213 = vmatpush1.bf16.msra.mxu0 0
  %214 = vmatprep.subr.bf16.mxu0 0
  %215 = vmatpush1.bf16.msra.mxu0 0
  %216 = vmatprep.subr.bf16.mxu0 0
  %217 = vmatpush1.bf16.msra.mxu0 0
  %218 = vmatprep.subr.bf16.mxu0 0
  %219 = vmatpush1.bf16.msra.mxu0 0
  %220 = vmatprep.mubr.bf16.mxu0 0
  %221 = vmatmul.mubr.bf16.gmra.mrb[0].mxu0 %v186
  %v222 = vpop.f32.mrb[0].mxu0
  %v223 = vadd.f32 %v85, %v222
  %v224 = vpop.f32.mrb[0].mxu0
  %v225 = vpop.f32.mrb[0].mxu0
  %v226 = vadd.f32 %v85, %v225
  %v227 = vpop.f32.mrb[0].mxu0
  %228 = vdwg.mxu0
  %v229 = vld [vmem:[%s8] sm:$0x1]
  %v230 = vld [vmem:[%s9] sm:$0x1]
  %v231 = vadd.f32 %v176, %v179
  %v232 = vrot.slane %v231, 4
  %v233 = vadd.f32 %v231, %v232
  %v234 = vrot.slane %v233, 2
  %v235 = vadd.f32 %v233, %v234
  %v236 = vrot.slane %v235, 1
  %v237 = vadd.f32 %v235, %v236
  %v238 = vadd.f32 %v237, 0.0
  %v239 = vadd.f32 %v223, %v226
  %v240 = vrot.slane %v239, 4
  %v241 = vadd.f32 %v239, %v240
  %v242 = vrot.slane %v241, 2
  %v243 = vadd.f32 %v241, %v242
  %v244 = vrot.slane %v243, 1
  %v245 = vadd.f32 %v243, %v244
  %v246 = vadd.f32 %v238, %v245
  %v247 = vmul.f32 %v176, %v176
  %v248 = vmul.f32 %v179, %v179
  %v249 = vadd.f32 %v247, %v248
  %v250 = vrot.slane %v249, 4
  %v251 = vadd.f32 %v249, %v250
  %v252 = vrot.slane %v251, 2
  %v253 = vadd.f32 %v251, %v252
  %v254 = vrot.slane %v253, 1
  %v255 = vadd.f32 %v253, %v254
  %v256 = vadd.f32 %v255, 0.0
  %v257 = vmul.f32 %v223, %v223
  %v258 = vmul.f32 %v226, %v226
  %v259 = vadd.f32 %v257, %v258
  %v260 = vrot.slane %v259, 4
  %v261 = vadd.f32 %v259, %v260
  %v262 = vrot.slane %v261, 2
  %v263 = vadd.f32 %v261, %v262
  %v264 = vrot.slane %v263, 1
  %v265 = vadd.f32 %v263, %v264
  %v266 = vadd.f32 %v256, %v265
  %v267 = vmul.f32 %v246, 0.03125
  %v268 = vmul.f32 %v266, 0.03125
  %v269 = vmul.f32 %v267, %v267
  %v270 = vsub.f32 %v268, %v269
  %v271 = vmax.f32 %v270, 0.0
  %v272 = vadd.f32 %v271, 1e-05
  %v273 = vrsqrt.pop %v272
  %v274 = vmul.f32 %v273, %v229
  %v275 = vmul.f32 %v267, %v274
  %v276 = vsub.f32 %v230, %v275
  %v277 = vlaneseq
  %v278 = vshrl.u32 %v277, 7
  %v279 = vsub.s32 0, %v278
  %v280 = vrot.slane %v274, %v279
  %v281 = vmul.f32 %v176, %v280
  %v282 = vmul.f32 %v179, %v280
  %v284 = vlaneseq
  %v285 = vshrl.u32 %v284, 7
  %v286 = vsub.s32 0, %v285
  %v287 = vrot.slane %v276, %v286
  %v289 = vadd.f32 %v281, %v287
  %v290 = vadd.f32 %v282, %v287
  %v291 = vxor.u32 %v289, 2147483648
  %v292 = vxor.u32 %v290, 2147483648
  %v293 = vmul.f32 %v291, 1.442695
  %v294 = vpow.pop %v293
  %v295 = vmul.f32 %v292, 1.442695
  %v296 = vpow.pop %v295
  %v297 = vadd.f32 %v294, 1.0
  %v298 = vadd.f32 %v296, 1.0
  %v299 = vrcp.pop %v297
  %v300 = vmul.f32 1.0, %v299
  %v301 = vrcp.pop %v298
  %v302 = vmul.f32 1.0, %v301
  %v303 = vmul.f32 %v289, %v300
  %v304 = vmul.f32 %v290, %v302
  %v305 = vmul.f32 %v223, %v280
  %v306 = vmul.f32 %v226, %v280
  %v307 = vadd.f32 %v305, %v287
  %v308 = vadd.f32 %v306, %v287
  %v309 = vxor.u32 %v307, 2147483648
  %v310 = vxor.u32 %v308, 2147483648
  %v311 = vmul.f32 %v309, 1.442695
  %v312 = vpow.pop %v311
  %v313 = vmul.f32 %v310, 1.442695
  %v314 = vpow.pop %v313
  %v315 = vadd.f32 %v312, 1.0
  %v316 = vadd.f32 %v314, 1.0
  %v317 = vrcp.pop %v315
  %v318 = vmul.f32 1.0, %v317
  %v319 = vrcp.pop %v316
  %v320 = vmul.f32 1.0, %v319
  %v321 = vmul.f32 %v307, %v318
  %v322 = vmul.f32 %v308, %v320
  %v323 = vrot.slane %v321, 7
  %v324 = vrot.slane %v322, 7
  %v325 = vlaneseq
  %v326 = vshrl.u32 %v325, 7
  %vm327 = vcmp.lt.s32.totalorder %v326, 1
  %v328 = vsel %vm327, %v323, %v324
  %v329 = vsel %vm327, %v324, %v323
  %v330 = vadd.s32 %v326, 8
  %vm331 = vcmp.lt.s32.totalorder %v326, 0
  %v332 = vsub.s32 0, %v326
  %v333 = vsel %vm331, %v332, %v326
  %v334 = vshrl.u32 %v333, 3
  %v335 = vand.u32 %v333, 7
  %v336 = vsub.s32 0, %v335
  %v337 = vsel %vm331, %v336, %v335
  %vm338 = vcmp.lt.s32.totalorder %v330, 0
  %v339 = vsub.s32 0, %v330
  %v340 = vsel %vm338, %v339, %v330
  %v341 = vshrl.u32 %v340, 3
  %v342 = vand.u32 %v340, 7
  %v343 = vsub.s32 0, %v342
  %v344 = vsel %vm338, %v343, %v342
  %vm345 = vcmp.ne.s32.totalorder %v337, 0
  %vm346 = vcmp.ne.s32.totalorder %v344, 0
  %vm347 = vcmp.lt.s32.totalorder %v337, 0
  %vm348 = vcmp.lt.s32.totalorder %v344, 0
  %vm349 = vmand %vm347, %vm345
  %vm350 = vmand %vm348, %vm346
  %v351 = vadd.s32 %v337, 8
  %v352 = vadd.s32 %v344, 8
  %v353 = vsel %vm349, %v351, %v337
  %v354 = vsel %vm350, %v352, %v344
  %vm355 = vcmp.eq.s32.totalorder %v353, 0
  %vm356 = vcmp.eq.s32.totalorder %v354, 0
  %v357 = vsel %vm355, 0.0, %v329
  %v358 = vsel %vm356, 0.0, %v328
  %v359 = vpack.c.bf16 %v358, %v357
  %v360 = vpack.c.bf16 %v304, %v303
  %v361 = vpack.c.bf16 %v322, %v321
  %v362 = vld [vmem:[%s10] sm:$0xf]
  %v363 = vld [vmem:[%s10 + $0x4] sm:$0xf]
  %v364 = vld [vmem:[%s10 + $0x8] sm:$0xf]
  %v365 = vld [vmem:[%s10 + $0xc] sm:$0xf]
  %v366 = vld [vmem:[%s10 + $0x10] sm:$0xf]
  %v367 = vld [vmem:[%s10 + $0x14] sm:$0xf]
  %v368 = vld [vmem:[%s10 + $0x18] sm:$0xf]
  %v369 = vld [vmem:[%s10 + $0x1c] sm:$0xf]
  %v370 = vld [vmem:[%s10 + $0x20] sm:$0xf]
  %v371 = vld [vmem:[%s10 + $0x24] sm:$0xf]
  %v372 = vld [vmem:[%s10 + $0x28] sm:$0xf]
  %v373 = vld [vmem:[%s10 + $0x2c] sm:$0xf]
  %v374 = vld [vmem:[%s10 + $0x30] sm:$0xf]
  %v375 = vld [vmem:[%s10 + $0x34] sm:$0xf]
  %v376 = vld [vmem:[%s10 + $0x38] sm:$0xf]
  %v377 = vld [vmem:[%s10 + $0x3c] sm:$0xf]
  %v378 = vld [vmem:[%s10 + $0x40] sm:$0xf]
  %v379 = vld [vmem:[%s10 + $0x44] sm:$0xf]
  %v380 = vld [vmem:[%s10 + $0x48] sm:$0xf]
  %v381 = vld [vmem:[%s10 + $0x4c] sm:$0xf]
  %v382 = vld [vmem:[%s10 + $0x50] sm:$0xf]
  %v383 = vld [vmem:[%s10 + $0x54] sm:$0xf]
  %v384 = vld [vmem:[%s10 + $0x58] sm:$0xf]
  %v385 = vld [vmem:[%s10 + $0x5c] sm:$0xf]
  %v386 = vld [vmem:[%s10 + $0x60] sm:$0xf]
  %v387 = vld [vmem:[%s10 + $0x64] sm:$0xf]
  %v388 = vld [vmem:[%s10 + $0x68] sm:$0xf]
  %v389 = vld [vmem:[%s10 + $0x6c] sm:$0xf]
  %v390 = vld [vmem:[%s10 + $0x70] sm:$0xf]
  %v391 = vld [vmem:[%s10 + $0x74] sm:$0xf]
  %v392 = vld [vmem:[%s10 + $0x78] sm:$0xf]
  %v393 = vld [vmem:[%s10 + $0x7c] sm:$0xf]
  %v394 = vld [vmem:[%s10 + $0x80] sm:$0xf]
  %v395 = vld [vmem:[%s10 + $0x84] sm:$0xf]
  %v396 = vld [vmem:[%s10 + $0x88] sm:$0xf]
  %v397 = vld [vmem:[%s10 + $0x8c] sm:$0xf]
  %v398 = vld [vmem:[%s10 + $0x90] sm:$0xf]
  %v399 = vld [vmem:[%s10 + $0x94] sm:$0xf]
  %v400 = vld [vmem:[%s10 + $0x98] sm:$0xf]
  %v401 = vld [vmem:[%s10 + $0x9c] sm:$0xf]
  %v402 = vld [vmem:[%s10 + $0xa0] sm:$0xf]
  %v403 = vld [vmem:[%s10 + $0xa4] sm:$0xf]
  %v404 = vld [vmem:[%s10 + $0xa8] sm:$0xf]
  %v405 = vld [vmem:[%s10 + $0xac] sm:$0xf]
  %v406 = vld [vmem:[%s10 + $0xb0] sm:$0xf]
  %v407 = vld [vmem:[%s10 + $0xb4] sm:$0xf]
  %v408 = vld [vmem:[%s10 + $0xb8] sm:$0xf]
  %v409 = vld [vmem:[%s10 + $0xbc] sm:$0xf]
  %v410 = vld [vmem:[%s11] sm:$0x1]
  %v412 = vlaneseq
  %v413 = vshrl.u32 %v412, 7
  %v414 = vsub.s32 0, %v413
  %v415 = vrot.slane %v410, %v414
  %v465 = vunpack.c.l.b16 %v362
  %v466 = vunpack.c.l.b16 %v363
  %v467 = vunpack.c.l.b16 %v364
  %v468 = vunpack.c.l.b16 %v365
  %v469 = vunpack.c.l.b16 %v366
  %v470 = vunpack.c.l.b16 %v367
  %v471 = vunpack.c.l.b16 %v368
  %v472 = vunpack.c.l.b16 %v369
  %v473 = vunpack.c.l.b16 %v370
  %v474 = vunpack.c.l.b16 %v371
  %v475 = vunpack.c.l.b16 %v372
  %v476 = vunpack.c.l.b16 %v373
  %v477 = vunpack.c.l.b16 %v374
  %v478 = vunpack.c.l.b16 %v375
  %v479 = vunpack.c.l.b16 %v376
  %v480 = vunpack.c.l.b16 %v377
  %v481 = vunpack.c.l.b16 %v378
  %v482 = vunpack.c.l.b16 %v379
  %v483 = vunpack.c.l.b16 %v380
  %v484 = vunpack.c.l.b16 %v381
  %v485 = vunpack.c.l.b16 %v382
  %v486 = vunpack.c.l.b16 %v383
  %v487 = vunpack.c.l.b16 %v384
  %v488 = vunpack.c.l.b16 %v385
  %v489 = vunpack.c.l.b16 %v386
  %v490 = vunpack.c.l.b16 %v387
  %v491 = vunpack.c.l.b16 %v388
  %v492 = vunpack.c.l.b16 %v389
  %v493 = vunpack.c.l.b16 %v390
  %v494 = vunpack.c.l.b16 %v391
  %v495 = vunpack.c.l.b16 %v392
  %v496 = vunpack.c.l.b16 %v393
  %v497 = vunpack.c.l.b16 %v394
  %v498 = vunpack.c.l.b16 %v395
  %v499 = vunpack.c.l.b16 %v396
  %v500 = vunpack.c.l.b16 %v397
  %v501 = vunpack.c.l.b16 %v398
  %v502 = vunpack.c.l.b16 %v399
  %v503 = vunpack.c.l.b16 %v400
  %v504 = vunpack.c.l.b16 %v401
  %v505 = vunpack.c.l.b16 %v402
  %v506 = vunpack.c.l.b16 %v403
  %v507 = vunpack.c.l.b16 %v404
  %v508 = vunpack.c.l.b16 %v405
  %v509 = vunpack.c.l.b16 %v406
  %v510 = vunpack.c.l.b16 %v407
  %v511 = vunpack.c.l.b16 %v408
  %v512 = vunpack.c.l.b16 %v409
  %v513 = vpack.c.b16 %v466, %v465
  %v514 = vpack.c.b16 %v468, %v467
  %v515 = vpack.c.b16 %v470, %v469
  %v516 = vpack.c.b16 %v472, %v471
  %v517 = vpack.c.b16 %v474, %v473
  %v518 = vpack.c.b16 %v476, %v475
  %v519 = vpack.c.b16 %v478, %v477
  %v520 = vpack.c.b16 %v480, %v479
  %v521 = vpack.c.b16 %v482, %v481
  %v522 = vpack.c.b16 %v484, %v483
  %v523 = vpack.c.b16 %v486, %v485
  %v524 = vpack.c.b16 %v488, %v487
  %v525 = vpack.c.b16 %v490, %v489
  %v526 = vpack.c.b16 %v492, %v491
  %v527 = vpack.c.b16 %v494, %v493
  %v528 = vpack.c.b16 %v496, %v495
  %v529 = vpack.c.b16 %v498, %v497
  %v530 = vpack.c.b16 %v500, %v499
  %v531 = vpack.c.b16 %v502, %v501
  %v532 = vpack.c.b16 %v504, %v503
  %v533 = vpack.c.b16 %v506, %v505
  %v534 = vpack.c.b16 %v508, %v507
  %v535 = vpack.c.b16 %v510, %v509
  %v536 = vpack.c.b16 %v512, %v511
  %561 = vmatprep.subr.bf16.mxu0 0
  %562 = vmatpush1.bf16.msra.mxu0 %v513
  %563 = vmatprep.subr.bf16.mxu0 0
  %564 = vmatpush1.bf16.msra.mxu0 %v514
  %565 = vmatprep.subr.bf16.mxu0 0
  %566 = vmatpush1.bf16.msra.mxu0 %v515
  %567 = vmatprep.subr.bf16.mxu0 0
  %568 = vmatpush1.bf16.msra.mxu0 %v516
  %569 = vmatprep.subr.bf16.mxu0 0
  %570 = vmatpush1.bf16.msra.mxu0 %v517
  %571 = vmatprep.subr.bf16.mxu0 0
  %572 = vmatpush1.bf16.msra.mxu0 %v518
  %573 = vmatprep.subr.bf16.mxu0 0
  %574 = vmatpush1.bf16.msra.mxu0 %v519
  %575 = vmatprep.subr.bf16.mxu0 0
  %576 = vmatpush1.bf16.msra.mxu0 %v520
  %577 = vmatprep.subr.bf16.mxu0 0
  %578 = vmatpush1.bf16.msra.mxu0 %v521
  %579 = vmatprep.subr.bf16.mxu0 0
  %580 = vmatpush1.bf16.msra.mxu0 %v522
  %581 = vmatprep.subr.bf16.mxu0 0
  %582 = vmatpush1.bf16.msra.mxu0 %v523
  %583 = vmatprep.subr.bf16.mxu0 0
  %584 = vmatpush1.bf16.msra.mxu0 %v524
  %585 = vmatprep.subr.bf16.mxu0 0
  %586 = vmatpush1.bf16.msra.mxu0 %v525
  %587 = vmatprep.subr.bf16.mxu0 0
  %588 = vmatpush1.bf16.msra.mxu0 %v526
  %589 = vmatprep.subr.bf16.mxu0 0
  %590 = vmatpush1.bf16.msra.mxu0 %v527
  %591 = vmatprep.subr.bf16.mxu0 0
  %592 = vmatpush1.bf16.msra.mxu0 %v528
  %593 = vmatprep.mubr.bf16.mxu0 %v360
  %594 = vmatmul.mubr.bf16.gmra.mrb[0].mxu0 %v359
  %v595 = vpop.f32.mrb[0].mxu0
  %v596 = vadd.f32 %v415, %v595
  %v597 = vpop.f32.mrb[0].mxu0
  %v598 = vpop.f32.mrb[0].mxu0
  %v599 = vadd.f32 %v415, %v598
  %v600 = vpop.f32.mrb[0].mxu0
  %601 = vdwg.mxu0
  %602 = vmatprep.subr.bf16.mxu0 0
  %603 = vmatpush1.bf16.msra.mxu0 %v529
  %604 = vmatprep.subr.bf16.mxu0 0
  %605 = vmatpush1.bf16.msra.mxu0 %v530
  %606 = vmatprep.subr.bf16.mxu0 0
  %607 = vmatpush1.bf16.msra.mxu0 %v531
  %608 = vmatprep.subr.bf16.mxu0 0
  %609 = vmatpush1.bf16.msra.mxu0 %v532
  %610 = vmatprep.subr.bf16.mxu0 0
  %611 = vmatpush1.bf16.msra.mxu0 %v533
  %612 = vmatprep.subr.bf16.mxu0 0
  %613 = vmatpush1.bf16.msra.mxu0 %v534
  %614 = vmatprep.subr.bf16.mxu0 0
  %615 = vmatpush1.bf16.msra.mxu0 %v535
  %616 = vmatprep.subr.bf16.mxu0 0
  %617 = vmatpush1.bf16.msra.mxu0 %v536
  %618 = vmatprep.subr.bf16.mxu0 0
  %619 = vmatpush1.bf16.msra.mxu0 0
  %620 = vmatprep.subr.bf16.mxu0 0
  %621 = vmatpush1.bf16.msra.mxu0 0
  %622 = vmatprep.subr.bf16.mxu0 0
  %623 = vmatpush1.bf16.msra.mxu0 0
  %624 = vmatprep.subr.bf16.mxu0 0
  %625 = vmatpush1.bf16.msra.mxu0 0
  %626 = vmatprep.subr.bf16.mxu0 0
  %627 = vmatpush1.bf16.msra.mxu0 0
  %628 = vmatprep.subr.bf16.mxu0 0
  %629 = vmatpush1.bf16.msra.mxu0 0
  %630 = vmatprep.subr.bf16.mxu0 0
  %631 = vmatpush1.bf16.msra.mxu0 0
  %632 = vmatprep.subr.bf16.mxu0 0
  %633 = vmatpush1.bf16.msra.mxu0 0
  %634 = vmatprep.mubr.bf16.mxu0 0
  %635 = vmatmul.mubr.bf16.gmra.mrb[0].mxu0 %v361
  %v636 = vpop.f32.mrb[0].mxu0
  %v637 = vadd.f32 %v596, %v636
  %v638 = vpop.f32.mrb[0].mxu0
  %v639 = vpop.f32.mrb[0].mxu0
  %v640 = vadd.f32 %v599, %v639
  %v641 = vpop.f32.mrb[0].mxu0
  %642 = vdwg.mxu0
  %v643 = vld [vmem:[%s12] sm:$0x1]
  %v644 = vld [vmem:[%s13] sm:$0x1]
  %v645 = vadd.f32 %v637, %v640
  %v646 = vrot.slane %v645, 4
  %v647 = vadd.f32 %v645, %v646
  %v648 = vrot.slane %v647, 2
  %v649 = vadd.f32 %v647, %v648
  %v650 = vrot.slane %v649, 1
  %v651 = vadd.f32 %v649, %v650
  %v652 = vadd.f32 %v651, 0.0
  %v653 = vmul.f32 %v637, %v637
  %v654 = vmul.f32 %v640, %v640
  %v655 = vadd.f32 %v653, %v654
  %v656 = vrot.slane %v655, 4
  %v657 = vadd.f32 %v655, %v656
  %v658 = vrot.slane %v657, 2
  %v659 = vadd.f32 %v657, %v658
  %v660 = vrot.slane %v659, 1
  %v661 = vadd.f32 %v659, %v660
  %v662 = vadd.f32 %v661, 0.0
  %v663 = vmul.f32 %v652, 0.0625
  %v664 = vmul.f32 %v662, 0.0625
  %v665 = vmul.f32 %v663, %v663
  %v666 = vsub.f32 %v664, %v665
  %v667 = vmax.f32 %v666, 0.0
  %v668 = vadd.f32 %v667, 1e-05
  %v669 = vrsqrt.pop %v668
  %v670 = vmul.f32 %v669, %v643
  %v671 = vmul.f32 %v663, %v670
  %v672 = vsub.f32 %v644, %v671
  %v673 = vlaneseq
  %v674 = vshrl.u32 %v673, 7
  %v675 = vsub.s32 0, %v674
  %v676 = vrot.slane %v670, %v675
  %v677 = vmul.f32 %v637, %v676
  %v678 = vmul.f32 %v640, %v676
  %v680 = vlaneseq
  %v681 = vshrl.u32 %v680, 7
  %v682 = vsub.s32 0, %v681
  %v683 = vrot.slane %v672, %v682
  %v685 = vadd.f32 %v677, %v683
  %v686 = vadd.f32 %v678, %v683
  %v687 = vxor.u32 %v685, 2147483648
  %v688 = vxor.u32 %v686, 2147483648
  %v689 = vmul.f32 %v687, 1.442695
  %v690 = vpow.pop %v689
  %v691 = vmul.f32 %v688, 1.442695
  %v692 = vpow.pop %v691
  %v693 = vadd.f32 %v690, 1.0
  %v694 = vadd.f32 %v692, 1.0
  %v695 = vrcp.pop %v693
  %v696 = vmul.f32 1.0, %v695
  %v697 = vrcp.pop %v694
  %v698 = vmul.f32 1.0, %v697
  %v699 = vmul.f32 %v685, %v696
  %v700 = vmul.f32 %v686, %v698
  %v701 = vpack.c.bf16 %v700, %v699
  %v702 = vld [vmem:[%s14] sm:$0xf]
  %v703 = vld [vmem:[%s14 + $0x4] sm:$0xf]
  %v704 = vld [vmem:[%s14 + $0x8] sm:$0xf]
  %v705 = vld [vmem:[%s14 + $0xc] sm:$0xf]
  %v706 = vld [vmem:[%s14 + $0x10] sm:$0xf]
  %v707 = vld [vmem:[%s14 + $0x14] sm:$0xf]
  %v708 = vld [vmem:[%s14 + $0x18] sm:$0xf]
  %v709 = vld [vmem:[%s14 + $0x1c] sm:$0xf]
  %v710 = vld [vmem:[%s14 + $0x20] sm:$0xf]
  %v711 = vld [vmem:[%s14 + $0x24] sm:$0xf]
  %v712 = vld [vmem:[%s14 + $0x28] sm:$0xf]
  %v713 = vld [vmem:[%s14 + $0x2c] sm:$0xf]
  %v714 = vld [vmem:[%s14 + $0x30] sm:$0xf]
  %v715 = vld [vmem:[%s14 + $0x34] sm:$0xf]
  %v716 = vld [vmem:[%s14 + $0x38] sm:$0xf]
  %v717 = vld [vmem:[%s14 + $0x3c] sm:$0xf]
  %v718 = vld [vmem:[%s15] sm:$0x1]
  %v720 = vlaneseq
  %v721 = vshrl.u32 %v720, 7
  %v722 = vsub.s32 0, %v721
  %v723 = vrot.slane %v718, %v722
  %v741 = vunpack.c.l.b16 %v702
  %v742 = vunpack.c.l.b16 %v703
  %v743 = vunpack.c.l.b16 %v704
  %v744 = vunpack.c.l.b16 %v705
  %v745 = vunpack.c.l.b16 %v706
  %v746 = vunpack.c.l.b16 %v707
  %v747 = vunpack.c.l.b16 %v708
  %v748 = vunpack.c.l.b16 %v709
  %v749 = vunpack.c.l.b16 %v710
  %v750 = vunpack.c.l.b16 %v711
  %v751 = vunpack.c.l.b16 %v712
  %v752 = vunpack.c.l.b16 %v713
  %v753 = vunpack.c.l.b16 %v714
  %v754 = vunpack.c.l.b16 %v715
  %v755 = vunpack.c.l.b16 %v716
  %v756 = vunpack.c.l.b16 %v717
  %v757 = vpack.c.b16 %v742, %v741
  %v758 = vpack.c.b16 %v744, %v743
  %v759 = vpack.c.b16 %v746, %v745
  %v760 = vpack.c.b16 %v748, %v747
  %v761 = vpack.c.b16 %v750, %v749
  %v762 = vpack.c.b16 %v752, %v751
  %v763 = vpack.c.b16 %v754, %v753
  %v764 = vpack.c.b16 %v756, %v755
  %773 = vmatprep.subr.bf16.mxu0 0
  %774 = vmatpush1.bf16.msra.mxu0 %v757
  %775 = vmatprep.subr.bf16.mxu0 0
  %776 = vmatpush1.bf16.msra.mxu0 %v758
  %777 = vmatprep.subr.bf16.mxu0 0
  %778 = vmatpush1.bf16.msra.mxu0 %v759
  %779 = vmatprep.subr.bf16.mxu0 0
  %780 = vmatpush1.bf16.msra.mxu0 %v760
  %781 = vmatprep.subr.bf16.mxu0 0
  %782 = vmatpush1.bf16.msra.mxu0 %v761
  %783 = vmatprep.subr.bf16.mxu0 0
  %784 = vmatpush1.bf16.msra.mxu0 %v762
  %785 = vmatprep.subr.bf16.mxu0 0
  %786 = vmatpush1.bf16.msra.mxu0 %v763
  %787 = vmatprep.subr.bf16.mxu0 0
  %788 = vmatpush1.bf16.msra.mxu0 %v764
  %789 = vmatprep.subr.bf16.mxu0 0
  %790 = vmatpush1.bf16.msra.mxu0 0
  %791 = vmatprep.subr.bf16.mxu0 0
  %792 = vmatpush1.bf16.msra.mxu0 0
  %793 = vmatprep.subr.bf16.mxu0 0
  %794 = vmatpush1.bf16.msra.mxu0 0
  %795 = vmatprep.subr.bf16.mxu0 0
  %796 = vmatpush1.bf16.msra.mxu0 0
  %797 = vmatprep.subr.bf16.mxu0 0
  %798 = vmatpush1.bf16.msra.mxu0 0
  %799 = vmatprep.subr.bf16.mxu0 0
  %800 = vmatpush1.bf16.msra.mxu0 0
  %801 = vmatprep.subr.bf16.mxu0 0
  %802 = vmatpush1.bf16.msra.mxu0 0
  %803 = vmatprep.subr.bf16.mxu0 0
  %804 = vmatpush1.bf16.msra.mxu0 0
  %805 = vmatprep.mubr.bf16.mxu0 0
  %806 = vmatmul.mubr.bf16.gmra.mrb[0].mxu0 %v701
  %v807 = vpop.f32.mrb[0].mxu0
  %v808 = vadd.f32 %v723, %v807
  %v809 = vpop.f32.mrb[0].mxu0
  %v810 = vpop.f32.mrb[0].mxu0
  %v811 = vadd.f32 %v723, %v810
  %v812 = vpop.f32.mrb[0].mxu0
  %813 = vdwg.mxu0
  %v814 = vld [vmem:[%s16] sm:$0x1]
  %v815 = vld [vmem:[%s17] sm:$0x1]
  %v816 = vadd.f32 %v808, %v811
  %v817 = vrot.slane %v816, 4
  %v818 = vadd.f32 %v816, %v817
  %v819 = vrot.slane %v818, 2
  %v820 = vadd.f32 %v818, %v819
  %v821 = vrot.slane %v820, 1
  %v822 = vadd.f32 %v820, %v821
  %v823 = vadd.f32 %v822, 0.0
  %v824 = vmul.f32 %v808, %v808
  %v825 = vmul.f32 %v811, %v811
  %v826 = vadd.f32 %v824, %v825
  %v827 = vrot.slane %v826, 4
  %v828 = vadd.f32 %v826, %v827
  %v829 = vrot.slane %v828, 2
  %v830 = vadd.f32 %v828, %v829
  %v831 = vrot.slane %v830, 1
  %v832 = vadd.f32 %v830, %v831
  %v833 = vadd.f32 %v832, 0.0
  %v834 = vmul.f32 %v823, 0.0625
  %v835 = vmul.f32 %v833, 0.0625
  %v836 = vmul.f32 %v834, %v834
  %v837 = vsub.f32 %v835, %v836
  %v838 = vmax.f32 %v837, 0.0
  %v839 = vadd.f32 %v838, 1e-05
  %v840 = vrsqrt.pop %v839
  %v841 = vmul.f32 %v840, %v814
  %v842 = vmul.f32 %v834, %v841
  %v843 = vsub.f32 %v815, %v842
  %v844 = vlaneseq
  %v845 = vshrl.u32 %v844, 7
  %v846 = vsub.s32 0, %v845
  %v847 = vrot.slane %v841, %v846
  %v848 = vmul.f32 %v808, %v847
  %v849 = vmul.f32 %v811, %v847
  %v851 = vlaneseq
  %v852 = vshrl.u32 %v851, 7
  %v853 = vsub.s32 0, %v852
  %v854 = vrot.slane %v843, %v853
  %v856 = vadd.f32 %v848, %v854
  %v857 = vadd.f32 %v849, %v854
  %v858 = vld [vmem:[%s2] sm:$0xf]
  %v859 = vld [vmem:[%s2 + $0x4] sm:$0xf]
  %v860 = vld [vmem:[%s2 + $0x8] sm:$0xf]
  %v861 = vld [vmem:[%s2 + $0xc] sm:$0xf]
  %v862 = vld [vmem:[%s2 + $0x10] sm:$0xf]
  %v863 = vld [vmem:[%s2 + $0x14] sm:$0xf]
  %v864 = vld [vmem:[%s2 + $0x18] sm:$0xf]
  %v865 = vld [vmem:[%s2 + $0x1c] sm:$0xf]
  %v866 = vld [vmem:[%s2 + $0x20] sm:$0xf]
  %v867 = vld [vmem:[%s2 + $0x24] sm:$0xf]
  %v868 = vld [vmem:[%s2 + $0x28] sm:$0xf]
  %v869 = vld [vmem:[%s2 + $0x2c] sm:$0xf]
  %v870 = vld [vmem:[%s2 + $0x30] sm:$0xf]
  %v871 = vld [vmem:[%s2 + $0x34] sm:$0xf]
  %v872 = vld [vmem:[%s2 + $0x38] sm:$0xf]
  %v873 = vld [vmem:[%s2 + $0x3c] sm:$0xf]
  %v874 = vld [vmem:[%s3] sm:$0x1]
  %v876 = vlaneseq
  %v877 = vshrl.u32 %v876, 7
  %v878 = vsub.s32 0, %v877
  %v879 = vrot.slane %v874, %v878
  %v897 = vunpack.c.l.b16 %v858
  %v898 = vunpack.c.l.b16 %v859
  %v899 = vunpack.c.l.b16 %v860
  %v900 = vunpack.c.l.b16 %v861
  %v901 = vunpack.c.l.b16 %v862
  %v902 = vunpack.c.l.b16 %v863
  %v903 = vunpack.c.l.b16 %v864
  %v904 = vunpack.c.l.b16 %v865
  %v905 = vunpack.c.l.b16 %v866
  %v906 = vunpack.c.l.b16 %v867
  %v907 = vunpack.c.l.b16 %v868
  %v908 = vunpack.c.l.b16 %v869
  %v909 = vunpack.c.l.b16 %v870
  %v910 = vunpack.c.l.b16 %v871
  %v911 = vunpack.c.l.b16 %v872
  %v912 = vunpack.c.l.b16 %v873
  %v913 = vpack.c.b16 %v898, %v897
  %v914 = vpack.c.b16 %v900, %v899
  %v915 = vpack.c.b16 %v902, %v901
  %v916 = vpack.c.b16 %v904, %v903
  %v917 = vpack.c.b16 %v906, %v905
  %v918 = vpack.c.b16 %v908, %v907
  %v919 = vpack.c.b16 %v910, %v909
  %v920 = vpack.c.b16 %v912, %v911
  %929 = vmatprep.subr.bf16.mxu0 0
  %930 = vmatpush1.bf16.msra.mxu0 %v913
  %931 = vmatprep.subr.bf16.mxu0 0
  %932 = vmatpush1.bf16.msra.mxu0 %v914
  %933 = vmatprep.subr.bf16.mxu0 0
  %934 = vmatpush1.bf16.msra.mxu0 %v915
  %935 = vmatprep.subr.bf16.mxu0 0
  %936 = vmatpush1.bf16.msra.mxu0 %v916
  %937 = vmatprep.subr.bf16.mxu0 0
  %938 = vmatpush1.bf16.msra.mxu0 %v917
  %939 = vmatprep.subr.bf16.mxu0 0
  %940 = vmatpush1.bf16.msra.mxu0 %v918
  %941 = vmatprep.subr.bf16.mxu0 0
  %942 = vmatpush1.bf16.msra.mxu0 %v919
  %943 = vmatprep.subr.bf16.mxu0 0
  %944 = vmatpush1.bf16.msra.mxu0 %v920
  %945 = vmatprep.subr.bf16.mxu0 0
  %946 = vmatpush1.bf16.msra.mxu0 0
  %947 = vmatprep.subr.bf16.mxu0 0
  %948 = vmatpush1.bf16.msra.mxu0 0
  %949 = vmatprep.subr.bf16.mxu0 0
  %950 = vmatpush1.bf16.msra.mxu0 0
  %951 = vmatprep.subr.bf16.mxu0 0
  %952 = vmatpush1.bf16.msra.mxu0 0
  %953 = vmatprep.subr.bf16.mxu0 0
  %954 = vmatpush1.bf16.msra.mxu0 0
  %955 = vmatprep.subr.bf16.mxu0 0
  %956 = vmatpush1.bf16.msra.mxu0 0
  %957 = vmatprep.subr.bf16.mxu0 0
  %958 = vmatpush1.bf16.msra.mxu0 0
  %959 = vmatprep.subr.bf16.mxu0 0
  %960 = vmatpush1.bf16.msra.mxu0 0
  %961 = vmatprep.mubr.bf16.mxu0 0
  %962 = vmatmul.mubr.bf16.gmra.mrb[0].mxu0 %v91
  %v963 = vpop.f32.mrb[0].mxu0
  %v964 = vadd.f32 %v879, %v963
  %v965 = vpop.f32.mrb[0].mxu0
  %v966 = vpop.f32.mrb[0].mxu0
  %v967 = vadd.f32 %v879, %v966
  %v968 = vpop.f32.mrb[0].mxu0
  %969 = vdwg.mxu0
  %v970 = vld [vmem:[%s4] sm:$0x1]
  %v971 = vld [vmem:[%s5] sm:$0x1]
  %v972 = vadd.f32 %v964, %v967
  %v973 = vrot.slane %v972, 4
  %v974 = vadd.f32 %v972, %v973
  %v975 = vrot.slane %v974, 2
  %v976 = vadd.f32 %v974, %v975
  %v977 = vrot.slane %v976, 1
  %v978 = vadd.f32 %v976, %v977
  %v979 = vadd.f32 %v978, 0.0
  %v980 = vmul.f32 %v964, %v964
  %v981 = vmul.f32 %v967, %v967
  %v982 = vadd.f32 %v980, %v981
  %v983 = vrot.slane %v982, 4
  %v984 = vadd.f32 %v982, %v983
  %v985 = vrot.slane %v984, 2
  %v986 = vadd.f32 %v984, %v985
  %v987 = vrot.slane %v986, 1
  %v988 = vadd.f32 %v986, %v987
  %v989 = vadd.f32 %v988, 0.0
  %v990 = vmul.f32 %v979, 0.0625
  %v991 = vmul.f32 %v989, 0.0625
  %v992 = vmul.f32 %v990, %v990
  %v993 = vsub.f32 %v991, %v992
  %v994 = vmax.f32 %v993, 0.0
  %v995 = vadd.f32 %v994, 1e-05
  %v996 = vrsqrt.pop %v995
  %v997 = vmul.f32 %v996, %v970
  %v998 = vmul.f32 %v990, %v997
  %v999 = vsub.f32 %v971, %v998
  %v1000 = vlaneseq
  %v1001 = vshrl.u32 %v1000, 7
  %v1002 = vsub.s32 0, %v1001
  %v1003 = vrot.slane %v997, %v1002
  %v1004 = vmul.f32 %v964, %v1003
  %v1005 = vmul.f32 %v967, %v1003
  %v1007 = vlaneseq
  %v1008 = vshrl.u32 %v1007, 7
  %v1009 = vsub.s32 0, %v1008
  %v1010 = vrot.slane %v999, %v1009
  %v1012 = vadd.f32 %v1004, %v1010
  %v1013 = vadd.f32 %v1005, %v1010
  %v1014 = vadd.f32 %v856, %v1012
  %v1015 = vadd.f32 %v857, %v1013
  %v1016 = vxor.u32 %v1014, 2147483648
  %v1017 = vxor.u32 %v1015, 2147483648
  %v1018 = vmul.f32 %v1016, 1.442695
  %v1019 = vpow.pop %v1018
  %v1020 = vmul.f32 %v1017, 1.442695
  %v1021 = vpow.pop %v1020
  %v1022 = vadd.f32 %v1019, 1.0
  %v1023 = vadd.f32 %v1021, 1.0
  %v1024 = vrcp.pop %v1022
  %v1025 = vmul.f32 1.0, %v1024
  %v1026 = vrcp.pop %v1023
  %v1027 = vmul.f32 1.0, %v1026
  %v1028 = vmul.f32 %v1014, %v1025
  %v1029 = vmul.f32 %v1015, %v1027
  %v1030 = vpack.c.bf16 %v1029, %v1028
  %v1032 = vunpack.c.l.b16 %v1030
  %v1033 = vunpack.c.h.b16 %v1030
  %v1034 = vpack.c.b16 %v1032, %v1032
  %v1035 = vpack.c.b16 %v1033, %v1033
  %1038 = vst [vmem:[%s18] sm:$0xf] %v1034
  %1039 = vst [vmem:[%s18 + $0x4] sm:$0xf] %v1035
  // Predicated region
  $region74: #{resnext_forward.6} parent=0 // pred_check
    _
  $region75: #{resnext_forward.6} parent=0 // pred_check_branch
    %1041 = sbr.rel (0) target = $region77
  $region76: #{resnext_forward.6} parent=0 // pred_region
    _
  $region77: #{resnext_forward.6} parent=0 // pred_fallthru
    _
  // Predicated region
  $region78: #{resnext_forward.6} parent=0 // pred_check
    _
  $region79: #{resnext_forward.6} parent=0 // pred_check_branch
    %1043 = sbr.rel (0) target = $region81
  $region80: #{resnext_forward.6} parent=0 // pred_region
    _
  $region81: #{resnext_forward.6} parent=0 // pred_fallthru
    _

// kernel: resnext_forward.8
$region0: #{resnext_forward.8}
  #allocation0 [shape = 'u32[]', space=smem, size = 0x4, offset = 0x4, fixed_abs, tag = 'smem constant byte address 0x4 - core index']
  #allocation1 [shape = 'u32[144,128]{1,0:T(1,128)}', space=vmem, size = 0x12000, scoped, tag = 'internal scratch']
  %s0 = inlined_call_operand.vmem [shape: bf16[8,128], index: 0, kind: input, shape index: {}]
  %s1 = inlined_call_operand.vmem [shape: bf16[8,128], index: 1, kind: input, shape index: {}]
  %s2 = inlined_call_operand.vmem [shape: bf16[128,128], index: 2, kind: input, shape index: {}]
  %s3 = inlined_call_operand.vmem [shape: f32[1,128], index: 3, kind: input, shape index: {}]
  %s4 = inlined_call_operand.vmem [shape: f32[1,128], index: 4, kind: input, shape index: {}]
  %s5 = inlined_call_operand.vmem [shape: f32[1,128], index: 5, kind: input, shape index: {}]
  %s6 = inlined_call_operand.vmem [shape: bf16[128,128], index: 6, kind: input, shape index: {}]
  %s7 = inlined_call_operand.vmem [shape: f32[1,128], index: 7, kind: input, shape index: {}]
  %s8 = inlined_call_operand.vmem [shape: f32[1,128], index: 8, kind: input, shape index: {}]
  %s9 = inlined_call_operand.vmem [shape: f32[1,128], index: 9, kind: input, shape index: {}]
  %s10 = inlined_call_operand.vmem [shape: bf16[384,128], index: 10, kind: input, shape index: {}]
  %s11 = inlined_call_operand.vmem [shape: f32[1,128], index: 11, kind: input, shape index: {}]
  %s12 = inlined_call_operand.vmem [shape: f32[1,128], index: 12, kind: input, shape index: {}]
  %s13 = inlined_call_operand.vmem [shape: f32[1,128], index: 13, kind: input, shape index: {}]
  %s14 = inlined_call_operand.vmem [shape: bf16[128,128], index: 14, kind: input, shape index: {}]
  %s15 = inlined_call_operand.vmem [shape: f32[1,128], index: 15, kind: input, shape index: {}]
  %s16 = inlined_call_operand.vmem [shape: f32[1,128], index: 16, kind: input, shape index: {}]
  %s17 = inlined_call_operand.vmem [shape: f32[1,128], index: 17, kind: input, shape index: {}]
  %s18 = inlined_call_operand.vmem [shape: bf16[8,128], index: 18, kind: output, shape index: {}]
  %s19 = sld [smem:[#allocation0]]
  $region82: #{resnext_forward.8} parent=0
    _
  %s21 = ssub.s32 1, %s19
  %s22 = scalar_select 0, %s21, %s19
  // Predicated region
  $region2: #{resnext_forward.8} parent=0 // pred_check
    _
  $region3: #{resnext_forward.8} parent=0 // pred_check_branch
    %24 = sbr.rel (0) target = $region5
  $region4: #{resnext_forward.8} parent=0 // pred_region
    _
  $region5: #{resnext_forward.8} parent=0 // pred_fallthru
    _
  // Predicated region
  $region6: #{resnext_forward.8} parent=0 // pred_check
    _
  $region7: #{resnext_forward.8} parent=0 // pred_check_branch
    %26 = sbr.rel (0) target = $region9
  $region8: #{resnext_forward.8} parent=0 // pred_region
    _
  $region9: #{resnext_forward.8} parent=0 // pred_fallthru
    _
  // Predicated region
  $region10: #{resnext_forward.8} parent=0 // pred_check
    _
  $region11: #{resnext_forward.8} parent=0 // pred_check_branch
    %28 = sbr.rel (0) target = $region13
  $region12: #{resnext_forward.8} parent=0 // pred_region
    _
  $region13: #{resnext_forward.8} parent=0 // pred_fallthru
    _
  // Predicated region
  $region14: #{resnext_forward.8} parent=0 // pred_check
    _
  $region15: #{resnext_forward.8} parent=0 // pred_check_branch
    %30 = sbr.rel (0) target = $region17
  $region16: #{resnext_forward.8} parent=0 // pred_region
    _
  $region17: #{resnext_forward.8} parent=0 // pred_fallthru
    _
  // Predicated region
  $region18: #{resnext_forward.8} parent=0 // pred_check
    _
  $region19: #{resnext_forward.8} parent=0 // pred_check_branch
    %32 = sbr.rel (0) target = $region21
  $region20: #{resnext_forward.8} parent=0 // pred_region
    _
  $region21: #{resnext_forward.8} parent=0 // pred_fallthru
    _
  // Predicated region
  $region22: #{resnext_forward.8} parent=0 // pred_check
    _
  $region23: #{resnext_forward.8} parent=0 // pred_check_branch
    %34 = sbr.rel (0) target = $region25
  $region24: #{resnext_forward.8} parent=0 // pred_region
    _
  $region25: #{resnext_forward.8} parent=0 // pred_fallthru
    _
  // Predicated region
  $region26: #{resnext_forward.8} parent=0 // pred_check
    _
  $region27: #{resnext_forward.8} parent=0 // pred_check_branch
    %36 = sbr.rel (0) target = $region29
  $region28: #{resnext_forward.8} parent=0 // pred_region
    _
  $region29: #{resnext_forward.8} parent=0 // pred_fallthru
    _
  // Predicated region
  $region30: #{resnext_forward.8} parent=0 // pred_check
    _
  $region31: #{resnext_forward.8} parent=0 // pred_check_branch
    %38 = sbr.rel (0) target = $region33
  $region32: #{resnext_forward.8} parent=0 // pred_region
    _
  $region33: #{resnext_forward.8} parent=0 // pred_fallthru
    _
  // Predicated region
  $region34: #{resnext_forward.8} parent=0 // pred_check
    _
  $region35: #{resnext_forward.8} parent=0 // pred_check_branch
    %40 = sbr.rel (0) target = $region37
  $region36: #{resnext_forward.8} parent=0 // pred_region
    _
  $region37: #{resnext_forward.8} parent=0 // pred_fallthru
    _
  // Predicated region
  $region38: #{resnext_forward.8} parent=0 // pred_check
    _
  $region39: #{resnext_forward.8} parent=0 // pred_check_branch
    %42 = sbr.rel (0) target = $region41
  $region40: #{resnext_forward.8} parent=0 // pred_region
    _
  $region41: #{resnext_forward.8} parent=0 // pred_fallthru
    _
  // Predicated region
  $region42: #{resnext_forward.8} parent=0 // pred_check
    _
  $region43: #{resnext_forward.8} parent=0 // pred_check_branch
    %44 = sbr.rel (0) target = $region45
  $region44: #{resnext_forward.8} parent=0 // pred_region
    _
  $region45: #{resnext_forward.8} parent=0 // pred_fallthru
    _
  // Predicated region
  $region46: #{resnext_forward.8} parent=0 // pred_check
    _
  $region47: #{resnext_forward.8} parent=0 // pred_check_branch
    %46 = sbr.rel (0) target = $region49
  $region48: #{resnext_forward.8} parent=0 // pred_region
    _
  $region49: #{resnext_forward.8} parent=0 // pred_fallthru
    _
  // Predicated region
  $region50: #{resnext_forward.8} parent=0 // pred_check
    _
  $region51: #{resnext_forward.8} parent=0 // pred_check_branch
    %48 = sbr.rel (0) target = $region53
  $region52: #{resnext_forward.8} parent=0 // pred_region
    _
  $region53: #{resnext_forward.8} parent=0 // pred_fallthru
    _
  // Predicated region
  $region54: #{resnext_forward.8} parent=0 // pred_check
    _
  $region55: #{resnext_forward.8} parent=0 // pred_check_branch
    %50 = sbr.rel (0) target = $region57
  $region56: #{resnext_forward.8} parent=0 // pred_region
    _
  $region57: #{resnext_forward.8} parent=0 // pred_fallthru
    _
  // Predicated region
  $region58: #{resnext_forward.8} parent=0 // pred_check
    _
  $region59: #{resnext_forward.8} parent=0 // pred_check_branch
    %52 = sbr.rel (0) target = $region61
  $region60: #{resnext_forward.8} parent=0 // pred_region
    _
  $region61: #{resnext_forward.8} parent=0 // pred_fallthru
    _
  // Predicated region
  $region62: #{resnext_forward.8} parent=0 // pred_check
    _
  $region63: #{resnext_forward.8} parent=0 // pred_check_branch
    %54 = sbr.rel (0) target = $region65
  $region64: #{resnext_forward.8} parent=0 // pred_region
    _
  $region65: #{resnext_forward.8} parent=0 // pred_fallthru
    _
  // Predicated region
  $region66: #{resnext_forward.8} parent=0 // pred_check
    _
  $region67: #{resnext_forward.8} parent=0 // pred_check_branch
    %56 = sbr.rel (0) target = $region69
  $region68: #{resnext_forward.8} parent=0 // pred_region
    _
  $region69: #{resnext_forward.8} parent=0 // pred_fallthru
    _
  // Predicated region
  $region70: #{resnext_forward.8} parent=0 // pred_check
    _
  $region71: #{resnext_forward.8} parent=0 // pred_check_branch
    %58 = sbr.rel (0) target = $region73
  $region72: #{resnext_forward.8} parent=0 // pred_region
    _
  $region73: #{resnext_forward.8} parent=0 // pred_fallthru
    _
  %v60 = vld [vmem:[%s0] sm:$0xf]
  %v61 = vld [vmem:[%s1] sm:$0xf]
  %v62 = vld [vmem:[%s6] sm:$0xf]
  %v63 = vld [vmem:[%s6 + $0x4] sm:$0xf]
  %v64 = vld [vmem:[%s6 + $0x8] sm:$0xf]
  %v65 = vld [vmem:[%s6 + $0xc] sm:$0xf]
  %v66 = vld [vmem:[%s6 + $0x10] sm:$0xf]
  %v67 = vld [vmem:[%s6 + $0x14] sm:$0xf]
  %v68 = vld [vmem:[%s6 + $0x18] sm:$0xf]
  %v69 = vld [vmem:[%s6 + $0x1c] sm:$0xf]
  %v70 = vld [vmem:[%s6 + $0x20] sm:$0xf]
  %v71 = vld [vmem:[%s6 + $0x24] sm:$0xf]
  %v72 = vld [vmem:[%s6 + $0x28] sm:$0xf]
  %v73 = vld [vmem:[%s6 + $0x2c] sm:$0xf]
  %v74 = vld [vmem:[%s6 + $0x30] sm:$0xf]
  %v75 = vld [vmem:[%s6 + $0x34] sm:$0xf]
  %v76 = vld [vmem:[%s6 + $0x38] sm:$0xf]
  %v77 = vld [vmem:[%s6 + $0x3c] sm:$0xf]
  %v78 = vld [vmem:[%s7] sm:$0x1]
  %v80 = vlaneseq
  %v81 = vshrl.u32 %v80, 7
  %v82 = vsub.s32 0, %v81
  %v83 = vrot.slane %v78, %v82
  %v101 = vunpack.c.l.b16 %v62
  %v102 = vunpack.c.l.b16 %v63
  %v103 = vunpack.c.l.b16 %v64
  %v104 = vunpack.c.l.b16 %v65
  %v105 = vunpack.c.l.b16 %v66
  %v106 = vunpack.c.l.b16 %v67
  %v107 = vunpack.c.l.b16 %v68
  %v108 = vunpack.c.l.b16 %v69
  %v109 = vunpack.c.l.b16 %v70
  %v110 = vunpack.c.l.b16 %v71
  %v111 = vunpack.c.l.b16 %v72
  %v112 = vunpack.c.l.b16 %v73
  %v113 = vunpack.c.l.b16 %v74
  %v114 = vunpack.c.l.b16 %v75
  %v115 = vunpack.c.l.b16 %v76
  %v116 = vunpack.c.l.b16 %v77
  %v117 = vpack.c.b16 %v102, %v101
  %v118 = vpack.c.b16 %v104, %v103
  %v119 = vpack.c.b16 %v106, %v105
  %v120 = vpack.c.b16 %v108, %v107
  %v121 = vpack.c.b16 %v110, %v109
  %v122 = vpack.c.b16 %v112, %v111
  %v123 = vpack.c.b16 %v114, %v113
  %v124 = vpack.c.b16 %v116, %v115
  %133 = vmatprep.subr.bf16.mxu0 0
  %134 = vmatpush1.bf16.msra.mxu0 %v117
  %135 = vmatprep.subr.bf16.mxu0 0
  %136 = vmatpush1.bf16.msra.mxu0 %v118
  %137 = vmatprep.subr.bf16.mxu0 0
  %138 = vmatpush1.bf16.msra.mxu0 %v119
  %139 = vmatprep.subr.bf16.mxu0 0
  %140 = vmatpush1.bf16.msra.mxu0 %v120
  %141 = vmatprep.subr.bf16.mxu0 0
  %142 = vmatpush1.bf16.msra.mxu0 %v121
  %143 = vmatprep.subr.bf16.mxu0 0
  %144 = vmatpush1.bf16.msra.mxu0 %v122
  %145 = vmatprep.subr.bf16.mxu0 0
  %146 = vmatpush1.bf16.msra.mxu0 %v123
  %147 = vmatprep.subr.bf16.mxu0 0
  %148 = vmatpush1.bf16.msra.mxu0 %v124
  %149 = vmatprep.subr.bf16.mxu0 0
  %150 = vmatpush1.bf16.msra.mxu0 0
  %151 = vmatprep.subr.bf16.mxu0 0
  %152 = vmatpush1.bf16.msra.mxu0 0
  %153 = vmatprep.subr.bf16.mxu0 0
  %154 = vmatpush1.bf16.msra.mxu0 0
  %155 = vmatprep.subr.bf16.mxu0 0
  %156 = vmatpush1.bf16.msra.mxu0 0
  %157 = vmatprep.subr.bf16.mxu0 0
  %158 = vmatpush1.bf16.msra.mxu0 0
  %159 = vmatprep.subr.bf16.mxu0 0
  %160 = vmatpush1.bf16.msra.mxu0 0
  %161 = vmatprep.subr.bf16.mxu0 0
  %162 = vmatpush1.bf16.msra.mxu0 0
  %163 = vmatprep.subr.bf16.mxu0 0
  %164 = vmatpush1.bf16.msra.mxu0 0
  %165 = vmatprep.mubr.bf16.mxu0 0
  %166 = vmatmul.mubr.bf16.gmra.mrb[0].mxu0 %v60
  %v167 = vpop.f32.mrb[0].mxu0
  %v168 = vadd.f32 %v83, %v167
  %v169 = vpop.f32.mrb[0].mxu0
  %v170 = vpop.f32.mrb[0].mxu0
  %v171 = vpop.f32.mrb[0].mxu0
  %172 = vdwg.mxu0
  %173 = vmatprep.subr.bf16.mxu0 0
  %174 = vmatpush1.bf16.msra.mxu0 %v117
  %175 = vmatprep.subr.bf16.mxu0 0
  %176 = vmatpush1.bf16.msra.mxu0 %v118
  %177 = vmatprep.subr.bf16.mxu0 0
  %178 = vmatpush1.bf16.msra.mxu0 %v119
  %179 = vmatprep.subr.bf16.mxu0 0
  %180 = vmatpush1.bf16.msra.mxu0 %v120
  %181 = vmatprep.subr.bf16.mxu0 0
  %182 = vmatpush1.bf16.msra.mxu0 %v121
  %183 = vmatprep.subr.bf16.mxu0 0
  %184 = vmatpush1.bf16.msra.mxu0 %v122
  %185 = vmatprep.subr.bf16.mxu0 0
  %186 = vmatpush1.bf16.msra.mxu0 %v123
  %187 = vmatprep.subr.bf16.mxu0 0
  %188 = vmatpush1.bf16.msra.mxu0 %v124
  %189 = vmatprep.subr.bf16.mxu0 0
  %190 = vmatpush1.bf16.msra.mxu0 0
  %191 = vmatprep.subr.bf16.mxu0 0
  %192 = vmatpush1.bf16.msra.mxu0 0
  %193 = vmatprep.subr.bf16.mxu0 0
  %194 = vmatpush1.bf16.msra.mxu0 0
  %195 = vmatprep.subr.bf16.mxu0 0
  %196 = vmatpush1.bf16.msra.mxu0 0
  %197 = vmatprep.subr.bf16.mxu0 0
  %198 = vmatpush1.bf16.msra.mxu0 0
  %199 = vmatprep.subr.bf16.mxu0 0
  %200 = vmatpush1.bf16.msra.mxu0 0
  %201 = vmatprep.subr.bf16.mxu0 0
  %202 = vmatpush1.bf16.msra.mxu0 0
  %203 = vmatprep.subr.bf16.mxu0 0
  %204 = vmatpush1.bf16.msra.mxu0 0
  %205 = vmatprep.mubr.bf16.mxu0 0
  %206 = vmatmul.mubr.bf16.gmra.mrb[0].mxu0 %v61
  %v207 = vpop.f32.mrb[0].mxu0
  %v208 = vadd.f32 %v83, %v207
  %v209 = vpop.f32.mrb[0].mxu0
  %v210 = vpop.f32.mrb[0].mxu0
  %v211 = vpop.f32.mrb[0].mxu0
  %212 = vdwg.mxu0
  %v213 = vld [vmem:[%s8] sm:$0x1]
  %v214 = vld [vmem:[%s9] sm:$0x1]
  %v215 = vrot.slane %v168, 4
  %v216 = vadd.f32 %v168, %v215
  %v217 = vrot.slane %v216, 2
  %v218 = vadd.f32 %v216, %v217
  %v219 = vrot.slane %v218, 1
  %v220 = vadd.f32 %v218, %v219
  %v221 = vadd.f32 %v220, 0.0
  %v222 = vrot.slane %v208, 4
  %v223 = vadd.f32 %v208, %v222
  %v224 = vrot.slane %v223, 2
  %v225 = vadd.f32 %v223, %v224
  %v226 = vrot.slane %v225, 1
  %v227 = vadd.f32 %v225, %v226
  %v228 = vadd.f32 %v221, %v227
  %v229 = vmul.f32 %v168, %v168
  %v230 = vrot.slane %v229, 4
  %v231 = vadd.f32 %v229, %v230
  %v232 = vrot.slane %v231, 2
  %v233 = vadd.f32 %v231, %v232
  %v234 = vrot.slane %v233, 1
  %v235 = vadd.f32 %v233, %v234
  %v236 = vadd.f32 %v235, 0.0
  %v237 = vmul.f32 %v208, %v208
  %v238 = vrot.slane %v237, 4
  %v239 = vadd.f32 %v237, %v238
  %v240 = vrot.slane %v239, 2
  %v241 = vadd.f32 %v239, %v240
  %v242 = vrot.slane %v241, 1
  %v243 = vadd.f32 %v241, %v242
  %v244 = vadd.f32 %v236, %v243
  %v245 = vmul.f32 %v228, 0.0625
  %v246 = vmul.f32 %v244, 0.0625
  %v247 = vmul.f32 %v245, %v245
  %v248 = vsub.f32 %v246, %v247
  %v249 = vmax.f32 %v248, 0.0
  %v250 = vadd.f32 %v249, 1e-05
  %v251 = vrsqrt.pop %v250
  %v252 = vmul.f32 %v251, %v213
  %v253 = vmul.f32 %v245, %v252
  %v254 = vsub.f32 %v214, %v253
  %v255 = vlaneseq
  %v256 = vshrl.u32 %v255, 7
  %v257 = vsub.s32 0, %v256
  %v258 = vrot.slane %v252, %v257
  %v259 = vmul.f32 %v168, %v258
  %v261 = vlaneseq
  %v262 = vshrl.u32 %v261, 7
  %v263 = vsub.s32 0, %v262
  %v264 = vrot.slane %v254, %v263
  %v266 = vadd.f32 %v259, %v264
  %v267 = vxor.u32 %v266, 2147483648
  %v268 = vmul.f32 %v267, 1.442695
  %v269 = vpow.pop %v268
  %v270 = vadd.f32 %v269, 1.0
  %v271 = vrcp.pop %v270
  %v272 = vmul.f32 1.0, %v271
  %v273 = vmul.f32 %v266, %v272
  %v274 = vmul.f32 %v208, %v258
  %v275 = vadd.f32 %v274, %v264
  %v276 = vxor.u32 %v275, 2147483648
  %v277 = vmul.f32 %v276, 1.442695
  %v278 = vpow.pop %v277
  %v279 = vadd.f32 %v278, 1.0
  %v280 = vrcp.pop %v279
  %v281 = vmul.f32 1.0, %v280
  %v282 = vmul.f32 %v275, %v281
  %v283 = vrot.slane %v282, 7
  %v284 = vlaneseq
  %v285 = vshrl.u32 %v284, 7
  %vm286 = vcmp.lt.s32.totalorder %v285, 0
  %v287 = vsub.s32 0, %v285
  %v288 = vsel %vm286, %v287, %v285
  %v289 = vshrl.u32 %v288, 2
  %v290 = vand.u32 %v288, 3
  %v291 = vsub.s32 0, %v290
  %v292 = vsel %vm286, %v291, %v290
  %vm293 = vcmp.ne.s32.totalorder %v292, 0
  %vm294 = vcmp.lt.s32.totalorder %v292, 0
  %vm295 = vmand %vm294, %vm293
  %v296 = vadd.s32 %v292, 4
  %v297 = vsel %vm295, %v296, %v292
  %vm298 = vcmp.eq.s32.totalorder %v297, 0
  %v299 = vsel %vm298, 0.0, %v283
  %v300 = vpack.c.bf16 %v299, %v299
  %v301 = vpack.c.bf16 %v273, %v273
  %v302 = vpack.c.bf16 %v282, %v282
  %v303 = vld [vmem:[%s10] sm:$0xf]
  %v304 = vld [vmem:[%s10 + $0x4] sm:$0xf]
  %v305 = vld [vmem:[%s10 + $0x8] sm:$0xf]
  %v306 = vld [vmem:[%s10 + $0xc] sm:$0xf]
  %v307 = vld [vmem:[%s10 + $0x10] sm:$0xf]
  %v308 = vld [vmem:[%s10 + $0x14] sm:$0xf]
  %v309 = vld [vmem:[%s10 + $0x18] sm:$0xf]
  %v310 = vld [vmem:[%s10 + $0x1c] sm:$0xf]
  %v311 = vld [vmem:[%s10 + $0x20] sm:$0xf]
  %v312 = vld [vmem:[%s10 + $0x24] sm:$0xf]
  %v313 = vld [vmem:[%s10 + $0x28] sm:$0xf]
  %v314 = vld [vmem:[%s10 + $0x2c] sm:$0xf]
  %v315 = vld [vmem:[%s10 + $0x30] sm:$0xf]
  %v316 = vld [vmem:[%s10 + $0x34] sm:$0xf]
  %v317 = vld [vmem:[%s10 + $0x38] sm:$0xf]
  %v318 = vld [vmem:[%s10 + $0x3c] sm:$0xf]
  %v319 = vld [vmem:[%s10 + $0x40] sm:$0xf]
  %v320 = vld [vmem:[%s10 + $0x44] sm:$0xf]
  %v321 = vld [vmem:[%s10 + $0x48] sm:$0xf]
  %v322 = vld [vmem:[%s10 + $0x4c] sm:$0xf]
  %v323 = vld [vmem:[%s10 + $0x50] sm:$0xf]
  %v324 = vld [vmem:[%s10 + $0x54] sm:$0xf]
  %v325 = vld [vmem:[%s10 + $0x58] sm:$0xf]
  %v326 = vld [vmem:[%s10 + $0x5c] sm:$0xf]
  %v327 = vld [vmem:[%s10 + $0x60] sm:$0xf]
  %v328 = vld [vmem:[%s10 + $0x64] sm:$0xf]
  %v329 = vld [vmem:[%s10 + $0x68] sm:$0xf]
  %v330 = vld [vmem:[%s10 + $0x6c] sm:$0xf]
  %v331 = vld [vmem:[%s10 + $0x70] sm:$0xf]
  %v332 = vld [vmem:[%s10 + $0x74] sm:$0xf]
  %v333 = vld [vmem:[%s10 + $0x78] sm:$0xf]
  %v334 = vld [vmem:[%s10 + $0x7c] sm:$0xf]
  %v335 = vld [vmem:[%s10 + $0x80] sm:$0xf]
  %v336 = vld [vmem:[%s10 + $0x84] sm:$0xf]
  %v337 = vld [vmem:[%s10 + $0x88] sm:$0xf]
  %v338 = vld [vmem:[%s10 + $0x8c] sm:$0xf]
  %v339 = vld [vmem:[%s10 + $0x90] sm:$0xf]
  %v340 = vld [vmem:[%s10 + $0x94] sm:$0xf]
  %v341 = vld [vmem:[%s10 + $0x98] sm:$0xf]
  %v342 = vld [vmem:[%s10 + $0x9c] sm:$0xf]
  %v343 = vld [vmem:[%s10 + $0xa0] sm:$0xf]
  %v344 = vld [vmem:[%s10 + $0xa4] sm:$0xf]
  %v345 = vld [vmem:[%s10 + $0xa8] sm:$0xf]
  %v346 = vld [vmem:[%s10 + $0xac] sm:$0xf]
  %v347 = vld [vmem:[%s10 + $0xb0] sm:$0xf]
  %v348 = vld [vmem:[%s10 + $0xb4] sm:$0xf]
  %v349 = vld [vmem:[%s10 + $0xb8] sm:$0xf]
  %v350 = vld [vmem:[%s10 + $0xbc] sm:$0xf]
  %v351 = vld [vmem:[%s11] sm:$0x1]
  %v353 = vlaneseq
  %v354 = vshrl.u32 %v353, 7
  %v355 = vsub.s32 0, %v354
  %v356 = vrot.slane %v351, %v355
  %v406 = vunpack.c.l.b16 %v303
  %v407 = vunpack.c.l.b16 %v304
  %v408 = vunpack.c.l.b16 %v305
  %v409 = vunpack.c.l.b16 %v306
  %v410 = vunpack.c.l.b16 %v307
  %v411 = vunpack.c.l.b16 %v308
  %v412 = vunpack.c.l.b16 %v309
  %v413 = vunpack.c.l.b16 %v310
  %v414 = vunpack.c.l.b16 %v311
  %v415 = vunpack.c.l.b16 %v312
  %v416 = vunpack.c.l.b16 %v313
  %v417 = vunpack.c.l.b16 %v314
  %v418 = vunpack.c.l.b16 %v315
  %v419 = vunpack.c.l.b16 %v316
  %v420 = vunpack.c.l.b16 %v317
  %v421 = vunpack.c.l.b16 %v318
  %v422 = vunpack.c.l.b16 %v319
  %v423 = vunpack.c.l.b16 %v320
  %v424 = vunpack.c.l.b16 %v321
  %v425 = vunpack.c.l.b16 %v322
  %v426 = vunpack.c.l.b16 %v323
  %v427 = vunpack.c.l.b16 %v324
  %v428 = vunpack.c.l.b16 %v325
  %v429 = vunpack.c.l.b16 %v326
  %v430 = vunpack.c.l.b16 %v327
  %v431 = vunpack.c.l.b16 %v328
  %v432 = vunpack.c.l.b16 %v329
  %v433 = vunpack.c.l.b16 %v330
  %v434 = vunpack.c.l.b16 %v331
  %v435 = vunpack.c.l.b16 %v332
  %v436 = vunpack.c.l.b16 %v333
  %v437 = vunpack.c.l.b16 %v334
  %v438 = vunpack.c.l.b16 %v335
  %v439 = vunpack.c.l.b16 %v336
  %v440 = vunpack.c.l.b16 %v337
  %v441 = vunpack.c.l.b16 %v338
  %v442 = vunpack.c.l.b16 %v339
  %v443 = vunpack.c.l.b16 %v340
  %v444 = vunpack.c.l.b16 %v341
  %v445 = vunpack.c.l.b16 %v342
  %v446 = vunpack.c.l.b16 %v343
  %v447 = vunpack.c.l.b16 %v344
  %v448 = vunpack.c.l.b16 %v345
  %v449 = vunpack.c.l.b16 %v346
  %v450 = vunpack.c.l.b16 %v347
  %v451 = vunpack.c.l.b16 %v348
  %v452 = vunpack.c.l.b16 %v349
  %v453 = vunpack.c.l.b16 %v350
  %v454 = vpack.c.b16 %v407, %v406
  %v455 = vpack.c.b16 %v409, %v408
  %v456 = vpack.c.b16 %v411, %v410
  %v457 = vpack.c.b16 %v413, %v412
  %v458 = vpack.c.b16 %v415, %v414
  %v459 = vpack.c.b16 %v417, %v416
  %v460 = vpack.c.b16 %v419, %v418
  %v461 = vpack.c.b16 %v421, %v420
  %v462 = vpack.c.b16 %v423, %v422
  %v463 = vpack.c.b16 %v425, %v424
  %v464 = vpack.c.b16 %v427, %v426
  %v465 = vpack.c.b16 %v429, %v428
  %v466 = vpack.c.b16 %v431, %v430
  %v467 = vpack.c.b16 %v433, %v432
  %v468 = vpack.c.b16 %v435, %v434
  %v469 = vpack.c.b16 %v437, %v436
  %v470 = vpack.c.b16 %v439, %v438
  %v471 = vpack.c.b16 %v441, %v440
  %v472 = vpack.c.b16 %v443, %v442
  %v473 = vpack.c.b16 %v445, %v444
  %v474 = vpack.c.b16 %v447, %v446
  %v475 = vpack.c.b16 %v449, %v448
  %v476 = vpack.c.b16 %v451, %v450
  %v477 = vpack.c.b16 %v453, %v452
  %502 = vmatprep.subr.bf16.mxu0 0
  %503 = vmatpush1.bf16.msra.mxu0 %v454
  %504 = vmatprep.subr.bf16.mxu0 0
  %505 = vmatpush1.bf16.msra.mxu0 %v455
  %506 = vmatprep.subr.bf16.mxu0 0
  %507 = vmatpush1.bf16.msra.mxu0 %v456
  %508 = vmatprep.subr.bf16.mxu0 0
  %509 = vmatpush1.bf16.msra.mxu0 %v457
  %510 = vmatprep.subr.bf16.mxu0 0
  %511 = vmatpush1.bf16.msra.mxu0 %v458
  %512 = vmatprep.subr.bf16.mxu0 0
  %513 = vmatpush1.bf16.msra.mxu0 %v459
  %514 = vmatprep.subr.bf16.mxu0 0
  %515 = vmatpush1.bf16.msra.mxu0 %v460
  %516 = vmatprep.subr.bf16.mxu0 0
  %517 = vmatpush1.bf16.msra.mxu0 %v461
  %518 = vmatprep.subr.bf16.mxu0 0
  %519 = vmatpush1.bf16.msra.mxu0 %v462
  %520 = vmatprep.subr.bf16.mxu0 0
  %521 = vmatpush1.bf16.msra.mxu0 %v463
  %522 = vmatprep.subr.bf16.mxu0 0
  %523 = vmatpush1.bf16.msra.mxu0 %v464
  %524 = vmatprep.subr.bf16.mxu0 0
  %525 = vmatpush1.bf16.msra.mxu0 %v465
  %526 = vmatprep.subr.bf16.mxu0 0
  %527 = vmatpush1.bf16.msra.mxu0 %v466
  %528 = vmatprep.subr.bf16.mxu0 0
  %529 = vmatpush1.bf16.msra.mxu0 %v467
  %530 = vmatprep.subr.bf16.mxu0 0
  %531 = vmatpush1.bf16.msra.mxu0 %v468
  %532 = vmatprep.subr.bf16.mxu0 0
  %533 = vmatpush1.bf16.msra.mxu0 %v469
  %534 = vmatprep.mubr.bf16.mxu0 %v301
  %535 = vmatmul.mubr.bf16.gmra.mrb[0].mxu0 %v300
  %v536 = vpop.f32.mrb[0].mxu0
  %v537 = vadd.f32 %v356, %v536
  %v538 = vpop.f32.mrb[0].mxu0
  %v539 = vpop.f32.mrb[0].mxu0
  %v540 = vpop.f32.mrb[0].mxu0
  %541 = vdwg.mxu0
  %542 = vmatprep.subr.bf16.mxu0 0
  %543 = vmatpush1.bf16.msra.mxu0 %v470
  %544 = vmatprep.subr.bf16.mxu0 0
  %545 = vmatpush1.bf16.msra.mxu0 %v471
  %546 = vmatprep.subr.bf16.mxu0 0
  %547 = vmatpush1.bf16.msra.mxu0 %v472
  %548 = vmatprep.subr.bf16.mxu0 0
  %549 = vmatpush1.bf16.msra.mxu0 %v473
  %550 = vmatprep.subr.bf16.mxu0 0
  %551 = vmatpush1.bf16.msra.mxu0 %v474
  %552 = vmatprep.subr.bf16.mxu0 0
  %553 = vmatpush1.bf16.msra.mxu0 %v475
  %554 = vmatprep.subr.bf16.mxu0 0
  %555 = vmatpush1.bf16.msra.mxu0 %v476
  %556 = vmatprep.subr.bf16.mxu0 0
  %557 = vmatpush1.bf16.msra.mxu0 %v477
  %558 = vmatprep.subr.bf16.mxu0 0
  %559 = vmatpush1.bf16.msra.mxu0 0
  %560 = vmatprep.subr.bf16.mxu0 0
  %561 = vmatpush1.bf16.msra.mxu0 0
  %562 = vmatprep.subr.bf16.mxu0 0
  %563 = vmatpush1.bf16.msra.mxu0 0
  %564 = vmatprep.subr.bf16.mxu0 0
  %565 = vmatpush1.bf16.msra.mxu0 0
  %566 = vmatprep.subr.bf16.mxu0 0
  %567 = vmatpush1.bf16.msra.mxu0 0
  %568 = vmatprep.subr.bf16.mxu0 0
  %569 = vmatpush1.bf16.msra.mxu0 0
  %570 = vmatprep.subr.bf16.mxu0 0
  %571 = vmatpush1.bf16.msra.mxu0 0
  %572 = vmatprep.subr.bf16.mxu0 0
  %573 = vmatpush1.bf16.msra.mxu0 0
  %574 = vmatprep.mubr.bf16.mxu0 0
  %575 = vmatmul.mubr.bf16.gmra.mrb[0].mxu0 %v302
  %v576 = vpop.f32.mrb[0].mxu0
  %v577 = vadd.f32 %v537, %v576
  %v578 = vpop.f32.mrb[0].mxu0
  %v579 = vpop.f32.mrb[0].mxu0
  %v580 = vpop.f32.mrb[0].mxu0
  %581 = vdwg.mxu0
  %v582 = vld [vmem:[%s12] sm:$0x1]
  %v583 = vld [vmem:[%s13] sm:$0x1]
  %v584 = vrot.slane %v577, 4
  %v585 = vadd.f32 %v577, %v584
  %v586 = vrot.slane %v585, 2
  %v587 = vadd.f32 %v585, %v586
  %v588 = vrot.slane %v587, 1
  %v589 = vadd.f32 %v587, %v588
  %v590 = vadd.f32 %v589, 0.0
  %v591 = vmul.f32 %v577, %v577
  %v592 = vrot.slane %v591, 4
  %v593 = vadd.f32 %v591, %v592
  %v594 = vrot.slane %v593, 2
  %v595 = vadd.f32 %v593, %v594
  %v596 = vrot.slane %v595, 1
  %v597 = vadd.f32 %v595, %v596
  %v598 = vadd.f32 %v597, 0.0
  %v599 = vmul.f32 %v590, 0.125
  %v600 = vmul.f32 %v598, 0.125
  %v601 = vmul.f32 %v599, %v599
  %v602 = vsub.f32 %v600, %v601
  %v603 = vmax.f32 %v602, 0.0
  %v604 = vadd.f32 %v603, 1e-05
  %v605 = vrsqrt.pop %v604
  %v606 = vmul.f32 %v605, %v582
  %v607 = vmul.f32 %v599, %v606
  %v608 = vsub.f32 %v583, %v607
  %v609 = vlaneseq
  %v610 = vshrl.u32 %v609, 7
  %v611 = vsub.s32 0, %v610
  %v612 = vrot.slane %v606, %v611
  %v613 = vmul.f32 %v577, %v612
  %v615 = vlaneseq
  %v616 = vshrl.u32 %v615, 7
  %v617 = vsub.s32 0, %v616
  %v618 = vrot.slane %v608, %v617
  %v620 = vadd.f32 %v613, %v618
  %v621 = vxor.u32 %v620, 2147483648
  %v622 = vmul.f32 %v621, 1.442695
  %v623 = vpow.pop %v622
  %v624 = vadd.f32 %v623, 1.0
  %v625 = vrcp.pop %v624
  %v626 = vmul.f32 1.0, %v625
  %v627 = vmul.f32 %v620, %v626
  %v628 = vpack.c.bf16 %v627, %v627
  %v629 = vld [vmem:[%s14] sm:$0xf]
  %v630 = vld [vmem:[%s14 + $0x4] sm:$0xf]
  %v631 = vld [vmem:[%s14 + $0x8] sm:$0xf]
  %v632 = vld [vmem:[%s14 + $0xc] sm:$0xf]
  %v633 = vld [vmem:[%s14 + $0x10] sm:$0xf]
  %v634 = vld [vmem:[%s14 + $0x14] sm:$0xf]
  %v635 = vld [vmem:[%s14 + $0x18] sm:$0xf]
  %v636 = vld [vmem:[%s14 + $0x1c] sm:$0xf]
  %v637 = vld [vmem:[%s14 + $0x20] sm:$0xf]
  %v638 = vld [vmem:[%s14 + $0x24] sm:$0xf]
  %v639 = vld [vmem:[%s14 + $0x28] sm:$0xf]
  %v640 = vld [vmem:[%s14 + $0x2c] sm:$0xf]
  %v641 = vld [vmem:[%s14 + $0x30] sm:$0xf]
  %v642 = vld [vmem:[%s14 + $0x34] sm:$0xf]
  %v643 = vld [vmem:[%s14 + $0x38] sm:$0xf]
  %v644 = vld [vmem:[%s14 + $0x3c] sm:$0xf]
  %v645 = vld [vmem:[%s15] sm:$0x1]
  %v647 = vlaneseq
  %v648 = vshrl.u32 %v647, 7
  %v649 = vsub.s32 0, %v648
  %v650 = vrot.slane %v645, %v649
  %v668 = vunpack.c.l.b16 %v629
  %v669 = vunpack.c.l.b16 %v630
  %v670 = vunpack.c.l.b16 %v631
  %v671 = vunpack.c.l.b16 %v632
  %v672 = vunpack.c.l.b16 %v633
  %v673 = vunpack.c.l.b16 %v634
  %v674 = vunpack.c.l.b16 %v635
  %v675 = vunpack.c.l.b16 %v636
  %v676 = vunpack.c.l.b16 %v637
  %v677 = vunpack.c.l.b16 %v638
  %v678 = vunpack.c.l.b16 %v639
  %v679 = vunpack.c.l.b16 %v640
  %v680 = vunpack.c.l.b16 %v641
  %v681 = vunpack.c.l.b16 %v642
  %v682 = vunpack.c.l.b16 %v643
  %v683 = vunpack.c.l.b16 %v644
  %v684 = vpack.c.b16 %v669, %v668
  %v685 = vpack.c.b16 %v671, %v670
  %v686 = vpack.c.b16 %v673, %v672
  %v687 = vpack.c.b16 %v675, %v674
  %v688 = vpack.c.b16 %v677, %v676
  %v689 = vpack.c.b16 %v679, %v678
  %v690 = vpack.c.b16 %v681, %v680
  %v691 = vpack.c.b16 %v683, %v682
  %700 = vmatprep.subr.bf16.mxu0 0
  %701 = vmatpush1.bf16.msra.mxu0 %v684
  %702 = vmatprep.subr.bf16.mxu0 0
  %703 = vmatpush1.bf16.msra.mxu0 %v685
  %704 = vmatprep.subr.bf16.mxu0 0
  %705 = vmatpush1.bf16.msra.mxu0 %v686
  %706 = vmatprep.subr.bf16.mxu0 0
  %707 = vmatpush1.bf16.msra.mxu0 %v687
  %708 = vmatprep.subr.bf16.mxu0 0
  %709 = vmatpush1.bf16.msra.mxu0 %v688
  %710 = vmatprep.subr.bf16.mxu0 0
  %711 = vmatpush1.bf16.msra.mxu0 %v689
  %712 = vmatprep.subr.bf16.mxu0 0
  %713 = vmatpush1.bf16.msra.mxu0 %v690
  %714 = vmatprep.subr.bf16.mxu0 0
  %715 = vmatpush1.bf16.msra.mxu0 %v691
  %716 = vmatprep.subr.bf16.mxu0 0
  %717 = vmatpush1.bf16.msra.mxu0 0
  %718 = vmatprep.subr.bf16.mxu0 0
  %719 = vmatpush1.bf16.msra.mxu0 0
  %720 = vmatprep.subr.bf16.mxu0 0
  %721 = vmatpush1.bf16.msra.mxu0 0
  %722 = vmatprep.subr.bf16.mxu0 0
  %723 = vmatpush1.bf16.msra.mxu0 0
  %724 = vmatprep.subr.bf16.mxu0 0
  %725 = vmatpush1.bf16.msra.mxu0 0
  %726 = vmatprep.subr.bf16.mxu0 0
  %727 = vmatpush1.bf16.msra.mxu0 0
  %728 = vmatprep.subr.bf16.mxu0 0
  %729 = vmatpush1.bf16.msra.mxu0 0
  %730 = vmatprep.subr.bf16.mxu0 0
  %731 = vmatpush1.bf16.msra.mxu0 0
  %732 = vmatprep.mubr.bf16.mxu0 0
  %733 = vmatmul.mubr.bf16.gmra.mrb[0].mxu0 %v628
  %v734 = vpop.f32.mrb[0].mxu0
  %v735 = vadd.f32 %v650, %v734
  %v736 = vpop.f32.mrb[0].mxu0
  %v737 = vpop.f32.mrb[0].mxu0
  %v738 = vpop.f32.mrb[0].mxu0
  %739 = vdwg.mxu0
  %v740 = vld [vmem:[%s16] sm:$0x1]
  %v741 = vld [vmem:[%s17] sm:$0x1]
  %v742 = vrot.slane %v735, 4
  %v743 = vadd.f32 %v735, %v742
  %v744 = vrot.slane %v743, 2
  %v745 = vadd.f32 %v743, %v744
  %v746 = vrot.slane %v745, 1
  %v747 = vadd.f32 %v745, %v746
  %v748 = vadd.f32 %v747, 0.0
  %v749 = vmul.f32 %v735, %v735
  %v750 = vrot.slane %v749, 4
  %v751 = vadd.f32 %v749, %v750
  %v752 = vrot.slane %v751, 2
  %v753 = vadd.f32 %v751, %v752
  %v754 = vrot.slane %v753, 1
  %v755 = vadd.f32 %v753, %v754
  %v756 = vadd.f32 %v755, 0.0
  %v757 = vmul.f32 %v748, 0.125
  %v758 = vmul.f32 %v756, 0.125
  %v759 = vmul.f32 %v757, %v757
  %v760 = vsub.f32 %v758, %v759
  %v761 = vmax.f32 %v760, 0.0
  %v762 = vadd.f32 %v761, 1e-05
  %v763 = vrsqrt.pop %v762
  %v764 = vmul.f32 %v763, %v740
  %v765 = vmul.f32 %v757, %v764
  %v766 = vsub.f32 %v741, %v765
  %v767 = vlaneseq
  %v768 = vshrl.u32 %v767, 7
  %v769 = vsub.s32 0, %v768
  %v770 = vrot.slane %v764, %v769
  %v771 = vmul.f32 %v735, %v770
  %v773 = vlaneseq
  %v774 = vshrl.u32 %v773, 7
  %v775 = vsub.s32 0, %v774
  %v776 = vrot.slane %v766, %v775
  %v778 = vadd.f32 %v771, %v776
  %v779 = vld [vmem:[%s2] sm:$0xf]
  %v780 = vld [vmem:[%s2 + $0x4] sm:$0xf]
  %v781 = vld [vmem:[%s2 + $0x8] sm:$0xf]
  %v782 = vld [vmem:[%s2 + $0xc] sm:$0xf]
  %v783 = vld [vmem:[%s2 + $0x10] sm:$0xf]
  %v784 = vld [vmem:[%s2 + $0x14] sm:$0xf]
  %v785 = vld [vmem:[%s2 + $0x18] sm:$0xf]
  %v786 = vld [vmem:[%s2 + $0x1c] sm:$0xf]
  %v787 = vld [vmem:[%s2 + $0x20] sm:$0xf]
  %v788 = vld [vmem:[%s2 + $0x24] sm:$0xf]
  %v789 = vld [vmem:[%s2 + $0x28] sm:$0xf]
  %v790 = vld [vmem:[%s2 + $0x2c] sm:$0xf]
  %v791 = vld [vmem:[%s2 + $0x30] sm:$0xf]
  %v792 = vld [vmem:[%s2 + $0x34] sm:$0xf]
  %v793 = vld [vmem:[%s2 + $0x38] sm:$0xf]
  %v794 = vld [vmem:[%s2 + $0x3c] sm:$0xf]
  %v795 = vld [vmem:[%s3] sm:$0x1]
  %v797 = vlaneseq
  %v798 = vshrl.u32 %v797, 7
  %v799 = vsub.s32 0, %v798
  %v800 = vrot.slane %v795, %v799
  %v818 = vunpack.c.l.b16 %v779
  %v819 = vunpack.c.l.b16 %v780
  %v820 = vunpack.c.l.b16 %v781
  %v821 = vunpack.c.l.b16 %v782
  %v822 = vunpack.c.l.b16 %v783
  %v823 = vunpack.c.l.b16 %v784
  %v824 = vunpack.c.l.b16 %v785
  %v825 = vunpack.c.l.b16 %v786
  %v826 = vunpack.c.l.b16 %v787
  %v827 = vunpack.c.l.b16 %v788
  %v828 = vunpack.c.l.b16 %v789
  %v829 = vunpack.c.l.b16 %v790
  %v830 = vunpack.c.l.b16 %v791
  %v831 = vunpack.c.l.b16 %v792
  %v832 = vunpack.c.l.b16 %v793
  %v833 = vunpack.c.l.b16 %v794
  %v834 = vpack.c.b16 %v819, %v818
  %v835 = vpack.c.b16 %v821, %v820
  %v836 = vpack.c.b16 %v823, %v822
  %v837 = vpack.c.b16 %v825, %v824
  %v838 = vpack.c.b16 %v827, %v826
  %v839 = vpack.c.b16 %v829, %v828
  %v840 = vpack.c.b16 %v831, %v830
  %v841 = vpack.c.b16 %v833, %v832
  %850 = vmatprep.subr.bf16.mxu0 0
  %851 = vmatpush1.bf16.msra.mxu0 %v834
  %852 = vmatprep.subr.bf16.mxu0 0
  %853 = vmatpush1.bf16.msra.mxu0 %v835
  %854 = vmatprep.subr.bf16.mxu0 0
  %855 = vmatpush1.bf16.msra.mxu0 %v836
  %856 = vmatprep.subr.bf16.mxu0 0
  %857 = vmatpush1.bf16.msra.mxu0 %v837
  %858 = vmatprep.subr.bf16.mxu0 0
  %859 = vmatpush1.bf16.msra.mxu0 %v838
  %860 = vmatprep.subr.bf16.mxu0 0
  %861 = vmatpush1.bf16.msra.mxu0 %v839
  %862 = vmatprep.subr.bf16.mxu0 0
  %863 = vmatpush1.bf16.msra.mxu0 %v840
  %864 = vmatprep.subr.bf16.mxu0 0
  %865 = vmatpush1.bf16.msra.mxu0 %v841
  %866 = vmatprep.subr.bf16.mxu0 0
  %867 = vmatpush1.bf16.msra.mxu0 0
  %868 = vmatprep.subr.bf16.mxu0 0
  %869 = vmatpush1.bf16.msra.mxu0 0
  %870 = vmatprep.subr.bf16.mxu0 0
  %871 = vmatpush1.bf16.msra.mxu0 0
  %872 = vmatprep.subr.bf16.mxu0 0
  %873 = vmatpush1.bf16.msra.mxu0 0
  %874 = vmatprep.subr.bf16.mxu0 0
  %875 = vmatpush1.bf16.msra.mxu0 0
  %876 = vmatprep.subr.bf16.mxu0 0
  %877 = vmatpush1.bf16.msra.mxu0 0
  %878 = vmatprep.subr.bf16.mxu0 0
  %879 = vmatpush1.bf16.msra.mxu0 0
  %880 = vmatprep.subr.bf16.mxu0 0
  %881 = vmatpush1.bf16.msra.mxu0 0
  %882 = vmatprep.mubr.bf16.mxu0 0
  %883 = vmatmul.mubr.bf16.gmra.mrb[0].mxu0 %v60
  %v884 = vpop.f32.mrb[0].mxu0
  %v885 = vadd.f32 %v800, %v884
  %v886 = vpop.f32.mrb[0].mxu0
  %v887 = vpop.f32.mrb[0].mxu0
  %v888 = vpop.f32.mrb[0].mxu0
  %889 = vdwg.mxu0
  %v890 = vld [vmem:[%s4] sm:$0x1]
  %v891 = vld [vmem:[%s5] sm:$0x1]
  %v892 = vrot.slane %v885, 4
  %v893 = vadd.f32 %v885, %v892
  %v894 = vrot.slane %v893, 2
  %v895 = vadd.f32 %v893, %v894
  %v896 = vrot.slane %v895, 1
  %v897 = vadd.f32 %v895, %v896
  %v898 = vadd.f32 %v897, 0.0
  %v899 = vmul.f32 %v885, %v885
  %v900 = vrot.slane %v899, 4
  %v901 = vadd.f32 %v899, %v900
  %v902 = vrot.slane %v901, 2
  %v903 = vadd.f32 %v901, %v902
  %v904 = vrot.slane %v903, 1
  %v905 = vadd.f32 %v903, %v904
  %v906 = vadd.f32 %v905, 0.0
  %v907 = vmul.f32 %v898, 0.125
  %v908 = vmul.f32 %v906, 0.125
  %v909 = vmul.f32 %v907, %v907
  %v910 = vsub.f32 %v908, %v909
  %v911 = vmax.f32 %v910, 0.0
  %v912 = vadd.f32 %v911, 1e-05
  %v913 = vrsqrt.pop %v912
  %v914 = vmul.f32 %v913, %v890
  %v915 = vmul.f32 %v907, %v914
  %v916 = vsub.f32 %v891, %v915
  %v917 = vlaneseq
  %v918 = vshrl.u32 %v917, 7
  %v919 = vsub.s32 0, %v918
  %v920 = vrot.slane %v914, %v919
  %v921 = vmul.f32 %v885, %v920
  %v923 = vlaneseq
  %v924 = vshrl.u32 %v923, 7
  %v925 = vsub.s32 0, %v924
  %v926 = vrot.slane %v916, %v925
  %v928 = vadd.f32 %v921, %v926
  %v929 = vadd.f32 %v778, %v928
  %v930 = vxor.u32 %v929, 2147483648
  %v931 = vmul.f32 %v930, 1.442695
  %v932 = vpow.pop %v931
  %v933 = vadd.f32 %v932, 1.0
  %v934 = vrcp.pop %v933
  %v935 = vmul.f32 1.0, %v934
  %v936 = vmul.f32 %v929, %v935
  %v937 = vpack.c.bf16 %v936, %v936
  %938 = vst [vmem:[%s18] sm:$0xf] %v937
  // Predicated region
  $region74: #{resnext_forward.8} parent=0 // pred_check
    _
  $region75: #{resnext_forward.8} parent=0 // pred_check_branch
    %940 = sbr.rel (0) target = $region77
  $region76: #{resnext_forward.8} parent=0 // pred_region
    _
  $region77: #{resnext_forward.8} parent=0 // pred_fallthru
    _
  // Predicated region
  $region78: #{resnext_forward.8} parent=0 // pred_check
    _
  $region79: #{resnext_forward.8} parent=0 // pred_check_branch
    %942 = sbr.rel (0) target = $region81
  $region80: #{resnext_forward.8} parent=0 // pred_region
    _
  $region81: #{resnext_forward.8} parent=0 // pred_fallthru
    _

// kernel: resnext_forward.9
$region0: #{resnext_forward.9}
  #allocation0 [shape = 'u32[]', space=smem, size = 0x4, offset = 0x4, fixed_abs, tag = 'smem constant byte address 0x4 - core index']
  #allocation1 [shape = 'u32[144,128]{1,0:T(1,128)}', space=vmem, size = 0x12000, scoped, tag = 'internal scratch']
  %s0 = inlined_call_operand.vmem [shape: bf16[2,4,128], index: 0, kind: input, shape index: {}]
  %s1 = inlined_call_operand.vmem [shape: bf16[128,128], index: 1, kind: input, shape index: {}]
  %s2 = inlined_call_operand.vmem [shape: f32[1,128], index: 2, kind: input, shape index: {}]
  %s3 = inlined_call_operand.hbm [shape: f32[2,128], index: 3, kind: output, shape index: {}]
  %s4 = sld [smem:[#allocation0]]
  $region22: #{resnext_forward.9} parent=0
    _
  %s6 = ssub.s32 1, %s4
  %s7 = scalar_select 0, %s6, %s4
  $region1: #{resnext_forward.9} parent=0
    #allocation2 [shape = 'u8[1024]{0}', space=vmem, size = 0x400, scoped, tag = 'output window, operand 0, single buffered']
    #allocation3 [shape = 's32[1]{0}', space=sflag, size = 0x4, scoped, tag = 'scoped memory for resnext_forward.9']
    %8 = vsyncpa [#allocation3], 0
    // Predicated region
    $region2: #{resnext_forward.9} parent=1 // pred_check
      _
    $region3: #{resnext_forward.9} parent=1 // pred_check_branch
      %10 = sbr.rel (0) target = $region5
    $region4: #{resnext_forward.9} parent=1 // pred_region
      _
    $region5: #{resnext_forward.9} parent=1 // pred_fallthru
      _
    // Predicated region
    $region6: #{resnext_forward.9} parent=1 // pred_check
      _
    $region7: #{resnext_forward.9} parent=1 // pred_check_branch
      %12 = sbr.rel (0) target = $region9
    $region8: #{resnext_forward.9} parent=1 // pred_region
      _
    $region9: #{resnext_forward.9} parent=1 // pred_fallthru
      _
    // Predicated region
    $region10: #{resnext_forward.9} parent=1 // pred_check
      _
    $region11: #{resnext_forward.9} parent=1 // pred_check_branch
      %14 = sbr.rel (0) target = $region13
    $region12: #{resnext_forward.9} parent=1 // pred_region
      _
    $region13: #{resnext_forward.9} parent=1 // pred_fallthru
      _
    %v16 = vld [vmem:[%s0] sm:$0x3]
    %v17 = vunpack.c.l.bf16 %v16
    %vm18 = vcmask 1043456
    %v19 = vsel %vm18, %v17, 0.0
    %v20 = vrot.slane %v19, 4
    %v21 = vadd.f32 %v19, %v20
    %v22 = vrot.slane %v21, 2
    %v23 = vadd.f32 %v21, %v22
    %v24 = vrot.slane %v23, 1
    %v25 = vadd.f32 %v23, %v24
    %v26 = vrcp.pop 4.0
    %v27 = vmul.f32 %v25, %v26
    %s28 = scalar_lea.vmem %s0, 2
    %v29 = vld [vmem:[%s28] sm:$0x3]
    %v30 = vunpack.c.l.bf16 %v29
    %v31 = vsel %vm18, %v30, 0.0
    %v32 = vrot.slane %v31, 4
    %v33 = vadd.f32 %v31, %v32
    %v34 = vrot.slane %v33, 2
    %v35 = vadd.f32 %v33, %v34
    %v36 = vrot.slane %v35, 1
    %v37 = vadd.f32 %v35, %v36
    %v38 = vmul.f32 %v37, %v26
    %vm39 = vcmask 1040384
    %v40 = vsel %vm39, %v27, %v38
    %v41 = vpack.c.bf16 %v40, %v40
    %v42 = vld [vmem:[%s1] sm:$0xf]
    %v43 = vld [vmem:[%s1 + $0x4] sm:$0xf]
    %v44 = vld [vmem:[%s1 + $0x8] sm:$0xf]
    %v45 = vld [vmem:[%s1 + $0xc] sm:$0xf]
    %v46 = vld [vmem:[%s1 + $0x10] sm:$0xf]
    %v47 = vld [vmem:[%s1 + $0x14] sm:$0xf]
    %v48 = vld [vmem:[%s1 + $0x18] sm:$0xf]
    %v49 = vld [vmem:[%s1 + $0x1c] sm:$0xf]
    %v50 = vld [vmem:[%s1 + $0x20] sm:$0xf]
    %v51 = vld [vmem:[%s1 + $0x24] sm:$0xf]
    %v52 = vld [vmem:[%s1 + $0x28] sm:$0xf]
    %v53 = vld [vmem:[%s1 + $0x2c] sm:$0xf]
    %v54 = vld [vmem:[%s1 + $0x30] sm:$0xf]
    %v55 = vld [vmem:[%s1 + $0x34] sm:$0xf]
    %v56 = vld [vmem:[%s1 + $0x38] sm:$0xf]
    %v57 = vld [vmem:[%s1 + $0x3c] sm:$0xf]
    %v58 = vld [vmem:[%s2] sm:$0x1]
    %v60 = vlaneseq
    %v61 = vshrl.u32 %v60, 7
    %v62 = vsub.s32 0, %v61
    %v63 = vrot.slane %v58, %v62
    %v81 = vunpack.c.l.b16 %v42
    %v82 = vunpack.c.l.b16 %v43
    %v83 = vunpack.c.l.b16 %v44
    %v84 = vunpack.c.l.b16 %v45
    %v85 = vunpack.c.l.b16 %v46
    %v86 = vunpack.c.l.b16 %v47
    %v87 = vunpack.c.l.b16 %v48
    %v88 = vunpack.c.l.b16 %v49
    %v89 = vunpack.c.l.b16 %v50
    %v90 = vunpack.c.l.b16 %v51
    %v91 = vunpack.c.l.b16 %v52
    %v92 = vunpack.c.l.b16 %v53
    %v93 = vunpack.c.l.b16 %v54
    %v94 = vunpack.c.l.b16 %v55
    %v95 = vunpack.c.l.b16 %v56
    %v96 = vunpack.c.l.b16 %v57
    %v97 = vpack.c.b16 %v82, %v81
    %v98 = vpack.c.b16 %v84, %v83
    %v99 = vpack.c.b16 %v86, %v85
    %v100 = vpack.c.b16 %v88, %v87
    %v101 = vpack.c.b16 %v90, %v89
    %v102 = vpack.c.b16 %v92, %v91
    %v103 = vpack.c.b16 %v94, %v93
    %v104 = vpack.c.b16 %v96, %v95
    %113 = vmatprep.subr.bf16.mxu0 0
    %114 = vmatpush1.bf16.msra.mxu0 %v97
    %115 = vmatprep.subr.bf16.mxu0 0
    %116 = vmatpush1.bf16.msra.mxu0 %v98
    %117 = vmatprep.subr.bf16.mxu0 0
    %118 = vmatpush1.bf16.msra.mxu0 %v99
    %119 = vmatprep.subr.bf16.mxu0 0
    %120 = vmatpush1.bf16.msra.mxu0 %v100
    %121 = vmatprep.subr.bf16.mxu0 0
    %122 = vmatpush1.bf16.msra.mxu0 %v101
    %123 = vmatprep.subr.bf16.mxu0 0
    %124 = vmatpush1.bf16.msra.mxu0 %v102
    %125 = vmatprep.subr.bf16.mxu0 0
    %126 = vmatpush1.bf16.msra.mxu0 %v103
    %127 = vmatprep.subr.bf16.mxu0 0
    %128 = vmatpush1.bf16.msra.mxu0 %v104
    %129 = vmatprep.subr.bf16.mxu0 0
    %130 = vmatpush1.bf16.msra.mxu0 0
    %131 = vmatprep.subr.bf16.mxu0 0
    %132 = vmatpush1.bf16.msra.mxu0 0
    %133 = vmatprep.subr.bf16.mxu0 0
    %134 = vmatpush1.bf16.msra.mxu0 0
    %135 = vmatprep.subr.bf16.mxu0 0
    %136 = vmatpush1.bf16.msra.mxu0 0
    %137 = vmatprep.subr.bf16.mxu0 0
    %138 = vmatpush1.bf16.msra.mxu0 0
    %139 = vmatprep.subr.bf16.mxu0 0
    %140 = vmatpush1.bf16.msra.mxu0 0
    %141 = vmatprep.subr.bf16.mxu0 0
    %142 = vmatpush1.bf16.msra.mxu0 0
    %143 = vmatprep.subr.bf16.mxu0 0
    %144 = vmatpush1.bf16.msra.mxu0 0
    %145 = vmatprep.mubr.bf16.mxu0 0
    %146 = vmatmul.mubr.bf16.gmra.mrb[0].mxu0 %v41
    %v147 = vpop.f32.mrb[0].mxu0
    %v148 = vadd.f32 %v63, %v147
    %v149 = vpop.f32.mrb[0].mxu0
    %v150 = vpop.f32.mrb[0].mxu0
    %v151 = vpop.f32.mrb[0].mxu0
    %152 = vdwg.mxu0
    %vm153 = vcmask 1041408
    %v154 = vsel %vm153, %v148, -inf
    %155 = vmax.xlane.f32.xlu0 %v154
    %v156 = vpop.xlane.xlu0 %155
    %v157 = vsub.f32 %v148, %v156
    %v158 = vmul.f32 %v157, 1.442695
    %v159 = vpow.pop %v158
    %v160 = vsel %vm153, %v159, 0.0
    %161 = vadd.xlane.f32.xlu0 %v160
    %v162 = vpop.xlane.xlu0 %161
    %v163 = vrcp.pop %v162
    %v164 = vmul.f32 %v159, %v163
    %165 = vst [vmem:[#allocation2] sm:$0x3] %v164
    // Predicated region
    $region14: #{resnext_forward.9} parent=1 // pred_check
      _
    $region15: #{resnext_forward.9} parent=1 // pred_check_branch
      %167 = sbr.rel (0) target = $region17
    $region16: #{resnext_forward.9} parent=1 // pred_region
      %s169 = ssub.s32 32, 32
      %170 = vsyncadd [#allocation3], %s169
      %s172 = sshll.u32 [#allocation2], 4
      %s173 = int_to_ptr.vmem [resolvable:$true] %s172
      %175 = dma.vmem_to_hbm [thread:$0]  %s173, 32, %s3, [#allocation3]
    $region17: #{resnext_forward.9} parent=1 // pred_fallthru
      _
    // Predicated region
    $region18: #{resnext_forward.9} parent=1 // pred_check
      _
    $region19: #{resnext_forward.9} parent=1 // pred_check_branch
      %177 = sbr.rel (0) target = $region21
    $region20: #{resnext_forward.9} parent=1 // pred_region
      %178 = dma.done [#allocation3], 32
    $region21: #{resnext_forward.9} parent=1 // pred_fallthru
      _
    %179 = vsyncpa [#allocation3], 1

</llo_original>
